<compile_context>
chip_gen: v7x
topology: tpu7x:2x2x1
jax: 0.10.0
libtpu: 0.0.40
codegen_flags: <defaults>
</compile_context>

<pallas_src>
import jax
import jax.numpy as jnp
from jax.experimental import pallas as pl
from jax.experimental.pallas import tpu as pltpu

K = 15          # conv kernel size
PAD = 7         # conv padding
GH = 16         # halo rows fetched on each side (>= 2*PAD, multiple of 8)
EPS = 1e-5


def _round_up(a, b):
    return -(-a // b) * b


def _make_kernel(l_real):
    """Build the kernel closed over the true (unpadded) sequence length."""

    def kernel(x_hbm, w1_ref, w2_ref, b1_ref, b2_ref, o_ref, xwin, hbuf, dma_sem):
        # x_hbm : (N, Lp + 2*GH, Cp) bf16 in HBM (zero halo + zero channel pad)
        # w*_ref: (K*Cp, Cp) bf16 VMEM-resident, BN-scale-folded conv weights
        # b*_ref: (1, Cp)    f32  VMEM-resident folded bias (BN shift + conv bias)
        # o_ref : (1, TL, Cp) bf16 output tile
        # xwin  : VMEM (2, TL + 2*GH, Cp) bf16 double-buffered halo'd window
        # hbuf  : VMEM (TL + 16, Cp) bf16 hidden activation (with its halo rows)
        n = pl.program_id(0)
        t = pl.program_id(1)
        nt = pl.num_programs(1)
        TL = o_ref.shape[1]
        Cp = o_ref.shape[2]
        WIN = TL + 2 * GH
        HM = TL + 2 * PAD        # hidden rows needed (conv2 needs a PAD halo of h)
        base = GH - 2 * PAD      # window-row offset of tap 0 for the first h row

        def start_fetch(tile_idx, slot):
            start = pl.multiple_of(tile_idx * TL, 8)
            pltpu.make_async_copy(
                x_hbm.at[n, pl.ds(start, WIN), :],
                xwin.at[slot], dma_sem.at[slot]).start()

        # prime the pipeline at the first tile of each batch row
        @pl.when(t == 0)
        def _():
            start_fetch(t, 0)

        # prefetch the next tile's window; it overlaps with this tile's convs
        @pl.when(t + 1 < nt)
        def _():
            start_fetch(t + 1, (t + 1) % 2)

        slot = t % 2
        pltpu.make_async_copy(
            x_hbm.at[n, pl.ds(pl.multiple_of(t * TL, 8), WIN), :],
            xwin.at[slot], dma_sem.at[slot]).wait()

        xw = xwin.at[slot]

        # ---- conv1 (+BN1 scale): K accumulated dots on shifted views ---------
        h = jnp.dot(xw[base: base + HM, :], w1_ref[0:Cp, :],
                    preferred_element_type=jnp.float32)
        for k in range(1, K):
            h = h + jnp.dot(xw[base + k: base + k + HM, :],
                            w1_ref[k * Cp:(k + 1) * Cp, :],
                            preferred_element_type=jnp.float32)
        h = jnp.maximum(h + b1_ref[...], 0.0)

        # PyTorch's conv2 zero-pads the *hidden* activation; zero any h row whose
        # global sequence position is outside [0, L).
        gpos = (t * TL - PAD) + jax.lax.broadcasted_iota(jnp.int32, (HM, Cp), 0)
        h = jnp.where((gpos >= 0) & (gpos < l_real), h, 0.0)
        hbuf[0:HM, :] = h.astype(jnp.bfloat16)

        # ---- conv2 (+BN2 scale): K accumulated dots, bias + residual + ReLU --
        acc = jnp.dot(hbuf[0:TL, :], w2_ref[0:Cp, :],
                      preferred_element_type=jnp.float32)
        for k in range(1, K):
            acc = acc + jnp.dot(hbuf[k: k + TL, :],
                                w2_ref[k * Cp:(k + 1) * Cp, :],
                                preferred_element_type=jnp.float32)
        resid = xw[GH: GH + TL, :].astype(jnp.float32)
        o_ref[0] = jnp.maximum(acc + b2_ref[...] + resid, 0.0).astype(o_ref.dtype)

    return kernel


def _fold_conv_bn(w, cb, g, beta, m, v, cp):
    """Fold eval-mode BN into conv: (K*Cp, Cp) bf16 weights, (1, Cp) f32 bias."""
    cout, cin, kk = w.shape
    s = g / jnp.sqrt(v + EPS)                              # BN scale   (Cout,)
    b = beta + (cb - m) * s                                # BN shift + conv bias
    wk = jnp.transpose(w * s[:, None, None], (2, 1, 0))    # (K, Cin, Cout)
    wk = jnp.pad(wk, ((0, 0), (0, cp - cin), (0, cp - cout)))
    wm = wk.reshape(kk * cp, cp).astype(jnp.bfloat16)      # rows ordered (tap, cin)
    bv = jnp.pad(b, (0, cp - cout)).reshape(1, cp).astype(jnp.float32)
    return wm, bv


def basic_block_pallas(x_ncl, params, *, seq_tile=512):
    """x_ncl: (N, C, L) float32 -- same layout as the PyTorch module's input."""
    (w1, cb1, g1, beta1, m1, v1,
     w2, cb2, g2, beta2, m2, v2) = params
    N, C, L = x_ncl.shape
    assert w1.shape[0] == C, "no-downsample path: in_channels must equal out_channels"

    Cp = _round_up(C, 128)             # lane-dense channel width
    if Cp >= 512:                      # keep the per-tile footprint inside v7x VMEM
        seq_tile = min(seq_tile, 256)
    TL = seq_tile if L >= seq_tile else _round_up(L, 8)
    Lp = _round_up(L, TL)              # pad L instead of shrinking the tile
    NT = Lp // TL

    # ---- host-side glue: ONE fused XLA pass over x ---------------------------
    # NCL -> NLC, bf16 cast, channel pad to Cp, GH halo rows + tail pad to Lp.
    x_nlc = jnp.transpose(x_ncl, (0, 2, 1)).astype(jnp.bfloat16)
    x_g = jnp.pad(x_nlc, ((0, 0), (GH, GH + (Lp - L)), (0, Cp - C)))

    w1m, b1v = _fold_conv_bn(w1, cb1, g1, beta1, m1, v1, Cp)
    w2m, b2v = _fold_conv_bn(w2, cb2, g2, beta2, m2, v2, Cp)

    # VMEM budget: double-buffered window + h scratch + resident weights/biases
    # + double-buffered bf16 output block, with margin for compiler scratch.
    vmem_est = (2 * (TL + 2 * GH) * Cp * 2 + (TL + 16) * Cp * 2
                + 2 * K * Cp * Cp * 2 + 2 * Cp * 4 + 2 * TL * Cp * 2)
    vmem_limit = int(min(max(4 * vmem_est, 16 << 20), 48 << 20))

    out_p = pl.pallas_call(
        _make_kernel(L),
        out_shape=jax.ShapeDtypeStruct((N, Lp, Cp), jnp.bfloat16),
        grid_spec=pltpu.PrefetchScalarGridSpec(
            num_scalar_prefetch=0,
            grid=(N, NT),
            in_specs=[
                pl.BlockSpec(memory_space=pl.ANY),                       # x in HBM
                pl.BlockSpec(memory_space=pltpu.MemorySpace.VMEM),       # conv1 w
                pl.BlockSpec(memory_space=pltpu.MemorySpace.VMEM),       # conv2 w
                pl.BlockSpec(memory_space=pltpu.MemorySpace.VMEM),       # bias1
                pl.BlockSpec(memory_space=pltpu.MemorySpace.VMEM),       # bias2
            ],
            out_specs=pl.BlockSpec((1, TL, Cp), lambda n, t: (n, t, 0)),
            scratch_shapes=[
                pltpu.VMEM((2, TL + 2 * GH, Cp), jnp.bfloat16),   # halo'd windows
                pltpu.VMEM((TL + 16, Cp), jnp.bfloat16),          # hidden activation
                pltpu.SemaphoreType.DMA((2,)),
            ],
        ),
        compiler_params=pltpu.CompilerParams(
            dimension_semantics=("parallel", "arbitrary"),
            vmem_limit_bytes=vmem_limit),
    )(x_g, w1m, w2m, b1v, b2v)

    out = out_p[:, :L, :C]                                   # crop pad, still NLC
    return jnp.transpose(out, (0, 2, 1)).astype(jnp.float32)  # back to (N, C, L)


def basic_block_ref(x_ncl, params):
    """Pure-JAX reference (eval-mode BN). Inputs/weights are bf16-quantized to
    mirror the kernel's bf16 MXU inputs; all math is f32."""
    (w1, cb1, g1, beta1, m1, v1,
     w2, cb2, g2, beta2, m2, v2) = params
    q = lambda a: a.astype(jnp.bfloat16).astype(jnp.float32)

    def bn(y, g, b, m, v):
        return (g[None, :, None] * (y - m[None, :, None])
                / jnp.sqrt(v[None, :, None] + EPS) + b[None, :, None])

    def conv(y, w, cb):
        o = jax.lax.conv_general_dilated(y, w, (1,), [(PAD, PAD)],
                                         dimension_numbers=("NCH", "OIH", "NCH"))
        return o + cb[None, :, None]

    xq = q(x_ncl)
    out = jnp.maximum(bn(conv(xq, q(w1), cb1), g1, beta1, m1, v1), 0.0)
    out = bn(conv(out, q(w2), cb2), g2, beta2, m2, v2) + xq
    return jnp.maximum(out, 0.0)


def init_params(key, c):
    ks = jax.random.split(key, 8)
    w1 = jax.random.normal(ks[0], (c, c, K), jnp.float32) * 0.1    # (Cout, Cin, K)
    cb1 = jax.random.normal(ks[1], (c,), jnp.float32) * 0.1
    g1 = 1.0 + 0.1 * jax.random.normal(ks[2], (c,), jnp.float32)
    beta1 = 0.1 * jax.random.normal(ks[3], (c,), jnp.float32)
    m1 = 0.05 * jax.random.normal(ks[4], (c,), jnp.float32)
    v1 = 1.0 + 0.1 * jax.random.uniform(ks[5], (c,), jnp.float32)
    w2 = jax.random.normal(ks[6], (c, c, K), jnp.float32) * 0.1
    cb2 = jax.random.normal(ks[7], (c,), jnp.float32) * 0.1
    g2 = jnp.ones((c,), jnp.float32)
    beta2 = jnp.zeros((c,), jnp.float32)
    m2 = jnp.zeros((c,), jnp.float32)
    v2 = jnp.ones((c,), jnp.float32)
    return (w1, cb1, g1, beta1, m1, v1, w2, cb2, g2, beta2, m2, v2)


if __name__ == "__main__":
    key = jax.random.PRNGKey(0)
    k_x, k_p = jax.random.split(key)
    N, C, L = 2, 8, 16                       # (batch, channels, sequence length)
    x = jax.random.normal(k_x, (N, C, L), jnp.float32)
    params = init_params(k_p, C)

    out = jax.block_until_ready(basic_block_pallas(x, params))
    ref = basic_block_ref(x, params)

    assert out.shape == (N, C, L)
    max_err = float(jnp.max(jnp.abs(out - ref)))
    assert jnp.allclose(out, ref, atol=3e-2, rtol=3e-2), max_err
    print("KERNEL_OK")
</pallas_src>

<mosaic_0001>
module attributes {stable_mosaic.version = 11 : i64} {
  func.func @kernel(%arg0: i32, %arg1: i32, %arg2: memref<2x48x128xbf16, #tpu.memory_space<any>>, %arg3: memref<1920x128xbf16, #tpu.memory_space<vmem>>, %arg4: memref<1920x128xbf16, #tpu.memory_space<vmem>>, %arg5: memref<1x128xf32, #tpu.memory_space<vmem>>, %arg6: memref<1x128xf32, #tpu.memory_space<vmem>>, %arg7: memref<1x16x128xbf16, #tpu.memory_space<vmem>>, %arg8: memref<2x48x128xbf16, #tpu.memory_space<vmem>>, %arg9: memref<32x128xbf16, #tpu.memory_space<vmem>>, %arg10: memref<2x!tpu.dma_semaphore, #tpu.memory_space<semaphore_mem>>) attributes {dimension_semantics = [#tpu.dimension_semantics<parallel>, #tpu.dimension_semantics<arbitrary>], iteration_bounds = array<i64: 2, 1>, scalar_prefetch = 0 : i64, scratch_operands = 3 : i64, tpu.core_type = #tpu.core_type<tc>, window_params = [{}, {pipeline_mode = #tpu.pipeline_mode<synchronous>, transform_indices = @transform_1, window_bounds = array<i64: 1920, 128>}, {pipeline_mode = #tpu.pipeline_mode<synchronous>, transform_indices = @transform_2, window_bounds = array<i64: 1920, 128>}, {pipeline_mode = #tpu.pipeline_mode<synchronous>, transform_indices = @transform_3, window_bounds = array<i64: 1, 128>}, {pipeline_mode = #tpu.pipeline_mode<synchronous>, transform_indices = @transform_4, window_bounds = array<i64: 1, 128>}, {transform_indices = @transform_5, window_bounds = array<i64: 1, 16, 128>}]} {
    %c0_i32 = arith.constant 0 : i32
    %0 = arith.cmpi eq, %arg1, %c0_i32 : i32
    %1 = arith.extui %0 : i1 to i32
    %c0_i32_0 = arith.constant 0 : i32
    %2 = arith.cmpi ne, %1, %c0_i32_0 : i32
    scf.if %2 {
      %c16_i32_178 = arith.constant 16 : i32
      %206 = arith.muli %arg1, %c16_i32_178 : i32
      %207 = tpu.assume_multiple %206, 8 : i32
      %c0_i32_179 = arith.constant 0 : i32
      %c0_i32_180 = arith.constant 0 : i32
      %c0_i32_181 = arith.constant 0 : i32
      %208 = tpu.memref_slice %arg2[%arg0, %207, %c0_i32_181] : memref<2x48x128xbf16, #tpu.memory_space<any>> -> memref<1x48x128xbf16, #tpu.memory_space<any>>
      %209 = tpu.memref_squeeze %208 : memref<1x48x128xbf16, #tpu.memory_space<any>> -> memref<48x128xbf16, #tpu.memory_space<any>>
      %c0_i32_182 = arith.constant 0 : i32
      %c0_i32_183 = arith.constant 0 : i32
      %210 = tpu.memref_slice %arg8[%c0_i32_179, %c0_i32_182, %c0_i32_183] : memref<2x48x128xbf16, #tpu.memory_space<vmem>> -> memref<1x48x128xbf16, #tpu.memory_space<vmem>>
      %211 = tpu.memref_squeeze %210 : memref<1x48x128xbf16, #tpu.memory_space<vmem>> -> memref<48x128xbf16, #tpu.memory_space<vmem>>
      %212 = tpu.memref_slice %arg10[%c0_i32_180] : memref<2x!tpu.dma_semaphore, #tpu.memory_space<semaphore_mem>> -> memref<1x!tpu.dma_semaphore, #tpu.memory_space<semaphore_mem>>
      %213 = tpu.memref_squeeze %212 : memref<1x!tpu.dma_semaphore, #tpu.memory_space<semaphore_mem>> -> memref<!tpu.dma_semaphore, #tpu.memory_space<semaphore_mem>>
      tpu.enqueue_dma source(%209 : memref<48x128xbf16, #tpu.memory_space<any>>) target(%211 : memref<48x128xbf16, #tpu.memory_space<vmem>>) target_semaphore(%213 : memref<!tpu.dma_semaphore, #tpu.memory_space<semaphore_mem>>)
    } else {
    }
    %c1_i32 = arith.constant 1 : i32
    %3 = arith.addi %arg1, %c1_i32 : i32
    %c1_i32_1 = arith.constant 1 : i32
    %4 = arith.cmpi slt, %3, %c1_i32_1 : i32
    %5 = arith.extui %4 : i1 to i32
    %c0_i32_2 = arith.constant 0 : i32
    %6 = arith.cmpi ne, %5, %c0_i32_2 : i32
    scf.if %6 {
      %c1_i32_178 = arith.constant 1 : i32
      %206 = arith.addi %arg1, %c1_i32_178 : i32
      %c1_i32_179 = arith.constant 1 : i32
      %207 = arith.addi %arg1, %c1_i32_179 : i32
      %c2_i32_180 = arith.constant 2 : i32
      %c0_i32_181 = arith.constant 0 : i32
      %208 = arith.cmpi eq, %c2_i32_180, %c0_i32_181 : i32
      %c1_i32_182 = arith.constant 1 : i32
      %209 = arith.select %208, %c1_i32_182, %c2_i32_180 : i32
      %210 = arith.remsi %207, %209 : i32
      %c0_i32_183 = arith.constant 0 : i32
      %211 = arith.cmpi ne, %210, %c0_i32_183 : i32
      %c0_i32_184 = arith.constant 0 : i32
      %212 = arith.cmpi slt, %210, %c0_i32_184 : i32
      %c0_i32_185 = arith.constant 0 : i32
      %213 = arith.cmpi slt, %209, %c0_i32_185 : i32
      %214 = arith.xori %212, %213 : i1
      %215 = arith.andi %214, %211 : i1
      %216 = arith.addi %210, %209 : i32
      %217 = arith.select %215, %216, %210 : i32
      %c16_i32_186 = arith.constant 16 : i32
      %218 = arith.muli %206, %c16_i32_186 : i32
      %219 = tpu.assume_multiple %218, 8 : i32
      %c0_i32_187 = arith.constant 0 : i32
      %220 = tpu.memref_slice %arg2[%arg0, %219, %c0_i32_187] : memref<2x48x128xbf16, #tpu.memory_space<any>> -> memref<1x48x128xbf16, #tpu.memory_space<any>>
      %221 = tpu.memref_squeeze %220 : memref<1x48x128xbf16, #tpu.memory_space<any>> -> memref<48x128xbf16, #tpu.memory_space<any>>
      %c0_i32_188 = arith.constant 0 : i32
      %c0_i32_189 = arith.constant 0 : i32
      %222 = tpu.memref_slice %arg8[%217, %c0_i32_188, %c0_i32_189] : memref<2x48x128xbf16, #tpu.memory_space<vmem>> -> memref<1x48x128xbf16, #tpu.memory_space<vmem>>
      %223 = tpu.memref_squeeze %222 : memref<1x48x128xbf16, #tpu.memory_space<vmem>> -> memref<48x128xbf16, #tpu.memory_space<vmem>>
      %224 = tpu.memref_slice %arg10[%217] : memref<2x!tpu.dma_semaphore, #tpu.memory_space<semaphore_mem>> -> memref<1x!tpu.dma_semaphore, #tpu.memory_space<semaphore_mem>>
      %225 = tpu.memref_squeeze %224 : memref<1x!tpu.dma_semaphore, #tpu.memory_space<semaphore_mem>> -> memref<!tpu.dma_semaphore, #tpu.memory_space<semaphore_mem>>
      tpu.enqueue_dma source(%221 : memref<48x128xbf16, #tpu.memory_space<any>>) target(%223 : memref<48x128xbf16, #tpu.memory_space<vmem>>) target_semaphore(%225 : memref<!tpu.dma_semaphore, #tpu.memory_space<semaphore_mem>>)
    } else {
    }
    %c2_i32 = arith.constant 2 : i32
    %c0_i32_3 = arith.constant 0 : i32
    %7 = arith.cmpi eq, %c2_i32, %c0_i32_3 : i32
    %c1_i32_4 = arith.constant 1 : i32
    %8 = arith.select %7, %c1_i32_4, %c2_i32 : i32
    %9 = arith.remsi %arg1, %8 : i32
    %c0_i32_5 = arith.constant 0 : i32
    %10 = arith.cmpi ne, %9, %c0_i32_5 : i32
    %c0_i32_6 = arith.constant 0 : i32
    %11 = arith.cmpi slt, %9, %c0_i32_6 : i32
    %c0_i32_7 = arith.constant 0 : i32
    %12 = arith.cmpi slt, %8, %c0_i32_7 : i32
    %13 = arith.xori %11, %12 : i1
    %14 = arith.andi %13, %10 : i1
    %15 = arith.addi %9, %8 : i32
    %16 = arith.select %14, %15, %9 : i32
    %c16_i32 = arith.constant 16 : i32
    %17 = arith.muli %arg1, %c16_i32 : i32
    %18 = tpu.assume_multiple %17, 8 : i32
    %c0_i32_8 = arith.constant 0 : i32
    %19 = tpu.memref_slice %arg2[%arg0, %18, %c0_i32_8] : memref<2x48x128xbf16, #tpu.memory_space<any>> -> memref<1x48x128xbf16, #tpu.memory_space<any>>
    %20 = tpu.memref_squeeze %19 : memref<1x48x128xbf16, #tpu.memory_space<any>> -> memref<48x128xbf16, #tpu.memory_space<any>>
    %c0_i32_9 = arith.constant 0 : i32
    %c0_i32_10 = arith.constant 0 : i32
    %21 = tpu.memref_slice %arg8[%16, %c0_i32_9, %c0_i32_10] : memref<2x48x128xbf16, #tpu.memory_space<vmem>> -> memref<1x48x128xbf16, #tpu.memory_space<vmem>>
    %22 = tpu.memref_squeeze %21 : memref<1x48x128xbf16, #tpu.memory_space<vmem>> -> memref<48x128xbf16, #tpu.memory_space<vmem>>
    %23 = tpu.memref_slice %arg10[%16] : memref<2x!tpu.dma_semaphore, #tpu.memory_space<semaphore_mem>> -> memref<1x!tpu.dma_semaphore, #tpu.memory_space<semaphore_mem>>
    %24 = tpu.memref_squeeze %23 : memref<1x!tpu.dma_semaphore, #tpu.memory_space<semaphore_mem>> -> memref<!tpu.dma_semaphore, #tpu.memory_space<semaphore_mem>>
    tpu.wait_dma2 semaphore(%24 : memref<!tpu.dma_semaphore, #tpu.memory_space<semaphore_mem>>) src(%20 : memref<48x128xbf16, #tpu.memory_space<any>>) dst(%22 : memref<48x128xbf16, #tpu.memory_space<vmem>>)
    %c0_i32_11 = arith.constant 0 : i32
    %c0_i32_12 = arith.constant 0 : i32
    %25 = tpu.memref_slice %arg8[%16, %c0_i32_11, %c0_i32_12] : memref<2x48x128xbf16, #tpu.memory_space<vmem>> -> memref<1x48x128xbf16, #tpu.memory_space<vmem>>
    %26 = tpu.memref_squeeze %25 : memref<1x48x128xbf16, #tpu.memory_space<vmem>> -> memref<48x128xbf16, #tpu.memory_space<vmem>>
    %c2 = arith.constant 2 : index
    %c0 = arith.constant 0 : index
    %27 = vector.load %26[%c2, %c0] : memref<48x128xbf16, #tpu.memory_space<vmem>>, vector<30x128xbf16>
    %c0_13 = arith.constant 0 : index
    %c0_14 = arith.constant 0 : index
    %28 = vector.load %arg3[%c0_13, %c0_14] : memref<1920x128xbf16, #tpu.memory_space<vmem>>, vector<128x128xbf16>
    %cst = arith.constant dense<0.000000e+00> : vector<30x128xf32>
    %29 = tpu.matmul %27, %28, %cst {dimension_numbers = #tpu.dot_dimension_numbers<[1], [0], [0], [1], [0, 0, 1, 1], [], []>} : vector<30x128xbf16>, vector<128x128xbf16>, vector<30x128xf32> -> vector<30x128xf32>
    %c0_i32_15 = arith.constant 0 : i32
    %c0_i32_16 = arith.constant 0 : i32
    %30 = tpu.memref_slice %arg8[%16, %c0_i32_15, %c0_i32_16] : memref<2x48x128xbf16, #tpu.memory_space<vmem>> -> memref<1x48x128xbf16, #tpu.memory_space<vmem>>
    %31 = tpu.memref_squeeze %30 : memref<1x48x128xbf16, #tpu.memory_space<vmem>> -> memref<48x128xbf16, #tpu.memory_space<vmem>>
    %c3 = arith.constant 3 : index
    %c0_17 = arith.constant 0 : index
    %32 = vector.load %31[%c3, %c0_17] : memref<48x128xbf16, #tpu.memory_space<vmem>>, vector<30x128xbf16>
    %c128 = arith.constant 128 : index
    %c0_18 = arith.constant 0 : index
    %33 = vector.load %arg3[%c128, %c0_18] : memref<1920x128xbf16, #tpu.memory_space<vmem>>, vector<128x128xbf16>
    %cst_19 = arith.constant dense<0.000000e+00> : vector<30x128xf32>
    %34 = tpu.matmul %32, %33, %cst_19 {dimension_numbers = #tpu.dot_dimension_numbers<[1], [0], [0], [1], [0, 0, 1, 1], [], []>} : vector<30x128xbf16>, vector<128x128xbf16>, vector<30x128xf32> -> vector<30x128xf32>
    %35 = arith.addf %29, %34 : vector<30x128xf32>
    %c0_i32_20 = arith.constant 0 : i32
    %c0_i32_21 = arith.constant 0 : i32
    %36 = tpu.memref_slice %arg8[%16, %c0_i32_20, %c0_i32_21] : memref<2x48x128xbf16, #tpu.memory_space<vmem>> -> memref<1x48x128xbf16, #tpu.memory_space<vmem>>
    %37 = tpu.memref_squeeze %36 : memref<1x48x128xbf16, #tpu.memory_space<vmem>> -> memref<48x128xbf16, #tpu.memory_space<vmem>>
    %c4 = arith.constant 4 : index
    %c0_22 = arith.constant 0 : index
    %38 = vector.load %37[%c4, %c0_22] : memref<48x128xbf16, #tpu.memory_space<vmem>>, vector<30x128xbf16>
    %c256 = arith.constant 256 : index
    %c0_23 = arith.constant 0 : index
    %39 = vector.load %arg3[%c256, %c0_23] : memref<1920x128xbf16, #tpu.memory_space<vmem>>, vector<128x128xbf16>
    %cst_24 = arith.constant dense<0.000000e+00> : vector<30x128xf32>
    %40 = tpu.matmul %38, %39, %cst_24 {dimension_numbers = #tpu.dot_dimension_numbers<[1], [0], [0], [1], [0, 0, 1, 1], [], []>} : vector<30x128xbf16>, vector<128x128xbf16>, vector<30x128xf32> -> vector<30x128xf32>
    %41 = arith.addf %35, %40 : vector<30x128xf32>
    %c0_i32_25 = arith.constant 0 : i32
    %c0_i32_26 = arith.constant 0 : i32
    %42 = tpu.memref_slice %arg8[%16, %c0_i32_25, %c0_i32_26] : memref<2x48x128xbf16, #tpu.memory_space<vmem>> -> memref<1x48x128xbf16, #tpu.memory_space<vmem>>
    %43 = tpu.memref_squeeze %42 : memref<1x48x128xbf16, #tpu.memory_space<vmem>> -> memref<48x128xbf16, #tpu.memory_space<vmem>>
    %c5 = arith.constant 5 : index
    %c0_27 = arith.constant 0 : index
    %44 = vector.load %43[%c5, %c0_27] : memref<48x128xbf16, #tpu.memory_space<vmem>>, vector<30x128xbf16>
    %c384 = arith.constant 384 : index
    %c0_28 = arith.constant 0 : index
    %45 = vector.load %arg3[%c384, %c0_28] : memref<1920x128xbf16, #tpu.memory_space<vmem>>, vector<128x128xbf16>
    %cst_29 = arith.constant dense<0.000000e+00> : vector<30x128xf32>
    %46 = tpu.matmul %44, %45, %cst_29 {dimension_numbers = #tpu.dot_dimension_numbers<[1], [0], [0], [1], [0, 0, 1, 1], [], []>} : vector<30x128xbf16>, vector<128x128xbf16>, vector<30x128xf32> -> vector<30x128xf32>
    %47 = arith.addf %41, %46 : vector<30x128xf32>
    %c0_i32_30 = arith.constant 0 : i32
    %c0_i32_31 = arith.constant 0 : i32
    %48 = tpu.memref_slice %arg8[%16, %c0_i32_30, %c0_i32_31] : memref<2x48x128xbf16, #tpu.memory_space<vmem>> -> memref<1x48x128xbf16, #tpu.memory_space<vmem>>
    %49 = tpu.memref_squeeze %48 : memref<1x48x128xbf16, #tpu.memory_space<vmem>> -> memref<48x128xbf16, #tpu.memory_space<vmem>>
    %c6 = arith.constant 6 : index
    %c0_32 = arith.constant 0 : index
    %50 = vector.load %49[%c6, %c0_32] : memref<48x128xbf16, #tpu.memory_space<vmem>>, vector<30x128xbf16>
    %c512 = arith.constant 512 : index
    %c0_33 = arith.constant 0 : index
    %51 = vector.load %arg3[%c512, %c0_33] : memref<1920x128xbf16, #tpu.memory_space<vmem>>, vector<128x128xbf16>
    %cst_34 = arith.constant dense<0.000000e+00> : vector<30x128xf32>
    %52 = tpu.matmul %50, %51, %cst_34 {dimension_numbers = #tpu.dot_dimension_numbers<[1], [0], [0], [1], [0, 0, 1, 1], [], []>} : vector<30x128xbf16>, vector<128x128xbf16>, vector<30x128xf32> -> vector<30x128xf32>
    %53 = arith.addf %47, %52 : vector<30x128xf32>
    %c0_i32_35 = arith.constant 0 : i32
    %c0_i32_36 = arith.constant 0 : i32
    %54 = tpu.memref_slice %arg8[%16, %c0_i32_35, %c0_i32_36] : memref<2x48x128xbf16, #tpu.memory_space<vmem>> -> memref<1x48x128xbf16, #tpu.memory_space<vmem>>
    %55 = tpu.memref_squeeze %54 : memref<1x48x128xbf16, #tpu.memory_space<vmem>> -> memref<48x128xbf16, #tpu.memory_space<vmem>>
    %c7 = arith.constant 7 : index
    %c0_37 = arith.constant 0 : index
    %56 = vector.load %55[%c7, %c0_37] : memref<48x128xbf16, #tpu.memory_space<vmem>>, vector<30x128xbf16>
    %c640 = arith.constant 640 : index
    %c0_38 = arith.constant 0 : index
    %57 = vector.load %arg3[%c640, %c0_38] : memref<1920x128xbf16, #tpu.memory_space<vmem>>, vector<128x128xbf16>
    %cst_39 = arith.constant dense<0.000000e+00> : vector<30x128xf32>
    %58 = tpu.matmul %56, %57, %cst_39 {dimension_numbers = #tpu.dot_dimension_numbers<[1], [0], [0], [1], [0, 0, 1, 1], [], []>} : vector<30x128xbf16>, vector<128x128xbf16>, vector<30x128xf32> -> vector<30x128xf32>
    %59 = arith.addf %53, %58 : vector<30x128xf32>
    %c0_i32_40 = arith.constant 0 : i32
    %c0_i32_41 = arith.constant 0 : i32
    %60 = tpu.memref_slice %arg8[%16, %c0_i32_40, %c0_i32_41] : memref<2x48x128xbf16, #tpu.memory_space<vmem>> -> memref<1x48x128xbf16, #tpu.memory_space<vmem>>
    %61 = tpu.memref_squeeze %60 : memref<1x48x128xbf16, #tpu.memory_space<vmem>> -> memref<48x128xbf16, #tpu.memory_space<vmem>>
    %c8 = arith.constant 8 : index
    %c0_42 = arith.constant 0 : index
    %62 = vector.load %61[%c8, %c0_42] : memref<48x128xbf16, #tpu.memory_space<vmem>>, vector<30x128xbf16>
    %c768 = arith.constant 768 : index
    %c0_43 = arith.constant 0 : index
    %63 = vector.load %arg3[%c768, %c0_43] : memref<1920x128xbf16, #tpu.memory_space<vmem>>, vector<128x128xbf16>
    %cst_44 = arith.constant dense<0.000000e+00> : vector<30x128xf32>
    %64 = tpu.matmul %62, %63, %cst_44 {dimension_numbers = #tpu.dot_dimension_numbers<[1], [0], [0], [1], [0, 0, 1, 1], [], []>} : vector<30x128xbf16>, vector<128x128xbf16>, vector<30x128xf32> -> vector<30x128xf32>
    %65 = arith.addf %59, %64 : vector<30x128xf32>
    %c0_i32_45 = arith.constant 0 : i32
    %c0_i32_46 = arith.constant 0 : i32
    %66 = tpu.memref_slice %arg8[%16, %c0_i32_45, %c0_i32_46] : memref<2x48x128xbf16, #tpu.memory_space<vmem>> -> memref<1x48x128xbf16, #tpu.memory_space<vmem>>
    %67 = tpu.memref_squeeze %66 : memref<1x48x128xbf16, #tpu.memory_space<vmem>> -> memref<48x128xbf16, #tpu.memory_space<vmem>>
    %c9 = arith.constant 9 : index
    %c0_47 = arith.constant 0 : index
    %68 = vector.load %67[%c9, %c0_47] : memref<48x128xbf16, #tpu.memory_space<vmem>>, vector<30x128xbf16>
    %c896 = arith.constant 896 : index
    %c0_48 = arith.constant 0 : index
    %69 = vector.load %arg3[%c896, %c0_48] : memref<1920x128xbf16, #tpu.memory_space<vmem>>, vector<128x128xbf16>
    %cst_49 = arith.constant dense<0.000000e+00> : vector<30x128xf32>
    %70 = tpu.matmul %68, %69, %cst_49 {dimension_numbers = #tpu.dot_dimension_numbers<[1], [0], [0], [1], [0, 0, 1, 1], [], []>} : vector<30x128xbf16>, vector<128x128xbf16>, vector<30x128xf32> -> vector<30x128xf32>
    %71 = arith.addf %65, %70 : vector<30x128xf32>
    %c0_i32_50 = arith.constant 0 : i32
    %c0_i32_51 = arith.constant 0 : i32
    %72 = tpu.memref_slice %arg8[%16, %c0_i32_50, %c0_i32_51] : memref<2x48x128xbf16, #tpu.memory_space<vmem>> -> memref<1x48x128xbf16, #tpu.memory_space<vmem>>
    %73 = tpu.memref_squeeze %72 : memref<1x48x128xbf16, #tpu.memory_space<vmem>> -> memref<48x128xbf16, #tpu.memory_space<vmem>>
    %c10 = arith.constant 10 : index
    %c0_52 = arith.constant 0 : index
    %74 = vector.load %73[%c10, %c0_52] : memref<48x128xbf16, #tpu.memory_space<vmem>>, vector<30x128xbf16>
    %c1024 = arith.constant 1024 : index
    %c0_53 = arith.constant 0 : index
    %75 = vector.load %arg3[%c1024, %c0_53] : memref<1920x128xbf16, #tpu.memory_space<vmem>>, vector<128x128xbf16>
    %cst_54 = arith.constant dense<0.000000e+00> : vector<30x128xf32>
    %76 = tpu.matmul %74, %75, %cst_54 {dimension_numbers = #tpu.dot_dimension_numbers<[1], [0], [0], [1], [0, 0, 1, 1], [], []>} : vector<30x128xbf16>, vector<128x128xbf16>, vector<30x128xf32> -> vector<30x128xf32>
    %77 = arith.addf %71, %76 : vector<30x128xf32>
    %c0_i32_55 = arith.constant 0 : i32
    %c0_i32_56 = arith.constant 0 : i32
    %78 = tpu.memref_slice %arg8[%16, %c0_i32_55, %c0_i32_56] : memref<2x48x128xbf16, #tpu.memory_space<vmem>> -> memref<1x48x128xbf16, #tpu.memory_space<vmem>>
    %79 = tpu.memref_squeeze %78 : memref<1x48x128xbf16, #tpu.memory_space<vmem>> -> memref<48x128xbf16, #tpu.memory_space<vmem>>
    %c11 = arith.constant 11 : index
    %c0_57 = arith.constant 0 : index
    %80 = vector.load %79[%c11, %c0_57] : memref<48x128xbf16, #tpu.memory_space<vmem>>, vector<30x128xbf16>
    %c1152 = arith.constant 1152 : index
    %c0_58 = arith.constant 0 : index
    %81 = vector.load %arg3[%c1152, %c0_58] : memref<1920x128xbf16, #tpu.memory_space<vmem>>, vector<128x128xbf16>
    %cst_59 = arith.constant dense<0.000000e+00> : vector<30x128xf32>
    %82 = tpu.matmul %80, %81, %cst_59 {dimension_numbers = #tpu.dot_dimension_numbers<[1], [0], [0], [1], [0, 0, 1, 1], [], []>} : vector<30x128xbf16>, vector<128x128xbf16>, vector<30x128xf32> -> vector<30x128xf32>
    %83 = arith.addf %77, %82 : vector<30x128xf32>
    %c0_i32_60 = arith.constant 0 : i32
    %c0_i32_61 = arith.constant 0 : i32
    %84 = tpu.memref_slice %arg8[%16, %c0_i32_60, %c0_i32_61] : memref<2x48x128xbf16, #tpu.memory_space<vmem>> -> memref<1x48x128xbf16, #tpu.memory_space<vmem>>
    %85 = tpu.memref_squeeze %84 : memref<1x48x128xbf16, #tpu.memory_space<vmem>> -> memref<48x128xbf16, #tpu.memory_space<vmem>>
    %c12 = arith.constant 12 : index
    %c0_62 = arith.constant 0 : index
    %86 = vector.load %85[%c12, %c0_62] : memref<48x128xbf16, #tpu.memory_space<vmem>>, vector<30x128xbf16>
    %c1280 = arith.constant 1280 : index
    %c0_63 = arith.constant 0 : index
    %87 = vector.load %arg3[%c1280, %c0_63] : memref<1920x128xbf16, #tpu.memory_space<vmem>>, vector<128x128xbf16>
    %cst_64 = arith.constant dense<0.000000e+00> : vector<30x128xf32>
    %88 = tpu.matmul %86, %87, %cst_64 {dimension_numbers = #tpu.dot_dimension_numbers<[1], [0], [0], [1], [0, 0, 1, 1], [], []>} : vector<30x128xbf16>, vector<128x128xbf16>, vector<30x128xf32> -> vector<30x128xf32>
    %89 = arith.addf %83, %88 : vector<30x128xf32>
    %c0_i32_65 = arith.constant 0 : i32
    %c0_i32_66 = arith.constant 0 : i32
    %90 = tpu.memref_slice %arg8[%16, %c0_i32_65, %c0_i32_66] : memref<2x48x128xbf16, #tpu.memory_space<vmem>> -> memref<1x48x128xbf16, #tpu.memory_space<vmem>>
    %91 = tpu.memref_squeeze %90 : memref<1x48x128xbf16, #tpu.memory_space<vmem>> -> memref<48x128xbf16, #tpu.memory_space<vmem>>
    %c13 = arith.constant 13 : index
    %c0_67 = arith.constant 0 : index
    %92 = vector.load %91[%c13, %c0_67] : memref<48x128xbf16, #tpu.memory_space<vmem>>, vector<30x128xbf16>
    %c1408 = arith.constant 1408 : index
    %c0_68 = arith.constant 0 : index
    %93 = vector.load %arg3[%c1408, %c0_68] : memref<1920x128xbf16, #tpu.memory_space<vmem>>, vector<128x128xbf16>
    %cst_69 = arith.constant dense<0.000000e+00> : vector<30x128xf32>
    %94 = tpu.matmul %92, %93, %cst_69 {dimension_numbers = #tpu.dot_dimension_numbers<[1], [0], [0], [1], [0, 0, 1, 1], [], []>} : vector<30x128xbf16>, vector<128x128xbf16>, vector<30x128xf32> -> vector<30x128xf32>
    %95 = arith.addf %89, %94 : vector<30x128xf32>
    %c0_i32_70 = arith.constant 0 : i32
    %c0_i32_71 = arith.constant 0 : i32
    %96 = tpu.memref_slice %arg8[%16, %c0_i32_70, %c0_i32_71] : memref<2x48x128xbf16, #tpu.memory_space<vmem>> -> memref<1x48x128xbf16, #tpu.memory_space<vmem>>
    %97 = tpu.memref_squeeze %96 : memref<1x48x128xbf16, #tpu.memory_space<vmem>> -> memref<48x128xbf16, #tpu.memory_space<vmem>>
    %c14 = arith.constant 14 : index
    %c0_72 = arith.constant 0 : index
    %98 = vector.load %97[%c14, %c0_72] : memref<48x128xbf16, #tpu.memory_space<vmem>>, vector<30x128xbf16>
    %c1536 = arith.constant 1536 : index
    %c0_73 = arith.constant 0 : index
    %99 = vector.load %arg3[%c1536, %c0_73] : memref<1920x128xbf16, #tpu.memory_space<vmem>>, vector<128x128xbf16>
    %cst_74 = arith.constant dense<0.000000e+00> : vector<30x128xf32>
    %100 = tpu.matmul %98, %99, %cst_74 {dimension_numbers = #tpu.dot_dimension_numbers<[1], [0], [0], [1], [0, 0, 1, 1], [], []>} : vector<30x128xbf16>, vector<128x128xbf16>, vector<30x128xf32> -> vector<30x128xf32>
    %101 = arith.addf %95, %100 : vector<30x128xf32>
    %c0_i32_75 = arith.constant 0 : i32
    %c0_i32_76 = arith.constant 0 : i32
    %102 = tpu.memref_slice %arg8[%16, %c0_i32_75, %c0_i32_76] : memref<2x48x128xbf16, #tpu.memory_space<vmem>> -> memref<1x48x128xbf16, #tpu.memory_space<vmem>>
    %103 = tpu.memref_squeeze %102 : memref<1x48x128xbf16, #tpu.memory_space<vmem>> -> memref<48x128xbf16, #tpu.memory_space<vmem>>
    %c15 = arith.constant 15 : index
    %c0_77 = arith.constant 0 : index
    %104 = vector.load %103[%c15, %c0_77] : memref<48x128xbf16, #tpu.memory_space<vmem>>, vector<30x128xbf16>
    %c1664 = arith.constant 1664 : index
    %c0_78 = arith.constant 0 : index
    %105 = vector.load %arg3[%c1664, %c0_78] : memref<1920x128xbf16, #tpu.memory_space<vmem>>, vector<128x128xbf16>
    %cst_79 = arith.constant dense<0.000000e+00> : vector<30x128xf32>
    %106 = tpu.matmul %104, %105, %cst_79 {dimension_numbers = #tpu.dot_dimension_numbers<[1], [0], [0], [1], [0, 0, 1, 1], [], []>} : vector<30x128xbf16>, vector<128x128xbf16>, vector<30x128xf32> -> vector<30x128xf32>
    %107 = arith.addf %101, %106 : vector<30x128xf32>
    %c0_i32_80 = arith.constant 0 : i32
    %c0_i32_81 = arith.constant 0 : i32
    %108 = tpu.memref_slice %arg8[%16, %c0_i32_80, %c0_i32_81] : memref<2x48x128xbf16, #tpu.memory_space<vmem>> -> memref<1x48x128xbf16, #tpu.memory_space<vmem>>
    %109 = tpu.memref_squeeze %108 : memref<1x48x128xbf16, #tpu.memory_space<vmem>> -> memref<48x128xbf16, #tpu.memory_space<vmem>>
    %c16 = arith.constant 16 : index
    %c0_82 = arith.constant 0 : index
    %110 = vector.load %109[%c16, %c0_82] : memref<48x128xbf16, #tpu.memory_space<vmem>>, vector<30x128xbf16>
    %c1792 = arith.constant 1792 : index
    %c0_83 = arith.constant 0 : index
    %111 = vector.load %arg3[%c1792, %c0_83] : memref<1920x128xbf16, #tpu.memory_space<vmem>>, vector<128x128xbf16>
    %cst_84 = arith.constant dense<0.000000e+00> : vector<30x128xf32>
    %112 = tpu.matmul %110, %111, %cst_84 {dimension_numbers = #tpu.dot_dimension_numbers<[1], [0], [0], [1], [0, 0, 1, 1], [], []>} : vector<30x128xbf16>, vector<128x128xbf16>, vector<30x128xf32> -> vector<30x128xf32>
    %113 = arith.addf %107, %112 : vector<30x128xf32>
    %c0_85 = arith.constant 0 : index
    %c0_86 = arith.constant 0 : index
    %114 = vector.load %arg5[%c0_85, %c0_86] : memref<1x128xf32, #tpu.memory_space<vmem>>, vector<1x128xf32>
    %115 = vector.broadcast %114 : vector<1x128xf32> to vector<30x128xf32>
    %116 = arith.addf %113, %115 : vector<30x128xf32>
    %cst_87 = arith.constant 0.000000e+00 : f32
    %117 = vector.broadcast %cst_87 : f32 to vector<30x128xf32>
    %118 = arith.maximumf %116, %117 : vector<30x128xf32>
    %c16_i32_88 = arith.constant 16 : i32
    %119 = arith.muli %arg1, %c16_i32_88 : i32
    %c7_i32 = arith.constant 7 : i32
    %120 = arith.subi %119, %c7_i32 : i32
    %121 = tpu.iota {dimensions = array<i32: 0>} : vector<30x128xi32>
    %122 = vector.broadcast %120 : i32 to vector<30x128xi32>
    %123 = arith.addi %122, %121 : vector<30x128xi32>
    %c0_i32_89 = arith.constant 0 : i32
    %124 = vector.broadcast %c0_i32_89 : i32 to vector<30x128xi32>
    %125 = arith.cmpi sge, %123, %124 : vector<30x128xi32>
    %c16_i32_90 = arith.constant 16 : i32
    %126 = vector.broadcast %c16_i32_90 : i32 to vector<30x128xi32>
    %127 = arith.cmpi slt, %123, %126 : vector<30x128xi32>
    %128 = arith.andi %125, %127 : vector<30x128xi1>
    %cst_91 = arith.constant 0.000000e+00 : f32
    %129 = vector.broadcast %cst_91 : f32 to vector<30x128xf32>
    %130 = arith.select %128, %118, %129 : vector<30x128xi1>, vector<30x128xf32>
    %131 = arith.truncf %130 : vector<30x128xf32> to vector<30x128xbf16>
    %c0_92 = arith.constant 0 : index
    %c0_93 = arith.constant 0 : index
    %132 = vector.load %arg9[%c0_92, %c0_93] : memref<32x128xbf16, #tpu.memory_space<vmem>>, vector<30x128xbf16>
    tpu.vector_store %arg9[%c0_92, %c0_93], %131 {strides = array<i32>} : memref<32x128xbf16, #tpu.memory_space<vmem>>, vector<30x128xbf16>,
    %c0_94 = arith.constant 0 : index
    %c0_95 = arith.constant 0 : index
    %133 = vector.load %arg9[%c0_94, %c0_95] : memref<32x128xbf16, #tpu.memory_space<vmem>>, vector<16x128xbf16>
    %c0_96 = arith.constant 0 : index
    %c0_97 = arith.constant 0 : index
    %134 = vector.load %arg4[%c0_96, %c0_97] : memref<1920x128xbf16, #tpu.memory_space<vmem>>, vector<128x128xbf16>
    %cst_98 = arith.constant dense<0.000000e+00> : vector<16x128xf32>
    %135 = tpu.matmul %133, %134, %cst_98 {dimension_numbers = #tpu.dot_dimension_numbers<[1], [0], [0], [1], [0, 0, 1, 1], [], []>} : vector<16x128xbf16>, vector<128x128xbf16>, vector<16x128xf32> -> vector<16x128xf32>
    %c1 = arith.constant 1 : index
    %c0_99 = arith.constant 0 : index
    %136 = vector.load %arg9[%c1, %c0_99] : memref<32x128xbf16, #tpu.memory_space<vmem>>, vector<16x128xbf16>
    %c128_100 = arith.constant 128 : index
    %c0_101 = arith.constant 0 : index
    %137 = vector.load %arg4[%c128_100, %c0_101] : memref<1920x128xbf16, #tpu.memory_space<vmem>>, vector<128x128xbf16>
    %cst_102 = arith.constant dense<0.000000e+00> : vector<16x128xf32>
    %138 = tpu.matmul %136, %137, %cst_102 {dimension_numbers = #tpu.dot_dimension_numbers<[1], [0], [0], [1], [0, 0, 1, 1], [], []>} : vector<16x128xbf16>, vector<128x128xbf16>, vector<16x128xf32> -> vector<16x128xf32>
    %139 = arith.addf %135, %138 : vector<16x128xf32>
    %c2_103 = arith.constant 2 : index
    %c0_104 = arith.constant 0 : index
    %140 = vector.load %arg9[%c2_103, %c0_104] : memref<32x128xbf16, #tpu.memory_space<vmem>>, vector<16x128xbf16>
    %c256_105 = arith.constant 256 : index
    %c0_106 = arith.constant 0 : index
    %141 = vector.load %arg4[%c256_105, %c0_106] : memref<1920x128xbf16, #tpu.memory_space<vmem>>, vector<128x128xbf16>
    %cst_107 = arith.constant dense<0.000000e+00> : vector<16x128xf32>
    %142 = tpu.matmul %140, %141, %cst_107 {dimension_numbers = #tpu.dot_dimension_numbers<[1], [0], [0], [1], [0, 0, 1, 1], [], []>} : vector<16x128xbf16>, vector<128x128xbf16>, vector<16x128xf32> -> vector<16x128xf32>
    %143 = arith.addf %139, %142 : vector<16x128xf32>
    %c3_108 = arith.constant 3 : index
    %c0_109 = arith.constant 0 : index
    %144 = vector.load %arg9[%c3_108, %c0_109] : memref<32x128xbf16, #tpu.memory_space<vmem>>, vector<16x128xbf16>
    %c384_110 = arith.constant 384 : index
    %c0_111 = arith.constant 0 : index
    %145 = vector.load %arg4[%c384_110, %c0_111] : memref<1920x128xbf16, #tpu.memory_space<vmem>>, vector<128x128xbf16>
    %cst_112 = arith.constant dense<0.000000e+00> : vector<16x128xf32>
    %146 = tpu.matmul %144, %145, %cst_112 {dimension_numbers = #tpu.dot_dimension_numbers<[1], [0], [0], [1], [0, 0, 1, 1], [], []>} : vector<16x128xbf16>, vector<128x128xbf16>, vector<16x128xf32> -> vector<16x128xf32>
    %147 = arith.addf %143, %146 : vector<16x128xf32>
    %c4_113 = arith.constant 4 : index
    %c0_114 = arith.constant 0 : index
    %148 = vector.load %arg9[%c4_113, %c0_114] : memref<32x128xbf16, #tpu.memory_space<vmem>>, vector<16x128xbf16>
    %c512_115 = arith.constant 512 : index
    %c0_116 = arith.constant 0 : index
    %149 = vector.load %arg4[%c512_115, %c0_116] : memref<1920x128xbf16, #tpu.memory_space<vmem>>, vector<128x128xbf16>
    %cst_117 = arith.constant dense<0.000000e+00> : vector<16x128xf32>
    %150 = tpu.matmul %148, %149, %cst_117 {dimension_numbers = #tpu.dot_dimension_numbers<[1], [0], [0], [1], [0, 0, 1, 1], [], []>} : vector<16x128xbf16>, vector<128x128xbf16>, vector<16x128xf32> -> vector<16x128xf32>
    %151 = arith.addf %147, %150 : vector<16x128xf32>
    %c5_118 = arith.constant 5 : index
    %c0_119 = arith.constant 0 : index
    %152 = vector.load %arg9[%c5_118, %c0_119] : memref<32x128xbf16, #tpu.memory_space<vmem>>, vector<16x128xbf16>
    %c640_120 = arith.constant 640 : index
    %c0_121 = arith.constant 0 : index
    %153 = vector.load %arg4[%c640_120, %c0_121] : memref<1920x128xbf16, #tpu.memory_space<vmem>>, vector<128x128xbf16>
    %cst_122 = arith.constant dense<0.000000e+00> : vector<16x128xf32>
    %154 = tpu.matmul %152, %153, %cst_122 {dimension_numbers = #tpu.dot_dimension_numbers<[1], [0], [0], [1], [0, 0, 1, 1], [], []>} : vector<16x128xbf16>, vector<128x128xbf16>, vector<16x128xf32> -> vector<16x128xf32>
    %155 = arith.addf %151, %154 : vector<16x128xf32>
    %c6_123 = arith.constant 6 : index
    %c0_124 = arith.constant 0 : index
    %156 = vector.load %arg9[%c6_123, %c0_124] : memref<32x128xbf16, #tpu.memory_space<vmem>>, vector<16x128xbf16>
    %c768_125 = arith.constant 768 : index
    %c0_126 = arith.constant 0 : index
    %157 = vector.load %arg4[%c768_125, %c0_126] : memref<1920x128xbf16, #tpu.memory_space<vmem>>, vector<128x128xbf16>
    %cst_127 = arith.constant dense<0.000000e+00> : vector<16x128xf32>
    %158 = tpu.matmul %156, %157, %cst_127 {dimension_numbers = #tpu.dot_dimension_numbers<[1], [0], [0], [1], [0, 0, 1, 1], [], []>} : vector<16x128xbf16>, vector<128x128xbf16>, vector<16x128xf32> -> vector<16x128xf32>
    %159 = arith.addf %155, %158 : vector<16x128xf32>
    %c7_128 = arith.constant 7 : index
    %c0_129 = arith.constant 0 : index
    %160 = vector.load %arg9[%c7_128, %c0_129] : memref<32x128xbf16, #tpu.memory_space<vmem>>, vector<16x128xbf16>
    %c896_130 = arith.constant 896 : index
    %c0_131 = arith.constant 0 : index
    %161 = vector.load %arg4[%c896_130, %c0_131] : memref<1920x128xbf16, #tpu.memory_space<vmem>>, vector<128x128xbf16>
    %cst_132 = arith.constant dense<0.000000e+00> : vector<16x128xf32>
    %162 = tpu.matmul %160, %161, %cst_132 {dimension_numbers = #tpu.dot_dimension_numbers<[1], [0], [0], [1], [0, 0, 1, 1], [], []>} : vector<16x128xbf16>, vector<128x128xbf16>, vector<16x128xf32> -> vector<16x128xf32>
    %163 = arith.addf %159, %162 : vector<16x128xf32>
    %c8_133 = arith.constant 8 : index
    %c0_134 = arith.constant 0 : index
    %164 = vector.load %arg9[%c8_133, %c0_134] : memref<32x128xbf16, #tpu.memory_space<vmem>>, vector<16x128xbf16>
    %c1024_135 = arith.constant 1024 : index
    %c0_136 = arith.constant 0 : index
    %165 = vector.load %arg4[%c1024_135, %c0_136] : memref<1920x128xbf16, #tpu.memory_space<vmem>>, vector<128x128xbf16>
    %cst_137 = arith.constant dense<0.000000e+00> : vector<16x128xf32>
    %166 = tpu.matmul %164, %165, %cst_137 {dimension_numbers = #tpu.dot_dimension_numbers<[1], [0], [0], [1], [0, 0, 1, 1], [], []>} : vector<16x128xbf16>, vector<128x128xbf16>, vector<16x128xf32> -> vector<16x128xf32>
    %167 = arith.addf %163, %166 : vector<16x128xf32>
    %c9_138 = arith.constant 9 : index
    %c0_139 = arith.constant 0 : index
    %168 = vector.load %arg9[%c9_138, %c0_139] : memref<32x128xbf16, #tpu.memory_space<vmem>>, vector<16x128xbf16>
    %c1152_140 = arith.constant 1152 : index
    %c0_141 = arith.constant 0 : index
    %169 = vector.load %arg4[%c1152_140, %c0_141] : memref<1920x128xbf16, #tpu.memory_space<vmem>>, vector<128x128xbf16>
    %cst_142 = arith.constant dense<0.000000e+00> : vector<16x128xf32>
    %170 = tpu.matmul %168, %169, %cst_142 {dimension_numbers = #tpu.dot_dimension_numbers<[1], [0], [0], [1], [0, 0, 1, 1], [], []>} : vector<16x128xbf16>, vector<128x128xbf16>, vector<16x128xf32> -> vector<16x128xf32>
    %171 = arith.addf %167, %170 : vector<16x128xf32>
    %c10_143 = arith.constant 10 : index
    %c0_144 = arith.constant 0 : index
    %172 = vector.load %arg9[%c10_143, %c0_144] : memref<32x128xbf16, #tpu.memory_space<vmem>>, vector<16x128xbf16>
    %c1280_145 = arith.constant 1280 : index
    %c0_146 = arith.constant 0 : index
    %173 = vector.load %arg4[%c1280_145, %c0_146] : memref<1920x128xbf16, #tpu.memory_space<vmem>>, vector<128x128xbf16>
    %cst_147 = arith.constant dense<0.000000e+00> : vector<16x128xf32>
    %174 = tpu.matmul %172, %173, %cst_147 {dimension_numbers = #tpu.dot_dimension_numbers<[1], [0], [0], [1], [0, 0, 1, 1], [], []>} : vector<16x128xbf16>, vector<128x128xbf16>, vector<16x128xf32> -> vector<16x128xf32>
    %175 = arith.addf %171, %174 : vector<16x128xf32>
    %c11_148 = arith.constant 11 : index
    %c0_149 = arith.constant 0 : index
    %176 = vector.load %arg9[%c11_148, %c0_149] : memref<32x128xbf16, #tpu.memory_space<vmem>>, vector<16x128xbf16>
    %c1408_150 = arith.constant 1408 : index
    %c0_151 = arith.constant 0 : index
    %177 = vector.load %arg4[%c1408_150, %c0_151] : memref<1920x128xbf16, #tpu.memory_space<vmem>>, vector<128x128xbf16>
    %cst_152 = arith.constant dense<0.000000e+00> : vector<16x128xf32>
    %178 = tpu.matmul %176, %177, %cst_152 {dimension_numbers = #tpu.dot_dimension_numbers<[1], [0], [0], [1], [0, 0, 1, 1], [], []>} : vector<16x128xbf16>, vector<128x128xbf16>, vector<16x128xf32> -> vector<16x128xf32>
    %179 = arith.addf %175, %178 : vector<16x128xf32>
    %c12_153 = arith.constant 12 : index
    %c0_154 = arith.constant 0 : index
    %180 = vector.load %arg9[%c12_153, %c0_154] : memref<32x128xbf16, #tpu.memory_space<vmem>>, vector<16x128xbf16>
    %c1536_155 = arith.constant 1536 : index
    %c0_156 = arith.constant 0 : index
    %181 = vector.load %arg4[%c1536_155, %c0_156] : memref<1920x128xbf16, #tpu.memory_space<vmem>>, vector<128x128xbf16>
    %cst_157 = arith.constant dense<0.000000e+00> : vector<16x128xf32>
    %182 = tpu.matmul %180, %181, %cst_157 {dimension_numbers = #tpu.dot_dimension_numbers<[1], [0], [0], [1], [0, 0, 1, 1], [], []>} : vector<16x128xbf16>, vector<128x128xbf16>, vector<16x128xf32> -> vector<16x128xf32>
    %183 = arith.addf %179, %182 : vector<16x128xf32>
    %c13_158 = arith.constant 13 : index
    %c0_159 = arith.constant 0 : index
    %184 = vector.load %arg9[%c13_158, %c0_159] : memref<32x128xbf16, #tpu.memory_space<vmem>>, vector<16x128xbf16>
    %c1664_160 = arith.constant 1664 : index
    %c0_161 = arith.constant 0 : index
    %185 = vector.load %arg4[%c1664_160, %c0_161] : memref<1920x128xbf16, #tpu.memory_space<vmem>>, vector<128x128xbf16>
    %cst_162 = arith.constant dense<0.000000e+00> : vector<16x128xf32>
    %186 = tpu.matmul %184, %185, %cst_162 {dimension_numbers = #tpu.dot_dimension_numbers<[1], [0], [0], [1], [0, 0, 1, 1], [], []>} : vector<16x128xbf16>, vector<128x128xbf16>, vector<16x128xf32> -> vector<16x128xf32>
    %187 = arith.addf %183, %186 : vector<16x128xf32>
    %c14_163 = arith.constant 14 : index
    %c0_164 = arith.constant 0 : index
    %188 = vector.load %arg9[%c14_163, %c0_164] : memref<32x128xbf16, #tpu.memory_space<vmem>>, vector<16x128xbf16>
    %c1792_165 = arith.constant 1792 : index
    %c0_166 = arith.constant 0 : index
    %189 = vector.load %arg4[%c1792_165, %c0_166] : memref<1920x128xbf16, #tpu.memory_space<vmem>>, vector<128x128xbf16>
    %cst_167 = arith.constant dense<0.000000e+00> : vector<16x128xf32>
    %190 = tpu.matmul %188, %189, %cst_167 {dimension_numbers = #tpu.dot_dimension_numbers<[1], [0], [0], [1], [0, 0, 1, 1], [], []>} : vector<16x128xbf16>, vector<128x128xbf16>, vector<16x128xf32> -> vector<16x128xf32>
    %191 = arith.addf %187, %190 : vector<16x128xf32>
    %c0_i32_168 = arith.constant 0 : i32
    %c0_i32_169 = arith.constant 0 : i32
    %192 = tpu.memref_slice %arg8[%16, %c0_i32_168, %c0_i32_169] : memref<2x48x128xbf16, #tpu.memory_space<vmem>> -> memref<1x48x128xbf16, #tpu.memory_space<vmem>>
    %193 = tpu.memref_squeeze %192 : memref<1x48x128xbf16, #tpu.memory_space<vmem>> -> memref<48x128xbf16, #tpu.memory_space<vmem>>
    %c16_170 = arith.constant 16 : index
    %c0_171 = arith.constant 0 : index
    %194 = vector.load %193[%c16_170, %c0_171] : memref<48x128xbf16, #tpu.memory_space<vmem>>, vector<16x128xbf16>
    %195 = arith.extf %194 : vector<16x128xbf16> to vector<16x128xf32>
    %c0_172 = arith.constant 0 : index
    %c0_173 = arith.constant 0 : index
    %196 = vector.load %arg6[%c0_172, %c0_173] : memref<1x128xf32, #tpu.memory_space<vmem>>, vector<1x128xf32>
    %197 = vector.broadcast %196 : vector<1x128xf32> to vector<16x128xf32>
    %198 = arith.addf %191, %197 : vector<16x128xf32>
    %199 = arith.addf %198, %195 : vector<16x128xf32>
    %cst_174 = arith.constant 0.000000e+00 : f32
    %200 = vector.broadcast %cst_174 : f32 to vector<16x128xf32>
    %201 = arith.maximumf %199, %200 : vector<16x128xf32>
    %202 = arith.truncf %201 : vector<16x128xf32> to vector<16x128xbf16>
    %c0_175 = arith.constant 0 : index
    %c0_176 = arith.constant 0 : index
    %c0_177 = arith.constant 0 : index
    %203 = vector.load %arg7[%c0_175, %c0_176, %c0_177] : memref<1x16x128xbf16, #tpu.memory_space<vmem>>, vector<1x16x128xbf16>
    %204 = vector.shape_cast %203 : vector<1x16x128xbf16> to vector<16x128xbf16>
    %205 = vector.shape_cast %202 : vector<16x128xbf16> to vector<1x16x128xbf16>
    tpu.vector_store %arg7[%c0_175, %c0_176, %c0_177], %205 {strides = array<i32>} : memref<1x16x128xbf16, #tpu.memory_space<vmem>>, vector<1x16x128xbf16>,
    return
  }
  func.func @transform_1(%arg0: i32, %arg1: i32) -> (i32, i32) {
    %c0_i32 = arith.constant 0 : i32
    %c0_i32_0 = arith.constant 0 : i32
    %c0_i32_1 = arith.constant 0 : i32
    return %c0_i32, %c0_i32_0 : i32, i32
  }
  func.func @transform_2(%arg0: i32, %arg1: i32) -> (i32, i32) {
    %c0_i32 = arith.constant 0 : i32
    %c0_i32_0 = arith.constant 0 : i32
    %c0_i32_1 = arith.constant 0 : i32
    return %c0_i32, %c0_i32_0 : i32, i32
  }
  func.func @transform_3(%arg0: i32, %arg1: i32) -> (i32, i32) {
    %c0_i32 = arith.constant 0 : i32
    %c0_i32_0 = arith.constant 0 : i32
    %c0_i32_1 = arith.constant 0 : i32
    return %c0_i32, %c0_i32_0 : i32, i32
  }
  func.func @transform_4(%arg0: i32, %arg1: i32) -> (i32, i32) {
    %c0_i32 = arith.constant 0 : i32
    %c0_i32_0 = arith.constant 0 : i32
    %c0_i32_1 = arith.constant 0 : i32
    return %c0_i32, %c0_i32_0 : i32, i32
  }
  func.func @transform_5(%arg0: i32, %arg1: i32) -> (i32, i32, i32) {
    %c0_i32 = arith.constant 0 : i32
    %c0_i32_0 = arith.constant 0 : i32
    return %arg0, %arg1, %c0_i32 : i32, i32, i32
  }
}

</mosaic_0001>

<llo_original>
// kernel: tpu_custom_call.1
$region0: #{tpu_custom_call.1}
  #allocation0 [shape = 'u32[]', space=smem, size = 0x4, offset = 0x4, fixed_abs, tag = 'smem constant byte address 0x4 - core index']
  #allocation1 [shape = 'u32[144,128]{1,0:T(1,128)}', space=vmem, size = 0x12000, scoped, tag = 'internal scratch']
  #allocation2 [shape = 'bf16[2,48,128]{2,1,0:T(16,128)(2,1)}', space=vmem, size = 0x6000, scoped, tag = 'scratch operand']
  #allocation3 [shape = 'bf16[32,128]{1,0:T(16,128)(2,1)}', space=vmem, size = 0x2000, scoped, tag = 'scratch operand']
  #allocation4 [shape = 's32[2]{0}', space=sflag, size = 0x8, scoped, tag = 'scratch operand']
  #allocation11 [shape = 's32[]', space=sflag, size = 0x4, offset = 0, fixed_abs, tag = 'sflag constant byte address 0x0 - dummy sync flag']
  #allocation12 [shape = 's32[]', space=sflag, size = 0x4, offset = 0, fixed_abs, tag = 'sflag constant byte address 0x0 - dummy sync flag']
  #allocation13 [shape = 'u32[]', space=smem, size = 0x4, offset = 0x44, fixed_abs, tag = 'smem constant byte address 0x44 - assertion arg 0']
  #allocation14 [shape = 'u32[]', space=smem, size = 0x4, offset = 0x48, fixed_abs, tag = 'smem constant byte address 0x48 - assertion arg 1']
  #allocation15 [shape = 's32[]', space=sflag, size = 0x4, offset = 0, fixed_abs, tag = 'sflag constant byte address 0x0 - dummy sync flag']
  #allocation16 [shape = 's32[]', space=sflag, size = 0x4, offset = 0, fixed_abs, tag = 'sflag constant byte address 0x0 - dummy sync flag']
  %s0 = inlined_call_operand.hbm [shape: bf16[2,48,128], index: 0, kind: input, shape index: {}]
  %s1 = inlined_call_operand.hbm [shape: bf16[1920,128], index: 1, kind: input, shape index: {}]
  %s2 = inlined_call_operand.hbm [shape: bf16[1920,128], index: 2, kind: input, shape index: {}]
  %s3 = inlined_call_operand.vmem [shape: f32[1,128], index: 3, kind: input, shape index: {}]
  %s4 = inlined_call_operand.vmem [shape: f32[1,128], index: 4, kind: input, shape index: {}]
  %s5 = inlined_call_operand.hbm [shape: bf16[2,16,128], index: 5, kind: output, shape index: {}]
  %s6 = sld [smem:[#allocation0]]
  $region73: #{tpu_custom_call.1} parent=0
    _
  %s8 = ssub.s32 1, %s6
  %s9 = scalar_select 0, %s8, %s6
  $region1: #{tpu_custom_call.1} parent=0
    #allocation5 [shape = 'u8[491520]{0}', space=vmem, size = 0x78000, scoped, tag = 'input window, operand 1, single buffered']
    #allocation6 [shape = 's32[2]{0}', space=sflag, size = 0x8, scoped, tag = 'scoped memory for tpu_custom_call.1']
    #allocation7 [shape = 's32[2]{0}', space=sflag, size = 0x8, scoped, tag = 'scoped memory for tpu_custom_call.1']
    #allocation8 [shape = 'u8[491520]{0}', space=vmem, size = 0x78000, scoped, tag = 'input window, operand 2, single buffered']
    #allocation9 [shape = 's32[1]{0}', space=sflag, size = 0x4, scoped, tag = 'scoped memory for tpu_custom_call.1']
    #allocation10 [shape = 'u8[8192]{0}', space=vmem, size = 0x2000, scoped, tag = 'output window, operand 0']
    %10 = vsyncpa [#allocation6], 0
    %11 = vsyncpa [#allocation9], 0
    %12 = vsyncpa [#allocation7], 0
    %s13 = scalar_lea.sflag [#allocation7], 1
    %14 = vsyncpa %s13, 0
    loop: start=0, step=1, limit=4
    $region2: #{tpu_custom_call.1} parent=1 // loop_pre_header
      _
    $region3: #{tpu_custom_call.1} parent=1 // loop_header
      %s16 = sphi 0, %s20
      %p17 = scmp.ge.s32.totalorder %s16, 4
      %s23 = sphi 0, %s35
      %s24 = sphi 0, %s31
      %s25 = sphi 0, %s23
      %s26 = sphi 0, %s24
      %s27 = sphi 0, %s25
      %s28 = sphi 0, %s26
      %s36 = sphi 0, %s36
      %s38 = sphi 0, %s36
      %s39 = sphi 0, %s38
      %s53 = sphi 0, %s39
      %s57 = sphi 0, %s57
      %s59 = sphi 0, %s57
      %s60 = sphi 0, %s59
      %s74 = sphi 0, %s60
      %s78 = sphi 0, %s78
      %s80 = sphi 0, %s78
      %s81 = sphi 0, %s80
      %s95 = sphi 0, %s81
      %s99 = sphi 0, %s99
      %s101 = sphi 0, %s99
      %s102 = sphi 0, %s101
      %s116 = sphi 0, %s102
      %s124 = sphi 0, %s126
      %s127 = sphi 0, %s124
      %s128 = sphi 0, %s127
      %s144 = sphi 0, %s128
    $region4: #{tpu_custom_call.1} parent=1 // loop_header_branch
      %19 = sbr.rel (%p17) target = $region8
    $region5: #{tpu_custom_call.1} parent=1 // loop_body
      %s21 = ssub.s32 %s16, 1
      %s22 = ssub.s32 %s16, 2
      %s29 = sadd.s32 1, %s24
      %p30 = scmp.ge.s32.totalorder %s29, 1
      %s31 = scalar_select %p30, 0, %s29
      %s32 = sadd.s32 1, %s23
      %s33 = scalar_select %p30, %s32, %s23
      %p34 = scmp.ge.s32.totalorder %s33, 2
      %s35 = scalar_select %p34, 0, %s33
      %s37 = sadd.s32 %s36, 1
      %p40 = scmp.eq.s32.totalorder %s16, 1
      %p41 = scmp.ne.s32.totalorder %s36, %s38
      %p42 = scmp.eq.s32.totalorder %s16, 0
      %p43 = por %p41, %p42
      %p44 = scmp.ne.s32.totalorder %s36, %s38
      %p45 = scmp.eq.s32.totalorder %s21, 1
      %p46 = por %p44, %p45
      %p47 = scmp.ne.s32.totalorder %s38, %s39
      %p48 = scmp.eq.s32.totalorder %s21, 0
      %p49 = por %p47, %p48
      %p50 = scmp.ne.s32.totalorder %s38, %s39
      %p51 = scmp.eq.s32.totalorder %s22, 1
      %p52 = por %p50, %p51
      %p54 = scmp.ne.s32.totalorder %s39, %s53
      %p55 = scmp.eq.s32.totalorder %s22, 0
      %p56 = por %p54, %p55
      %s58 = sadd.s32 %s57, 1
      %p61 = scmp.eq.s32.totalorder %s16, 1
      %p62 = scmp.ne.s32.totalorder %s57, %s59
      %p63 = scmp.eq.s32.totalorder %s16, 0
      %p64 = por %p62, %p63
      %p65 = scmp.ne.s32.totalorder %s57, %s59
      %p66 = scmp.eq.s32.totalorder %s21, 1
      %p67 = por %p65, %p66
      %p68 = scmp.ne.s32.totalorder %s59, %s60
      %p69 = scmp.eq.s32.totalorder %s21, 0
      %p70 = por %p68, %p69
      %p71 = scmp.ne.s32.totalorder %s59, %s60
      %p72 = scmp.eq.s32.totalorder %s22, 1
      %p73 = por %p71, %p72
      %p75 = scmp.ne.s32.totalorder %s60, %s74
      %p76 = scmp.eq.s32.totalorder %s22, 0
      %p77 = por %p75, %p76
      %s79 = sadd.s32 %s78, 1
      %p82 = scmp.eq.s32.totalorder %s16, 1
      %p83 = scmp.ne.s32.totalorder %s78, %s80
      %p84 = scmp.eq.s32.totalorder %s16, 0
      %p85 = por %p83, %p84
      %p86 = scmp.ne.s32.totalorder %s78, %s80
      %p87 = scmp.eq.s32.totalorder %s21, 1
      %p88 = por %p86, %p87
      %p89 = scmp.ne.s32.totalorder %s80, %s81
      %p90 = scmp.eq.s32.totalorder %s21, 0
      %p91 = por %p89, %p90
      %p92 = scmp.ne.s32.totalorder %s80, %s81
      %p93 = scmp.eq.s32.totalorder %s22, 1
      %p94 = por %p92, %p93
      %p96 = scmp.ne.s32.totalorder %s81, %s95
      %p97 = scmp.eq.s32.totalorder %s22, 0
      %p98 = por %p96, %p97
      %s100 = sadd.s32 %s99, 1
      %p103 = scmp.eq.s32.totalorder %s16, 1
      %p104 = scmp.ne.s32.totalorder %s99, %s101
      %p105 = scmp.eq.s32.totalorder %s16, 0
      %p106 = por %p104, %p105
      %p107 = scmp.ne.s32.totalorder %s99, %s101
      %p108 = scmp.eq.s32.totalorder %s21, 1
      %p109 = por %p107, %p108
      %p110 = scmp.ne.s32.totalorder %s101, %s102
      %p111 = scmp.eq.s32.totalorder %s21, 0
      %p112 = por %p110, %p111
      %p113 = scmp.ne.s32.totalorder %s101, %s102
      %p114 = scmp.eq.s32.totalorder %s22, 1
      %p115 = por %p113, %p114
      %p117 = scmp.ne.s32.totalorder %s102, %s116
      %p118 = scmp.eq.s32.totalorder %s22, 0
      %p119 = por %p117, %p118
      %s120 = ssub.s32 %s23, %s35
      %s121 = ssub.s32 %s24, %s31
      %s122 = sor.u32 %s120, %s121
      %p123 = scmp.eq.s32.totalorder %s122, 0
      %s125 = sadd.s32 %s124, 1
      %s126 = scalar_select %p123, %s124, %s125
      %p129 = pneg %p123
      %p130 = scmp.eq.s32.totalorder %s16, 1
      %p131 = por %p129, %p130
      %p132 = scmp.ne.s32.totalorder %s124, %s127
      %p133 = scmp.eq.s32.totalorder %s16, 0
      %p134 = por %p132, %p133
      %p135 = scmp.ne.s32.totalorder %s124, %s127
      %p136 = scmp.eq.s32.totalorder %s21, 1
      %p137 = por %p135, %p136
      %p138 = scmp.ne.s32.totalorder %s127, %s128
      %p139 = scmp.eq.s32.totalorder %s21, 0
      %p140 = por %p138, %p139
      %p141 = scmp.ne.s32.totalorder %s127, %s128
      %p142 = scmp.eq.s32.totalorder %s22, 1
      %p143 = por %p141, %p142
      %p145 = scmp.ne.s32.totalorder %s128, %s144
      %p146 = scmp.eq.s32.totalorder %s22, 0
      %p147 = por %p145, %p146
      %p148 = scmp.le.s32.totalorder 1, %s16
      %p149 = scmp.lt.s32.totalorder %s16, 3
      %p150 = pnand %p148, %p149
      %p151 = pneg %p150
      // Predicated region
      $region9: #{tpu_custom_call.1} parent=5 // pred_check
        _
      $region10: #{tpu_custom_call.1} parent=5 // pred_check_branch
        %153 = sbr.rel (%p150) target = $region12
      $region11: #{tpu_custom_call.1} parent=5 // pred_region
        %s154 = ssub.s32 %s16, 1
        // Predicated region
        $region13: #{tpu_custom_call.1} parent=11 // pred_check
          %p155 = pneg %p49
        $region14: #{tpu_custom_call.1} parent=11 // pred_check_branch
          %157 = sbr.rel (%p155) target = $region16
        $region15: #{tpu_custom_call.1} parent=11 // pred_region
          %s159 = ssub.s32 15360, 15360
          %160 = vsyncadd [#allocation6], %s159
          %s161 = sshll.u32 [#allocation5], 4
          %s162 = int_to_ptr.vmem [resolvable:$true] %s161
          %167 = dma.hbm_to_vmem [thread:$0]  %s1, 15360, %s162, [#allocation6], 64, 64, 4
        $region16: #{tpu_custom_call.1} parent=11 // pred_fallthru
          _
        // Predicated region
        $region17: #{tpu_custom_call.1} parent=11 // pred_check
          %p168 = pneg %p70
        $region18: #{tpu_custom_call.1} parent=11 // pred_check_branch
          %170 = sbr.rel (%p168) target = $region20
        $region19: #{tpu_custom_call.1} parent=11 // pred_region
          %s172 = ssub.s32 15360, 15360
          %173 = vsyncadd [#allocation9], %s172
          %s174 = sshll.u32 [#allocation8], 4
          %s175 = int_to_ptr.vmem [resolvable:$true] %s174
          %180 = dma.hbm_to_vmem [thread:$0]  %s2, 15360, %s175, [#allocation9], 64, 64, 4
        $region20: #{tpu_custom_call.1} parent=11 // pred_fallthru
          _
        // Predicated region
        $region21: #{tpu_custom_call.1} parent=11 // pred_check
          %p181 = pneg %p91
        $region22: #{tpu_custom_call.1} parent=11 // pred_check_branch
          %183 = sbr.rel (%p181) target = $region24
        $region23: #{tpu_custom_call.1} parent=11 // pred_region
          _
        $region24: #{tpu_custom_call.1} parent=11 // pred_fallthru
          _
        // Predicated region
        $region25: #{tpu_custom_call.1} parent=11 // pred_check
          %p184 = pneg %p112
        $region26: #{tpu_custom_call.1} parent=11 // pred_check_branch
          %186 = sbr.rel (%p184) target = $region28
        $region27: #{tpu_custom_call.1} parent=11 // pred_region
          _
        $region28: #{tpu_custom_call.1} parent=11 // pred_fallthru
          _
      $region12: #{tpu_custom_call.1} parent=5 // pred_fallthru
        _
      %p187 = scmp.lt.s32.totalorder %s16, 2
      // Predicated region
      $region29: #{tpu_custom_call.1} parent=5 // pred_check
        %p188 = pneg %p187
      $region30: #{tpu_custom_call.1} parent=5 // pred_check_branch
        %190 = sbr.rel (%p188) target = $region32
      $region31: #{tpu_custom_call.1} parent=5 // pred_region
        _
      $region32: #{tpu_custom_call.1} parent=5 // pred_fallthru
        _
      %p191 = scmp.le.s32.totalorder 1, %s16
      %p192 = scmp.lt.s32.totalorder %s16, 3
      %p193 = pnand %p191, %p192
      %p194 = pneg %p193
      // Predicated region
      $region33: #{tpu_custom_call.1} parent=5 // pred_check
        _
      $region34: #{tpu_custom_call.1} parent=5 // pred_check_branch
        %196 = sbr.rel (%p193) target = $region36
      $region35: #{tpu_custom_call.1} parent=5 // pred_region
        %s197 = ssub.s32 %s16, 1
        // Predicated region
        $region37: #{tpu_custom_call.1} parent=35 // pred_check
          %p198 = pneg %p49
        $region38: #{tpu_custom_call.1} parent=35 // pred_check_branch
          %200 = sbr.rel (%p198) target = $region40
        $region39: #{tpu_custom_call.1} parent=35 // pred_region
          %201 = dma.done [#allocation6], 15360
        $region40: #{tpu_custom_call.1} parent=35 // pred_fallthru
          _
        // Predicated region
        $region41: #{tpu_custom_call.1} parent=35 // pred_check
          %p202 = pneg %p70
        $region42: #{tpu_custom_call.1} parent=35 // pred_check_branch
          %204 = sbr.rel (%p202) target = $region44
        $region43: #{tpu_custom_call.1} parent=35 // pred_region
          %205 = dma.done [#allocation9], 15360
        $region44: #{tpu_custom_call.1} parent=35 // pred_fallthru
          _
        %p206 = pneg %p49
        %p207 = pneg %p46
        %p208 = pneg %p70
        %p209 = pneg %p67
        %p210 = pneg %p91
        %p211 = pneg %p88
        %p212 = pneg %p112
        %p213 = pneg %p109
        %p214 = pneg %p140
        %p215 = pneg %p137
        %s216 = sand.u32 %s127, 1
        %s217 = scalar_lea.sflag [#allocation7], %s216
        %s218 = sand.u32 %s127, 1
        %s219 = smul.addr %s218, 8
        %s220 = scalar_lea.vmem [#allocation10], %s219
        %s221 = smul.u32 2, %s26
        %p223 = scmp.eq.s32.totalorder %s26, 0
        // Predicated region
        $region45: #{tpu_custom_call.1} parent=35 // pred_check
          %p224 = pneg %p223
        $region46: #{tpu_custom_call.1} parent=35 // pred_check_branch
          %226 = sbr.rel (%p224) target = $region48
        $region47: #{tpu_custom_call.1} parent=35 // pred_region
          %s227 = smul.u32 %s26, 16
          %s228 = sshra.s32 %s227, 3
          %s229 = sand.u32 %s227, 7
          %s230 = smul.u32 %s25, 6
          %s231 = sadd.s32 %s228, %s230
          %s232 = smul.addr %s231, 64
          %s233 = scalar_lea.hbm %s0, %s232
          // Predicated region
          $region49: #{tpu_custom_call.1} parent=47 // pred_check
            _
          $region50: #{tpu_custom_call.1} parent=47 // pred_check_branch
            %235 = sbr.rel target = $region52
          $region51: #{tpu_custom_call.1} parent=47 // pred_region
            %236 = sst [smem:[#allocation13]] [#allocation12]
            %237 = sst [smem:[#allocation14]] [#allocation11]
          $region52: #{tpu_custom_call.1} parent=47 // pred_fallthru
            _
          %239 = shalt.err (0)
          %s241 = sshll.u32 [#allocation2], 4
          %s242 = int_to_ptr.vmem [resolvable:$true] %s241
          %244 = dma.hbm_to_vmem [thread:$0]  %s233, 384, %s242, [#allocation4]
        $region48: #{tpu_custom_call.1} parent=35 // pred_fallthru
          _
        %s245 = sadd.s32 %s26, 1
        %p246 = scmp.lt.s32.totalorder %s245, 1
        // Predicated region
        $region53: #{tpu_custom_call.1} parent=35 // pred_check
          %p247 = pneg %p246
        $region54: #{tpu_custom_call.1} parent=35 // pred_check_branch
          %249 = sbr.rel (%p247) target = $region56
        $region55: #{tpu_custom_call.1} parent=35 // pred_region
          %p250 = scmp.lt.s32.totalorder %s245, 0
          %s251 = ssub.s32 0, %s245
          %s252 = scalar_select %p250, %s251, %s245
          %s253 = sand.u32 %s252, 1
          %s254 = ssub.s32 0, %s253
          %s255 = scalar_select %p250, %s254, %s253
          %p256 = scmp.ne.s32.totalorder %s255, 0
          %p257 = scmp.lt.s32.totalorder %s255, 0
          %p258 = pnand %p257, %p256
          %p259 = pneg %p258
          %s260 = sadd.s32 %s255, 2
          %s261 = scalar_select %p259, %s260, %s255
          %s262 = smul.u32 %s245, 16
          %s263 = sshra.s32 %s262, 3
          %s264 = sand.u32 %s262, 7
          %s265 = smul.u32 %s25, 6
          %s266 = sadd.s32 %s263, %s265
          %s267 = smul.addr %s266, 64
          %s268 = scalar_lea.hbm %s0, %s267
          %s269 = smul.u32 %s261, 3
          %s270 = smul.addr %s269, 8
          %s271 = scalar_lea.vmem [#allocation2], %s270
          %s272 = scalar_lea.sflag [#allocation4], %s261
          // Predicated region
          $region57: #{tpu_custom_call.1} parent=55 // pred_check
            _
          $region58: #{tpu_custom_call.1} parent=55 // pred_check_branch
            %274 = sbr.rel target = $region60
          $region59: #{tpu_custom_call.1} parent=55 // pred_region
            %275 = sst [smem:[#allocation13]] [#allocation16]
            %276 = sst [smem:[#allocation14]] [#allocation15]
          $region60: #{tpu_custom_call.1} parent=55 // pred_fallthru
            _
          %278 = shalt.err (0)
          %s280 = sshll.u32 %s271, 4
          %s281 = int_to_ptr.vmem [resolvable:$true] %s280
          %283 = dma.hbm_to_vmem [thread:$0]  %s268, 384, %s281, %s272
        $region56: #{tpu_custom_call.1} parent=35 // pred_fallthru
          _
        %p284 = scmp.lt.s32.totalorder %s26, 0
        %s285 = ssub.s32 0, %s26
        %s286 = scalar_select %p284, %s285, %s26
        %s287 = sand.u32 %s286, 1
        %s288 = ssub.s32 0, %s287
        %s289 = scalar_select %p284, %s288, %s287
        %p290 = scmp.ne.s32.totalorder %s289, 0
        %p291 = scmp.lt.s32.totalorder %s289, 0
        %p292 = pnand %p291, %p290
        %p293 = pneg %p292
        %s294 = sadd.s32 %s289, 2
        %s295 = scalar_select %p293, %s294, %s289
        %s296 = smul.u32 %s26, 16
        %s297 = smul.u32 %s295, 3
        %s298 = smul.addr %s297, 8
        %s299 = scalar_lea.vmem [#allocation2], %s298
        %s300 = scalar_lea.sflag [#allocation4], %s295
        %s301 = smul.u32 4, 6
        %s302 = smul.u32 %s301, 1
        %s303 = sshll.u32 %s302, 4
        %304 = dma.done %s300, %s303
        %v305 = vld [vmem:[%s299] sm:$0xfe]
        %v306 = vld [vmem:[%s299 + $0x8] sm:$0xff]
        %v307 = vld [vmem:[#allocation5] sm:$0xf]
        %v308 = vld [vmem:[#allocation5 + $0x4] sm:$0xf]
        %v309 = vld [vmem:[#allocation5 + $0x8] sm:$0xf]
        %v310 = vld [vmem:[#allocation5 + $0xc] sm:$0xf]
        %v311 = vld [vmem:[#allocation5 + $0x10] sm:$0xf]
        %v312 = vld [vmem:[#allocation5 + $0x14] sm:$0xf]
        %v313 = vld [vmem:[#allocation5 + $0x18] sm:$0xf]
        %v314 = vld [vmem:[#allocation5 + $0x1c] sm:$0xf]
        %v315 = vld [vmem:[#allocation5 + $0x20] sm:$0xf]
        %v316 = vld [vmem:[#allocation5 + $0x24] sm:$0xf]
        %v317 = vld [vmem:[#allocation5 + $0x28] sm:$0xf]
        %v318 = vld [vmem:[#allocation5 + $0x2c] sm:$0xf]
        %v319 = vld [vmem:[#allocation5 + $0x30] sm:$0xf]
        %v320 = vld [vmem:[#allocation5 + $0x34] sm:$0xf]
        %v321 = vld [vmem:[#allocation5 + $0x38] sm:$0xf]
        %v322 = vld [vmem:[#allocation5 + $0x3c] sm:$0xf]
        %v323 = vld [vmem:[%s299] sm:$0xfe]
        %v324 = vld [vmem:[%s299 + $0x8] sm:$0xff]
        %v325 = vld [vmem:[%s299 + $0x10] sm:$0x1]
        %v326 = vld [vmem:[#allocation5 + $0x40] sm:$0xf]
        %v327 = vld [vmem:[#allocation5 + $0x44] sm:$0xf]
        %v328 = vld [vmem:[#allocation5 + $0x48] sm:$0xf]
        %v329 = vld [vmem:[#allocation5 + $0x4c] sm:$0xf]
        %v330 = vld [vmem:[#allocation5 + $0x50] sm:$0xf]
        %v331 = vld [vmem:[#allocation5 + $0x54] sm:$0xf]
        %v332 = vld [vmem:[#allocation5 + $0x58] sm:$0xf]
        %v333 = vld [vmem:[#allocation5 + $0x5c] sm:$0xf]
        %v334 = vld [vmem:[#allocation5 + $0x60] sm:$0xf]
        %v335 = vld [vmem:[#allocation5 + $0x64] sm:$0xf]
        %v336 = vld [vmem:[#allocation5 + $0x68] sm:$0xf]
        %v337 = vld [vmem:[#allocation5 + $0x6c] sm:$0xf]
        %v338 = vld [vmem:[#allocation5 + $0x70] sm:$0xf]
        %v339 = vld [vmem:[#allocation5 + $0x74] sm:$0xf]
        %v340 = vld [vmem:[#allocation5 + $0x78] sm:$0xf]
        %v341 = vld [vmem:[#allocation5 + $0x7c] sm:$0xf]
        %vm342 = vsmask.f32 6400
        %v344 = vshrl.u32 %v323, 16
        %v346 = vrot.slane %v344, 1
        %v347 = vshll.u32 %v323, 16
        %v349 = vrot.slane %v347, 2
        %v350 = vor.u32 %v346, %v349
        %v352 = vshrl.u32 %v324, 16
        %v354 = vrot.slane %v352, 1
        %v355 = vshll.u32 %v324, 16
        %v357 = vrot.slane %v355, 2
        %v358 = vor.u32 %v354, %v357
        %v359 = vsel %vm342, %v350, %v358
        %v361 = vshll.u32 %v325, 16
        %v363 = vrot.slane %v361, 2
        %v364 = vsel %vm342, %v358, %v363
        %v383 = vunpack.c.l.b16 %v326
        %v384 = vunpack.c.l.b16 %v327
        %v385 = vunpack.c.l.b16 %v328
        %v386 = vunpack.c.l.b16 %v329
        %v387 = vunpack.c.l.b16 %v330
        %v388 = vunpack.c.l.b16 %v331
        %v389 = vunpack.c.l.b16 %v332
        %v390 = vunpack.c.l.b16 %v333
        %v391 = vunpack.c.l.b16 %v334
        %v392 = vunpack.c.l.b16 %v335
        %v393 = vunpack.c.l.b16 %v336
        %v394 = vunpack.c.l.b16 %v337
        %v395 = vunpack.c.l.b16 %v338
        %v396 = vunpack.c.l.b16 %v339
        %v397 = vunpack.c.l.b16 %v340
        %v398 = vunpack.c.l.b16 %v341
        %v399 = vpack.c.b16 %v384, %v383
        %v400 = vpack.c.b16 %v386, %v385
        %v401 = vpack.c.b16 %v388, %v387
        %v402 = vpack.c.b16 %v390, %v389
        %v403 = vpack.c.b16 %v392, %v391
        %v404 = vpack.c.b16 %v394, %v393
        %v405 = vpack.c.b16 %v396, %v395
        %v406 = vpack.c.b16 %v398, %v397
        %415 = vmatprep.subr.bf16.mxu0 0
        %416 = vmatpush1.bf16.msra.mxu0 %v399
        %417 = vmatprep.subr.bf16.mxu0 0
        %418 = vmatpush1.bf16.msra.mxu0 %v400
        %419 = vmatprep.subr.bf16.mxu0 0
        %420 = vmatpush1.bf16.msra.mxu0 %v401
        %421 = vmatprep.subr.bf16.mxu0 0
        %422 = vmatpush1.bf16.msra.mxu0 %v402
        %423 = vmatprep.subr.bf16.mxu0 0
        %424 = vmatpush1.bf16.msra.mxu0 %v403
        %425 = vmatprep.subr.bf16.mxu0 0
        %426 = vmatpush1.bf16.msra.mxu0 %v404
        %427 = vmatprep.subr.bf16.mxu0 0
        %428 = vmatpush1.bf16.msra.mxu0 %v405
        %429 = vmatprep.subr.bf16.mxu0 0
        %430 = vmatpush1.bf16.msra.mxu0 %v406
        %431 = vmatprep.subr.bf16.mxu0 0
        %432 = vmatpush1.bf16.msra.mxu0 0
        %433 = vmatprep.subr.bf16.mxu0 0
        %434 = vmatpush1.bf16.msra.mxu0 0
        %435 = vmatprep.subr.bf16.mxu0 0
        %436 = vmatpush1.bf16.msra.mxu0 0
        %437 = vmatprep.subr.bf16.mxu0 0
        %438 = vmatpush1.bf16.msra.mxu0 0
        %439 = vmatprep.subr.bf16.mxu0 0
        %440 = vmatpush1.bf16.msra.mxu0 0
        %441 = vmatprep.subr.bf16.mxu0 0
        %442 = vmatpush1.bf16.msra.mxu0 0
        %443 = vmatprep.subr.bf16.mxu0 0
        %444 = vmatpush1.bf16.msra.mxu0 0
        %445 = vmatprep.subr.bf16.mxu0 0
        %446 = vmatpush1.bf16.msra.mxu0 0
        %447 = vmatprep.mubr.bf16.mxu0 0
        %448 = vmatmul.mubr.bf16.gmra.mrb[0].mxu0 %v359
        %v449 = vpop.f32.mrb[0].mxu0
        %v450 = vadd.f32 0.0, %v449
        %v451 = vpop.f32.mrb[0].mxu0
        %v452 = vpop.f32.mrb[0].mxu0
        %v453 = vadd.f32 0.0, %v452
        %v454 = vpop.f32.mrb[0].mxu0
        %455 = vmatprep.mubr.bf16.mxu0 0
        %456 = vmatmul.mubr.bf16.gmra.mrb[0].mxu0 %v364
        %v457 = vpop.f32.mrb[0].mxu0
        %v458 = vadd.f32 0.0, %v457
        %v459 = vpop.f32.mrb[0].mxu0
        %v460 = vpop.f32.mrb[0].mxu0
        %v461 = vadd.f32 0.0, %v460
        %v462 = vpop.f32.mrb[0].mxu0
        %463 = vdwg.mxu0
        %vm466 = vcmask 1046528
        %v467 = vrot.slane %v305, 1
        %v468 = vrot.slane %v306, 1
        %v469 = vsel %vm466, %v467, %v468
        %v488 = vunpack.c.l.b16 %v307
        %v489 = vunpack.c.l.b16 %v308
        %v490 = vunpack.c.l.b16 %v309
        %v491 = vunpack.c.l.b16 %v310
        %v492 = vunpack.c.l.b16 %v311
        %v493 = vunpack.c.l.b16 %v312
        %v494 = vunpack.c.l.b16 %v313
        %v495 = vunpack.c.l.b16 %v314
        %v496 = vunpack.c.l.b16 %v315
        %v497 = vunpack.c.l.b16 %v316
        %v498 = vunpack.c.l.b16 %v317
        %v499 = vunpack.c.l.b16 %v318
        %v500 = vunpack.c.l.b16 %v319
        %v501 = vunpack.c.l.b16 %v320
        %v502 = vunpack.c.l.b16 %v321
        %v503 = vunpack.c.l.b16 %v322
        %v504 = vpack.c.b16 %v489, %v488
        %v505 = vpack.c.b16 %v491, %v490
        %v506 = vpack.c.b16 %v493, %v492
        %v507 = vpack.c.b16 %v495, %v494
        %v508 = vpack.c.b16 %v497, %v496
        %v509 = vpack.c.b16 %v499, %v498
        %v510 = vpack.c.b16 %v501, %v500
        %v511 = vpack.c.b16 %v503, %v502
        %520 = vmatprep.subr.bf16.mxu0 0
        %521 = vmatpush1.bf16.msra.mxu0 %v504
        %522 = vmatprep.subr.bf16.mxu0 0
        %523 = vmatpush1.bf16.msra.mxu0 %v505
        %524 = vmatprep.subr.bf16.mxu0 0
        %525 = vmatpush1.bf16.msra.mxu0 %v506
        %526 = vmatprep.subr.bf16.mxu0 0
        %527 = vmatpush1.bf16.msra.mxu0 %v507
        %528 = vmatprep.subr.bf16.mxu0 0
        %529 = vmatpush1.bf16.msra.mxu0 %v508
        %530 = vmatprep.subr.bf16.mxu0 0
        %531 = vmatpush1.bf16.msra.mxu0 %v509
        %532 = vmatprep.subr.bf16.mxu0 0
        %533 = vmatpush1.bf16.msra.mxu0 %v510
        %534 = vmatprep.subr.bf16.mxu0 0
        %535 = vmatpush1.bf16.msra.mxu0 %v511
        %536 = vmatprep.subr.bf16.mxu0 0
        %537 = vmatpush1.bf16.msra.mxu0 0
        %538 = vmatprep.subr.bf16.mxu0 0
        %539 = vmatpush1.bf16.msra.mxu0 0
        %540 = vmatprep.subr.bf16.mxu0 0
        %541 = vmatpush1.bf16.msra.mxu0 0
        %542 = vmatprep.subr.bf16.mxu0 0
        %543 = vmatpush1.bf16.msra.mxu0 0
        %544 = vmatprep.subr.bf16.mxu0 0
        %545 = vmatpush1.bf16.msra.mxu0 0
        %546 = vmatprep.subr.bf16.mxu0 0
        %547 = vmatpush1.bf16.msra.mxu0 0
        %548 = vmatprep.subr.bf16.mxu0 0
        %549 = vmatpush1.bf16.msra.mxu0 0
        %550 = vmatprep.subr.bf16.mxu0 0
        %551 = vmatpush1.bf16.msra.mxu0 0
        %552 = vmatprep.mubr.bf16.mxu0 0
        %553 = vmatmul.mubr.bf16.gmra.mrb[0].mxu0 %v469
        %v554 = vpop.f32.mrb[0].mxu0
        %v555 = vadd.f32 %v450, %v554
        %v556 = vpop.f32.mrb[0].mxu0
        %v557 = vpop.f32.mrb[0].mxu0
        %v558 = vadd.f32 %v453, %v557
        %v559 = vpop.f32.mrb[0].mxu0
        %560 = vmatprep.mubr.bf16.mxu0 0
        %561 = vmatmul.mubr.bf16.gmra.mrb[0].mxu0 %v468
        %v562 = vpop.f32.mrb[0].mxu0
        %v563 = vadd.f32 %v458, %v562
        %v564 = vpop.f32.mrb[0].mxu0
        %v565 = vpop.f32.mrb[0].mxu0
        %v566 = vadd.f32 %v461, %v565
        %v567 = vpop.f32.mrb[0].mxu0
        %568 = vdwg.mxu0
        %v569 = vld [vmem:[%s299] sm:$0xfc]
        %v570 = vld [vmem:[#allocation5 + $0x80] sm:$0xf]
        %v571 = vld [vmem:[#allocation5 + $0x84] sm:$0xf]
        %v572 = vld [vmem:[#allocation5 + $0x88] sm:$0xf]
        %v573 = vld [vmem:[#allocation5 + $0x8c] sm:$0xf]
        %v574 = vld [vmem:[#allocation5 + $0x90] sm:$0xf]
        %v575 = vld [vmem:[#allocation5 + $0x94] sm:$0xf]
        %v576 = vld [vmem:[#allocation5 + $0x98] sm:$0xf]
        %v577 = vld [vmem:[#allocation5 + $0x9c] sm:$0xf]
        %v578 = vld [vmem:[#allocation5 + $0xa0] sm:$0xf]
        %v579 = vld [vmem:[#allocation5 + $0xa4] sm:$0xf]
        %v580 = vld [vmem:[#allocation5 + $0xa8] sm:$0xf]
        %v581 = vld [vmem:[#allocation5 + $0xac] sm:$0xf]
        %v582 = vld [vmem:[#allocation5 + $0xb0] sm:$0xf]
        %v583 = vld [vmem:[#allocation5 + $0xb4] sm:$0xf]
        %v584 = vld [vmem:[#allocation5 + $0xb8] sm:$0xf]
        %v585 = vld [vmem:[#allocation5 + $0xbc] sm:$0xf]
        %vm589 = vcmask 1045504
        %v590 = vrot.slane %v569, 2
        %v591 = vrot.slane %v324, 2
        %v592 = vsel %vm589, %v590, %v591
        %v593 = vrot.slane %v325, 2
        %v594 = vsel %vm589, %v591, %v593
        %v613 = vunpack.c.l.b16 %v570
        %v614 = vunpack.c.l.b16 %v571
        %v615 = vunpack.c.l.b16 %v572
        %v616 = vunpack.c.l.b16 %v573
        %v617 = vunpack.c.l.b16 %v574
        %v618 = vunpack.c.l.b16 %v575
        %v619 = vunpack.c.l.b16 %v576
        %v620 = vunpack.c.l.b16 %v577
        %v621 = vunpack.c.l.b16 %v578
        %v622 = vunpack.c.l.b16 %v579
        %v623 = vunpack.c.l.b16 %v580
        %v624 = vunpack.c.l.b16 %v581
        %v625 = vunpack.c.l.b16 %v582
        %v626 = vunpack.c.l.b16 %v583
        %v627 = vunpack.c.l.b16 %v584
        %v628 = vunpack.c.l.b16 %v585
        %v629 = vpack.c.b16 %v614, %v613
        %v630 = vpack.c.b16 %v616, %v615
        %v631 = vpack.c.b16 %v618, %v617
        %v632 = vpack.c.b16 %v620, %v619
        %v633 = vpack.c.b16 %v622, %v621
        %v634 = vpack.c.b16 %v624, %v623
        %v635 = vpack.c.b16 %v626, %v625
        %v636 = vpack.c.b16 %v628, %v627
        %645 = vmatprep.subr.bf16.mxu0 0
        %646 = vmatpush1.bf16.msra.mxu0 %v629
        %647 = vmatprep.subr.bf16.mxu0 0
        %648 = vmatpush1.bf16.msra.mxu0 %v630
        %649 = vmatprep.subr.bf16.mxu0 0
        %650 = vmatpush1.bf16.msra.mxu0 %v631
        %651 = vmatprep.subr.bf16.mxu0 0
        %652 = vmatpush1.bf16.msra.mxu0 %v632
        %653 = vmatprep.subr.bf16.mxu0 0
        %654 = vmatpush1.bf16.msra.mxu0 %v633
        %655 = vmatprep.subr.bf16.mxu0 0
        %656 = vmatpush1.bf16.msra.mxu0 %v634
        %657 = vmatprep.subr.bf16.mxu0 0
        %658 = vmatpush1.bf16.msra.mxu0 %v635
        %659 = vmatprep.subr.bf16.mxu0 0
        %660 = vmatpush1.bf16.msra.mxu0 %v636
        %661 = vmatprep.subr.bf16.mxu0 0
        %662 = vmatpush1.bf16.msra.mxu0 0
        %663 = vmatprep.subr.bf16.mxu0 0
        %664 = vmatpush1.bf16.msra.mxu0 0
        %665 = vmatprep.subr.bf16.mxu0 0
        %666 = vmatpush1.bf16.msra.mxu0 0
        %667 = vmatprep.subr.bf16.mxu0 0
        %668 = vmatpush1.bf16.msra.mxu0 0
        %669 = vmatprep.subr.bf16.mxu0 0
        %670 = vmatpush1.bf16.msra.mxu0 0
        %671 = vmatprep.subr.bf16.mxu0 0
        %672 = vmatpush1.bf16.msra.mxu0 0
        %673 = vmatprep.subr.bf16.mxu0 0
        %674 = vmatpush1.bf16.msra.mxu0 0
        %675 = vmatprep.subr.bf16.mxu0 0
        %676 = vmatpush1.bf16.msra.mxu0 0
        %677 = vmatprep.mubr.bf16.mxu0 0
        %678 = vmatmul.mubr.bf16.gmra.mrb[0].mxu0 %v592
        %v679 = vpop.f32.mrb[0].mxu0
        %v680 = vadd.f32 0.0, %v679
        %v681 = vpop.f32.mrb[0].mxu0
        %v682 = vpop.f32.mrb[0].mxu0
        %v683 = vadd.f32 0.0, %v682
        %v684 = vpop.f32.mrb[0].mxu0
        %685 = vmatprep.mubr.bf16.mxu0 0
        %686 = vmatmul.mubr.bf16.gmra.mrb[0].mxu0 %v594
        %v687 = vpop.f32.mrb[0].mxu0
        %v688 = vadd.f32 0.0, %v687
        %v689 = vpop.f32.mrb[0].mxu0
        %v690 = vpop.f32.mrb[0].mxu0
        %v691 = vadd.f32 0.0, %v690
        %v692 = vpop.f32.mrb[0].mxu0
        %693 = vdwg.mxu0
        %v694 = vadd.f32 %v555, %v680
        %v695 = vadd.f32 %v558, %v683
        %v696 = vadd.f32 %v563, %v688
        %v697 = vadd.f32 %v566, %v691
        %v698 = vld [vmem:[%s299 + $0x10] sm:$0x3]
        %v699 = vld [vmem:[#allocation5 + $0xc0] sm:$0xf]
        %v700 = vld [vmem:[#allocation5 + $0xc4] sm:$0xf]
        %v701 = vld [vmem:[#allocation5 + $0xc8] sm:$0xf]
        %v702 = vld [vmem:[#allocation5 + $0xcc] sm:$0xf]
        %v703 = vld [vmem:[#allocation5 + $0xd0] sm:$0xf]
        %v704 = vld [vmem:[#allocation5 + $0xd4] sm:$0xf]
        %v705 = vld [vmem:[#allocation5 + $0xd8] sm:$0xf]
        %v706 = vld [vmem:[#allocation5 + $0xdc] sm:$0xf]
        %v707 = vld [vmem:[#allocation5 + $0xe0] sm:$0xf]
        %v708 = vld [vmem:[#allocation5 + $0xe4] sm:$0xf]
        %v709 = vld [vmem:[#allocation5 + $0xe8] sm:$0xf]
        %v710 = vld [vmem:[#allocation5 + $0xec] sm:$0xf]
        %v711 = vld [vmem:[#allocation5 + $0xf0] sm:$0xf]
        %v712 = vld [vmem:[#allocation5 + $0xf4] sm:$0xf]
        %v713 = vld [vmem:[#allocation5 + $0xf8] sm:$0xf]
        %v714 = vld [vmem:[#allocation5 + $0xfc] sm:$0xf]
        %vm715 = vsmask.f32 5376
        %v717 = vshrl.u32 %v569, 16
        %v719 = vrot.slane %v717, 2
        %v720 = vshll.u32 %v569, 16
        %v722 = vrot.slane %v720, 3
        %v723 = vor.u32 %v719, %v722
        %v724 = vrot.slane %v352, 2
        %v725 = vrot.slane %v355, 3
        %v726 = vor.u32 %v724, %v725
        %v727 = vsel %vm715, %v723, %v726
        %v729 = vshrl.u32 %v698, 16
        %v731 = vrot.slane %v729, 2
        %v732 = vshll.u32 %v698, 16
        %v734 = vrot.slane %v732, 3
        %v735 = vor.u32 %v731, %v734
        %v736 = vsel %vm715, %v726, %v735
        %v755 = vunpack.c.l.b16 %v699
        %v756 = vunpack.c.l.b16 %v700
        %v757 = vunpack.c.l.b16 %v701
        %v758 = vunpack.c.l.b16 %v702
        %v759 = vunpack.c.l.b16 %v703
        %v760 = vunpack.c.l.b16 %v704
        %v761 = vunpack.c.l.b16 %v705
        %v762 = vunpack.c.l.b16 %v706
        %v763 = vunpack.c.l.b16 %v707
        %v764 = vunpack.c.l.b16 %v708
        %v765 = vunpack.c.l.b16 %v709
        %v766 = vunpack.c.l.b16 %v710
        %v767 = vunpack.c.l.b16 %v711
        %v768 = vunpack.c.l.b16 %v712
        %v769 = vunpack.c.l.b16 %v713
        %v770 = vunpack.c.l.b16 %v714
        %v771 = vpack.c.b16 %v756, %v755
        %v772 = vpack.c.b16 %v758, %v757
        %v773 = vpack.c.b16 %v760, %v759
        %v774 = vpack.c.b16 %v762, %v761
        %v775 = vpack.c.b16 %v764, %v763
        %v776 = vpack.c.b16 %v766, %v765
        %v777 = vpack.c.b16 %v768, %v767
        %v778 = vpack.c.b16 %v770, %v769
        %787 = vmatprep.subr.bf16.mxu0 0
        %788 = vmatpush1.bf16.msra.mxu0 %v771
        %789 = vmatprep.subr.bf16.mxu0 0
        %790 = vmatpush1.bf16.msra.mxu0 %v772
        %791 = vmatprep.subr.bf16.mxu0 0
        %792 = vmatpush1.bf16.msra.mxu0 %v773
        %793 = vmatprep.subr.bf16.mxu0 0
        %794 = vmatpush1.bf16.msra.mxu0 %v774
        %795 = vmatprep.subr.bf16.mxu0 0
        %796 = vmatpush1.bf16.msra.mxu0 %v775
        %797 = vmatprep.subr.bf16.mxu0 0
        %798 = vmatpush1.bf16.msra.mxu0 %v776
        %799 = vmatprep.subr.bf16.mxu0 0
        %800 = vmatpush1.bf16.msra.mxu0 %v777
        %801 = vmatprep.subr.bf16.mxu0 0
        %802 = vmatpush1.bf16.msra.mxu0 %v778
        %803 = vmatprep.subr.bf16.mxu0 0
        %804 = vmatpush1.bf16.msra.mxu0 0
        %805 = vmatprep.subr.bf16.mxu0 0
        %806 = vmatpush1.bf16.msra.mxu0 0
        %807 = vmatprep.subr.bf16.mxu0 0
        %808 = vmatpush1.bf16.msra.mxu0 0
        %809 = vmatprep.subr.bf16.mxu0 0
        %810 = vmatpush1.bf16.msra.mxu0 0
        %811 = vmatprep.subr.bf16.mxu0 0
        %812 = vmatpush1.bf16.msra.mxu0 0
        %813 = vmatprep.subr.bf16.mxu0 0
        %814 = vmatpush1.bf16.msra.mxu0 0
        %815 = vmatprep.subr.bf16.mxu0 0
        %816 = vmatpush1.bf16.msra.mxu0 0
        %817 = vmatprep.subr.bf16.mxu0 0
        %818 = vmatpush1.bf16.msra.mxu0 0
        %819 = vmatprep.mubr.bf16.mxu0 0
        %820 = vmatmul.mubr.bf16.gmra.mrb[0].mxu0 %v727
        %v821 = vpop.f32.mrb[0].mxu0
        %v822 = vadd.f32 0.0, %v821
        %v823 = vpop.f32.mrb[0].mxu0
        %v824 = vpop.f32.mrb[0].mxu0
        %v825 = vadd.f32 0.0, %v824
        %v826 = vpop.f32.mrb[0].mxu0
        %827 = vmatprep.mubr.bf16.mxu0 0
        %828 = vmatmul.mubr.bf16.gmra.mrb[0].mxu0 %v736
        %v829 = vpop.f32.mrb[0].mxu0
        %v830 = vadd.f32 0.0, %v829
        %v831 = vpop.f32.mrb[0].mxu0
        %v832 = vpop.f32.mrb[0].mxu0
        %v833 = vadd.f32 0.0, %v832
        %v834 = vpop.f32.mrb[0].mxu0
        %835 = vdwg.mxu0
        %v836 = vadd.f32 %v694, %v822
        %v837 = vadd.f32 %v695, %v825
        %v838 = vadd.f32 %v696, %v830
        %v839 = vadd.f32 %v697, %v833
        %v840 = vld [vmem:[%s299] sm:$0xf8]
        %v841 = vld [vmem:[#allocation5 + $0x100] sm:$0xf]
        %v842 = vld [vmem:[#allocation5 + $0x104] sm:$0xf]
        %v843 = vld [vmem:[#allocation5 + $0x108] sm:$0xf]
        %v844 = vld [vmem:[#allocation5 + $0x10c] sm:$0xf]
        %v845 = vld [vmem:[#allocation5 + $0x110] sm:$0xf]
        %v846 = vld [vmem:[#allocation5 + $0x114] sm:$0xf]
        %v847 = vld [vmem:[#allocation5 + $0x118] sm:$0xf]
        %v848 = vld [vmem:[#allocation5 + $0x11c] sm:$0xf]
        %v849 = vld [vmem:[#allocation5 + $0x120] sm:$0xf]
        %v850 = vld [vmem:[#allocation5 + $0x124] sm:$0xf]
        %v851 = vld [vmem:[#allocation5 + $0x128] sm:$0xf]
        %v852 = vld [vmem:[#allocation5 + $0x12c] sm:$0xf]
        %v853 = vld [vmem:[#allocation5 + $0x130] sm:$0xf]
        %v854 = vld [vmem:[#allocation5 + $0x134] sm:$0xf]
        %v855 = vld [vmem:[#allocation5 + $0x138] sm:$0xf]
        %v856 = vld [vmem:[#allocation5 + $0x13c] sm:$0xf]
        %vm859 = vcmask 1044480
        %v860 = vrot.slane %v840, 3
        %v861 = vrot.slane %v324, 3
        %v862 = vsel %vm859, %v860, %v861
        %v863 = vrot.slane %v698, 3
        %v864 = vsel %vm859, %v861, %v863
        %v883 = vunpack.c.l.b16 %v841
        %v884 = vunpack.c.l.b16 %v842
        %v885 = vunpack.c.l.b16 %v843
        %v886 = vunpack.c.l.b16 %v844
        %v887 = vunpack.c.l.b16 %v845
        %v888 = vunpack.c.l.b16 %v846
        %v889 = vunpack.c.l.b16 %v847
        %v890 = vunpack.c.l.b16 %v848
        %v891 = vunpack.c.l.b16 %v849
        %v892 = vunpack.c.l.b16 %v850
        %v893 = vunpack.c.l.b16 %v851
        %v894 = vunpack.c.l.b16 %v852
        %v895 = vunpack.c.l.b16 %v853
        %v896 = vunpack.c.l.b16 %v854
        %v897 = vunpack.c.l.b16 %v855
        %v898 = vunpack.c.l.b16 %v856
        %v899 = vpack.c.b16 %v884, %v883
        %v900 = vpack.c.b16 %v886, %v885
        %v901 = vpack.c.b16 %v888, %v887
        %v902 = vpack.c.b16 %v890, %v889
        %v903 = vpack.c.b16 %v892, %v891
        %v904 = vpack.c.b16 %v894, %v893
        %v905 = vpack.c.b16 %v896, %v895
        %v906 = vpack.c.b16 %v898, %v897
        %915 = vmatprep.subr.bf16.mxu0 0
        %916 = vmatpush1.bf16.msra.mxu0 %v899
        %917 = vmatprep.subr.bf16.mxu0 0
        %918 = vmatpush1.bf16.msra.mxu0 %v900
        %919 = vmatprep.subr.bf16.mxu0 0
        %920 = vmatpush1.bf16.msra.mxu0 %v901
        %921 = vmatprep.subr.bf16.mxu0 0
        %922 = vmatpush1.bf16.msra.mxu0 %v902
        %923 = vmatprep.subr.bf16.mxu0 0
        %924 = vmatpush1.bf16.msra.mxu0 %v903
        %925 = vmatprep.subr.bf16.mxu0 0
        %926 = vmatpush1.bf16.msra.mxu0 %v904
        %927 = vmatprep.subr.bf16.mxu0 0
        %928 = vmatpush1.bf16.msra.mxu0 %v905
        %929 = vmatprep.subr.bf16.mxu0 0
        %930 = vmatpush1.bf16.msra.mxu0 %v906
        %931 = vmatprep.subr.bf16.mxu0 0
        %932 = vmatpush1.bf16.msra.mxu0 0
        %933 = vmatprep.subr.bf16.mxu0 0
        %934 = vmatpush1.bf16.msra.mxu0 0
        %935 = vmatprep.subr.bf16.mxu0 0
        %936 = vmatpush1.bf16.msra.mxu0 0
        %937 = vmatprep.subr.bf16.mxu0 0
        %938 = vmatpush1.bf16.msra.mxu0 0
        %939 = vmatprep.subr.bf16.mxu0 0
        %940 = vmatpush1.bf16.msra.mxu0 0
        %941 = vmatprep.subr.bf16.mxu0 0
        %942 = vmatpush1.bf16.msra.mxu0 0
        %943 = vmatprep.subr.bf16.mxu0 0
        %944 = vmatpush1.bf16.msra.mxu0 0
        %945 = vmatprep.subr.bf16.mxu0 0
        %946 = vmatpush1.bf16.msra.mxu0 0
        %947 = vmatprep.mubr.bf16.mxu0 0
        %948 = vmatmul.mubr.bf16.gmra.mrb[0].mxu0 %v862
        %v949 = vpop.f32.mrb[0].mxu0
        %v950 = vadd.f32 0.0, %v949
        %v951 = vpop.f32.mrb[0].mxu0
        %v952 = vpop.f32.mrb[0].mxu0
        %v953 = vadd.f32 0.0, %v952
        %v954 = vpop.f32.mrb[0].mxu0
        %955 = vmatprep.mubr.bf16.mxu0 0
        %956 = vmatmul.mubr.bf16.gmra.mrb[0].mxu0 %v864
        %v957 = vpop.f32.mrb[0].mxu0
        %v958 = vadd.f32 0.0, %v957
        %v959 = vpop.f32.mrb[0].mxu0
        %v960 = vpop.f32.mrb[0].mxu0
        %v961 = vadd.f32 0.0, %v960
        %v962 = vpop.f32.mrb[0].mxu0
        %963 = vdwg.mxu0
        %v964 = vadd.f32 %v836, %v950
        %v965 = vadd.f32 %v837, %v953
        %v966 = vadd.f32 %v838, %v958
        %v967 = vadd.f32 %v839, %v961
        %v968 = vld [vmem:[%s299 + $0x10] sm:$0x7]
        %v969 = vld [vmem:[#allocation5 + $0x140] sm:$0xf]
        %v970 = vld [vmem:[#allocation5 + $0x144] sm:$0xf]
        %v971 = vld [vmem:[#allocation5 + $0x148] sm:$0xf]
        %v972 = vld [vmem:[#allocation5 + $0x14c] sm:$0xf]
        %v973 = vld [vmem:[#allocation5 + $0x150] sm:$0xf]
        %v974 = vld [vmem:[#allocation5 + $0x154] sm:$0xf]
        %v975 = vld [vmem:[#allocation5 + $0x158] sm:$0xf]
        %v976 = vld [vmem:[#allocation5 + $0x15c] sm:$0xf]
        %v977 = vld [vmem:[#allocation5 + $0x160] sm:$0xf]
        %v978 = vld [vmem:[#allocation5 + $0x164] sm:$0xf]
        %v979 = vld [vmem:[#allocation5 + $0x168] sm:$0xf]
        %v980 = vld [vmem:[#allocation5 + $0x16c] sm:$0xf]
        %v981 = vld [vmem:[#allocation5 + $0x170] sm:$0xf]
        %v982 = vld [vmem:[#allocation5 + $0x174] sm:$0xf]
        %v983 = vld [vmem:[#allocation5 + $0x178] sm:$0xf]
        %v984 = vld [vmem:[#allocation5 + $0x17c] sm:$0xf]
        %vm985 = vsmask.f32 4352
        %v987 = vshrl.u32 %v840, 16
        %v989 = vrot.slane %v987, 3
        %v990 = vshll.u32 %v840, 16
        %v992 = vrot.slane %v990, 4
        %v993 = vor.u32 %v989, %v992
        %v994 = vrot.slane %v352, 3
        %v995 = vrot.slane %v355, 4
        %v996 = vor.u32 %v994, %v995
        %v997 = vsel %vm985, %v993, %v996
        %v999 = vshrl.u32 %v968, 16
        %v1001 = vrot.slane %v999, 3
        %v1002 = vshll.u32 %v968, 16
        %v1004 = vrot.slane %v1002, 4
        %v1005 = vor.u32 %v1001, %v1004
        %v1006 = vsel %vm985, %v996, %v1005
        %v1025 = vunpack.c.l.b16 %v969
        %v1026 = vunpack.c.l.b16 %v970
        %v1027 = vunpack.c.l.b16 %v971
        %v1028 = vunpack.c.l.b16 %v972
        %v1029 = vunpack.c.l.b16 %v973
        %v1030 = vunpack.c.l.b16 %v974
        %v1031 = vunpack.c.l.b16 %v975
        %v1032 = vunpack.c.l.b16 %v976
        %v1033 = vunpack.c.l.b16 %v977
        %v1034 = vunpack.c.l.b16 %v978
        %v1035 = vunpack.c.l.b16 %v979
        %v1036 = vunpack.c.l.b16 %v980
        %v1037 = vunpack.c.l.b16 %v981
        %v1038 = vunpack.c.l.b16 %v982
        %v1039 = vunpack.c.l.b16 %v983
        %v1040 = vunpack.c.l.b16 %v984
        %v1041 = vpack.c.b16 %v1026, %v1025
        %v1042 = vpack.c.b16 %v1028, %v1027
        %v1043 = vpack.c.b16 %v1030, %v1029
        %v1044 = vpack.c.b16 %v1032, %v1031
        %v1045 = vpack.c.b16 %v1034, %v1033
        %v1046 = vpack.c.b16 %v1036, %v1035
        %v1047 = vpack.c.b16 %v1038, %v1037
        %v1048 = vpack.c.b16 %v1040, %v1039
        %1057 = vmatprep.subr.bf16.mxu0 0
        %1058 = vmatpush1.bf16.msra.mxu0 %v1041
        %1059 = vmatprep.subr.bf16.mxu0 0
        %1060 = vmatpush1.bf16.msra.mxu0 %v1042
        %1061 = vmatprep.subr.bf16.mxu0 0
        %1062 = vmatpush1.bf16.msra.mxu0 %v1043
        %1063 = vmatprep.subr.bf16.mxu0 0
        %1064 = vmatpush1.bf16.msra.mxu0 %v1044
        %1065 = vmatprep.subr.bf16.mxu0 0
        %1066 = vmatpush1.bf16.msra.mxu0 %v1045
        %1067 = vmatprep.subr.bf16.mxu0 0
        %1068 = vmatpush1.bf16.msra.mxu0 %v1046
        %1069 = vmatprep.subr.bf16.mxu0 0
        %1070 = vmatpush1.bf16.msra.mxu0 %v1047
        %1071 = vmatprep.subr.bf16.mxu0 0
        %1072 = vmatpush1.bf16.msra.mxu0 %v1048
        %1073 = vmatprep.subr.bf16.mxu0 0
        %1074 = vmatpush1.bf16.msra.mxu0 0
        %1075 = vmatprep.subr.bf16.mxu0 0
        %1076 = vmatpush1.bf16.msra.mxu0 0
        %1077 = vmatprep.subr.bf16.mxu0 0
        %1078 = vmatpush1.bf16.msra.mxu0 0
        %1079 = vmatprep.subr.bf16.mxu0 0
        %1080 = vmatpush1.bf16.msra.mxu0 0
        %1081 = vmatprep.subr.bf16.mxu0 0
        %1082 = vmatpush1.bf16.msra.mxu0 0
        %1083 = vmatprep.subr.bf16.mxu0 0
        %1084 = vmatpush1.bf16.msra.mxu0 0
        %1085 = vmatprep.subr.bf16.mxu0 0
        %1086 = vmatpush1.bf16.msra.mxu0 0
        %1087 = vmatprep.subr.bf16.mxu0 0
        %1088 = vmatpush1.bf16.msra.mxu0 0
        %1089 = vmatprep.mubr.bf16.mxu0 0
        %1090 = vmatmul.mubr.bf16.gmra.mrb[0].mxu0 %v997
        %v1091 = vpop.f32.mrb[0].mxu0
        %v1092 = vadd.f32 0.0, %v1091
        %v1093 = vpop.f32.mrb[0].mxu0
        %v1094 = vpop.f32.mrb[0].mxu0
        %v1095 = vadd.f32 0.0, %v1094
        %v1096 = vpop.f32.mrb[0].mxu0
        %1097 = vmatprep.mubr.bf16.mxu0 0
        %1098 = vmatmul.mubr.bf16.gmra.mrb[0].mxu0 %v1006
        %v1099 = vpop.f32.mrb[0].mxu0
        %v1100 = vadd.f32 0.0, %v1099
        %v1101 = vpop.f32.mrb[0].mxu0
        %v1102 = vpop.f32.mrb[0].mxu0
        %v1103 = vadd.f32 0.0, %v1102
        %v1104 = vpop.f32.mrb[0].mxu0
        %1105 = vdwg.mxu0
        %v1106 = vadd.f32 %v964, %v1092
        %v1107 = vadd.f32 %v965, %v1095
        %v1108 = vadd.f32 %v966, %v1100
        %v1109 = vadd.f32 %v967, %v1103
        %v1110 = vld [vmem:[%s299] sm:$0xf0]
        %v1111 = vld [vmem:[#allocation5 + $0x180] sm:$0xf]
        %v1112 = vld [vmem:[#allocation5 + $0x184] sm:$0xf]
        %v1113 = vld [vmem:[#allocation5 + $0x188] sm:$0xf]
        %v1114 = vld [vmem:[#allocation5 + $0x18c] sm:$0xf]
        %v1115 = vld [vmem:[#allocation5 + $0x190] sm:$0xf]
        %v1116 = vld [vmem:[#allocation5 + $0x194] sm:$0xf]
        %v1117 = vld [vmem:[#allocation5 + $0x198] sm:$0xf]
        %v1118 = vld [vmem:[#allocation5 + $0x19c] sm:$0xf]
        %v1119 = vld [vmem:[#allocation5 + $0x1a0] sm:$0xf]
        %v1120 = vld [vmem:[#allocation5 + $0x1a4] sm:$0xf]
        %v1121 = vld [vmem:[#allocation5 + $0x1a8] sm:$0xf]
        %v1122 = vld [vmem:[#allocation5 + $0x1ac] sm:$0xf]
        %v1123 = vld [vmem:[#allocation5 + $0x1b0] sm:$0xf]
        %v1124 = vld [vmem:[#allocation5 + $0x1b4] sm:$0xf]
        %v1125 = vld [vmem:[#allocation5 + $0x1b8] sm:$0xf]
        %v1126 = vld [vmem:[#allocation5 + $0x1bc] sm:$0xf]
        %vm1129 = vcmask 1043456
        %v1130 = vrot.slane %v1110, 4
        %v1131 = vrot.slane %v324, 4
        %v1132 = vsel %vm1129, %v1130, %v1131
        %v1133 = vrot.slane %v968, 4
        %v1134 = vsel %vm1129, %v1131, %v1133
        %v1153 = vunpack.c.l.b16 %v1111
        %v1154 = vunpack.c.l.b16 %v1112
        %v1155 = vunpack.c.l.b16 %v1113
        %v1156 = vunpack.c.l.b16 %v1114
        %v1157 = vunpack.c.l.b16 %v1115
        %v1158 = vunpack.c.l.b16 %v1116
        %v1159 = vunpack.c.l.b16 %v1117
        %v1160 = vunpack.c.l.b16 %v1118
        %v1161 = vunpack.c.l.b16 %v1119
        %v1162 = vunpack.c.l.b16 %v1120
        %v1163 = vunpack.c.l.b16 %v1121
        %v1164 = vunpack.c.l.b16 %v1122
        %v1165 = vunpack.c.l.b16 %v1123
        %v1166 = vunpack.c.l.b16 %v1124
        %v1167 = vunpack.c.l.b16 %v1125
        %v1168 = vunpack.c.l.b16 %v1126
        %v1169 = vpack.c.b16 %v1154, %v1153
        %v1170 = vpack.c.b16 %v1156, %v1155
        %v1171 = vpack.c.b16 %v1158, %v1157
        %v1172 = vpack.c.b16 %v1160, %v1159
        %v1173 = vpack.c.b16 %v1162, %v1161
        %v1174 = vpack.c.b16 %v1164, %v1163
        %v1175 = vpack.c.b16 %v1166, %v1165
        %v1176 = vpack.c.b16 %v1168, %v1167
        %1185 = vmatprep.subr.bf16.mxu0 0
        %1186 = vmatpush1.bf16.msra.mxu0 %v1169
        %1187 = vmatprep.subr.bf16.mxu0 0
        %1188 = vmatpush1.bf16.msra.mxu0 %v1170
        %1189 = vmatprep.subr.bf16.mxu0 0
        %1190 = vmatpush1.bf16.msra.mxu0 %v1171
        %1191 = vmatprep.subr.bf16.mxu0 0
        %1192 = vmatpush1.bf16.msra.mxu0 %v1172
        %1193 = vmatprep.subr.bf16.mxu0 0
        %1194 = vmatpush1.bf16.msra.mxu0 %v1173
        %1195 = vmatprep.subr.bf16.mxu0 0
        %1196 = vmatpush1.bf16.msra.mxu0 %v1174
        %1197 = vmatprep.subr.bf16.mxu0 0
        %1198 = vmatpush1.bf16.msra.mxu0 %v1175
        %1199 = vmatprep.subr.bf16.mxu0 0
        %1200 = vmatpush1.bf16.msra.mxu0 %v1176
        %1201 = vmatprep.subr.bf16.mxu0 0
        %1202 = vmatpush1.bf16.msra.mxu0 0
        %1203 = vmatprep.subr.bf16.mxu0 0
        %1204 = vmatpush1.bf16.msra.mxu0 0
        %1205 = vmatprep.subr.bf16.mxu0 0
        %1206 = vmatpush1.bf16.msra.mxu0 0
        %1207 = vmatprep.subr.bf16.mxu0 0
        %1208 = vmatpush1.bf16.msra.mxu0 0
        %1209 = vmatprep.subr.bf16.mxu0 0
        %1210 = vmatpush1.bf16.msra.mxu0 0
        %1211 = vmatprep.subr.bf16.mxu0 0
        %1212 = vmatpush1.bf16.msra.mxu0 0
        %1213 = vmatprep.subr.bf16.mxu0 0
        %1214 = vmatpush1.bf16.msra.mxu0 0
        %1215 = vmatprep.subr.bf16.mxu0 0
        %1216 = vmatpush1.bf16.msra.mxu0 0
        %1217 = vmatprep.mubr.bf16.mxu0 0
        %1218 = vmatmul.mubr.bf16.gmra.mrb[0].mxu0 %v1132
        %v1219 = vpop.f32.mrb[0].mxu0
        %v1220 = vadd.f32 0.0, %v1219
        %v1221 = vpop.f32.mrb[0].mxu0
        %v1222 = vpop.f32.mrb[0].mxu0
        %v1223 = vadd.f32 0.0, %v1222
        %v1224 = vpop.f32.mrb[0].mxu0
        %1225 = vmatprep.mubr.bf16.mxu0 0
        %1226 = vmatmul.mubr.bf16.gmra.mrb[0].mxu0 %v1134
        %v1227 = vpop.f32.mrb[0].mxu0
        %v1228 = vadd.f32 0.0, %v1227
        %v1229 = vpop.f32.mrb[0].mxu0
        %v1230 = vpop.f32.mrb[0].mxu0
        %v1231 = vadd.f32 0.0, %v1230
        %v1232 = vpop.f32.mrb[0].mxu0
        %1233 = vdwg.mxu0
        %v1234 = vadd.f32 %v1106, %v1220
        %v1235 = vadd.f32 %v1107, %v1223
        %v1236 = vadd.f32 %v1108, %v1228
        %v1237 = vadd.f32 %v1109, %v1231
        %v1238 = vld [vmem:[%s299 + $0x10] sm:$0xf]
        %v1239 = vld [vmem:[#allocation5 + $0x1c0] sm:$0xf]
        %v1240 = vld [vmem:[#allocation5 + $0x1c4] sm:$0xf]
        %v1241 = vld [vmem:[#allocation5 + $0x1c8] sm:$0xf]
        %v1242 = vld [vmem:[#allocation5 + $0x1cc] sm:$0xf]
        %v1243 = vld [vmem:[#allocation5 + $0x1d0] sm:$0xf]
        %v1244 = vld [vmem:[#allocation5 + $0x1d4] sm:$0xf]
        %v1245 = vld [vmem:[#allocation5 + $0x1d8] sm:$0xf]
        %v1246 = vld [vmem:[#allocation5 + $0x1dc] sm:$0xf]
        %v1247 = vld [vmem:[#allocation5 + $0x1e0] sm:$0xf]
        %v1248 = vld [vmem:[#allocation5 + $0x1e4] sm:$0xf]
        %v1249 = vld [vmem:[#allocation5 + $0x1e8] sm:$0xf]
        %v1250 = vld [vmem:[#allocation5 + $0x1ec] sm:$0xf]
        %v1251 = vld [vmem:[#allocation5 + $0x1f0] sm:$0xf]
        %v1252 = vld [vmem:[#allocation5 + $0x1f4] sm:$0xf]
        %v1253 = vld [vmem:[#allocation5 + $0x1f8] sm:$0xf]
        %v1254 = vld [vmem:[#allocation5 + $0x1fc] sm:$0xf]
        %vm1255 = vsmask.f32 3328
        %v1257 = vshrl.u32 %v1110, 16
        %v1259 = vrot.slane %v1257, 4
        %v1260 = vshll.u32 %v1110, 16
        %v1262 = vrot.slane %v1260, 5
        %v1263 = vor.u32 %v1259, %v1262
        %v1264 = vrot.slane %v352, 4
        %v1265 = vrot.slane %v355, 5
        %v1266 = vor.u32 %v1264, %v1265
        %v1267 = vsel %vm1255, %v1263, %v1266
        %v1269 = vshrl.u32 %v1238, 16
        %v1271 = vrot.slane %v1269, 4
        %v1272 = vshll.u32 %v1238, 16
        %v1274 = vrot.slane %v1272, 5
        %v1275 = vor.u32 %v1271, %v1274
        %v1276 = vsel %vm1255, %v1266, %v1275
        %v1295 = vunpack.c.l.b16 %v1239
        %v1296 = vunpack.c.l.b16 %v1240
        %v1297 = vunpack.c.l.b16 %v1241
        %v1298 = vunpack.c.l.b16 %v1242
        %v1299 = vunpack.c.l.b16 %v1243
        %v1300 = vunpack.c.l.b16 %v1244
        %v1301 = vunpack.c.l.b16 %v1245
        %v1302 = vunpack.c.l.b16 %v1246
        %v1303 = vunpack.c.l.b16 %v1247
        %v1304 = vunpack.c.l.b16 %v1248
        %v1305 = vunpack.c.l.b16 %v1249
        %v1306 = vunpack.c.l.b16 %v1250
        %v1307 = vunpack.c.l.b16 %v1251
        %v1308 = vunpack.c.l.b16 %v1252
        %v1309 = vunpack.c.l.b16 %v1253
        %v1310 = vunpack.c.l.b16 %v1254
        %v1311 = vpack.c.b16 %v1296, %v1295
        %v1312 = vpack.c.b16 %v1298, %v1297
        %v1313 = vpack.c.b16 %v1300, %v1299
        %v1314 = vpack.c.b16 %v1302, %v1301
        %v1315 = vpack.c.b16 %v1304, %v1303
        %v1316 = vpack.c.b16 %v1306, %v1305
        %v1317 = vpack.c.b16 %v1308, %v1307
        %v1318 = vpack.c.b16 %v1310, %v1309
        %1327 = vmatprep.subr.bf16.mxu0 0
        %1328 = vmatpush1.bf16.msra.mxu0 %v1311
        %1329 = vmatprep.subr.bf16.mxu0 0
        %1330 = vmatpush1.bf16.msra.mxu0 %v1312
        %1331 = vmatprep.subr.bf16.mxu0 0
        %1332 = vmatpush1.bf16.msra.mxu0 %v1313
        %1333 = vmatprep.subr.bf16.mxu0 0
        %1334 = vmatpush1.bf16.msra.mxu0 %v1314
        %1335 = vmatprep.subr.bf16.mxu0 0
        %1336 = vmatpush1.bf16.msra.mxu0 %v1315
        %1337 = vmatprep.subr.bf16.mxu0 0
        %1338 = vmatpush1.bf16.msra.mxu0 %v1316
        %1339 = vmatprep.subr.bf16.mxu0 0
        %1340 = vmatpush1.bf16.msra.mxu0 %v1317
        %1341 = vmatprep.subr.bf16.mxu0 0
        %1342 = vmatpush1.bf16.msra.mxu0 %v1318
        %1343 = vmatprep.subr.bf16.mxu0 0
        %1344 = vmatpush1.bf16.msra.mxu0 0
        %1345 = vmatprep.subr.bf16.mxu0 0
        %1346 = vmatpush1.bf16.msra.mxu0 0
        %1347 = vmatprep.subr.bf16.mxu0 0
        %1348 = vmatpush1.bf16.msra.mxu0 0
        %1349 = vmatprep.subr.bf16.mxu0 0
        %1350 = vmatpush1.bf16.msra.mxu0 0
        %1351 = vmatprep.subr.bf16.mxu0 0
        %1352 = vmatpush1.bf16.msra.mxu0 0
        %1353 = vmatprep.subr.bf16.mxu0 0
        %1354 = vmatpush1.bf16.msra.mxu0 0
        %1355 = vmatprep.subr.bf16.mxu0 0
        %1356 = vmatpush1.bf16.msra.mxu0 0
        %1357 = vmatprep.subr.bf16.mxu0 0
        %1358 = vmatpush1.bf16.msra.mxu0 0
        %1359 = vmatprep.mubr.bf16.mxu0 0
        %1360 = vmatmul.mubr.bf16.gmra.mrb[0].mxu0 %v1267
        %v1361 = vpop.f32.mrb[0].mxu0
        %v1362 = vadd.f32 0.0, %v1361
        %v1363 = vpop.f32.mrb[0].mxu0
        %v1364 = vpop.f32.mrb[0].mxu0
        %v1365 = vadd.f32 0.0, %v1364
        %v1366 = vpop.f32.mrb[0].mxu0
        %1367 = vmatprep.mubr.bf16.mxu0 0
        %1368 = vmatmul.mubr.bf16.gmra.mrb[0].mxu0 %v1276
        %v1369 = vpop.f32.mrb[0].mxu0
        %v1370 = vadd.f32 0.0, %v1369
        %v1371 = vpop.f32.mrb[0].mxu0
        %v1372 = vpop.f32.mrb[0].mxu0
        %v1373 = vadd.f32 0.0, %v1372
        %v1374 = vpop.f32.mrb[0].mxu0
        %1375 = vdwg.mxu0
        %v1376 = vadd.f32 %v1234, %v1362
        %v1377 = vadd.f32 %v1235, %v1365
        %v1378 = vadd.f32 %v1236, %v1370
        %v1379 = vadd.f32 %v1237, %v1373
        %v1380 = vld [vmem:[%s299] sm:$0xe0]
        %v1381 = vld [vmem:[#allocation5 + $0x200] sm:$0xf]
        %v1382 = vld [vmem:[#allocation5 + $0x204] sm:$0xf]
        %v1383 = vld [vmem:[#allocation5 + $0x208] sm:$0xf]
        %v1384 = vld [vmem:[#allocation5 + $0x20c] sm:$0xf]
        %v1385 = vld [vmem:[#allocation5 + $0x210] sm:$0xf]
        %v1386 = vld [vmem:[#allocation5 + $0x214] sm:$0xf]
        %v1387 = vld [vmem:[#allocation5 + $0x218] sm:$0xf]
        %v1388 = vld [vmem:[#allocation5 + $0x21c] sm:$0xf]
        %v1389 = vld [vmem:[#allocation5 + $0x220] sm:$0xf]
        %v1390 = vld [vmem:[#allocation5 + $0x224] sm:$0xf]
        %v1391 = vld [vmem:[#allocation5 + $0x228] sm:$0xf]
        %v1392 = vld [vmem:[#allocation5 + $0x22c] sm:$0xf]
        %v1393 = vld [vmem:[#allocation5 + $0x230] sm:$0xf]
        %v1394 = vld [vmem:[#allocation5 + $0x234] sm:$0xf]
        %v1395 = vld [vmem:[#allocation5 + $0x238] sm:$0xf]
        %v1396 = vld [vmem:[#allocation5 + $0x23c] sm:$0xf]
        %vm1399 = vcmask 1042432
        %v1400 = vrot.slane %v1380, 5
        %v1401 = vrot.slane %v324, 5
        %v1402 = vsel %vm1399, %v1400, %v1401
        %v1403 = vrot.slane %v1238, 5
        %v1404 = vsel %vm1399, %v1401, %v1403
        %v1423 = vunpack.c.l.b16 %v1381
        %v1424 = vunpack.c.l.b16 %v1382
        %v1425 = vunpack.c.l.b16 %v1383
        %v1426 = vunpack.c.l.b16 %v1384
        %v1427 = vunpack.c.l.b16 %v1385
        %v1428 = vunpack.c.l.b16 %v1386
        %v1429 = vunpack.c.l.b16 %v1387
        %v1430 = vunpack.c.l.b16 %v1388
        %v1431 = vunpack.c.l.b16 %v1389
        %v1432 = vunpack.c.l.b16 %v1390
        %v1433 = vunpack.c.l.b16 %v1391
        %v1434 = vunpack.c.l.b16 %v1392
        %v1435 = vunpack.c.l.b16 %v1393
        %v1436 = vunpack.c.l.b16 %v1394
        %v1437 = vunpack.c.l.b16 %v1395
        %v1438 = vunpack.c.l.b16 %v1396
        %v1439 = vpack.c.b16 %v1424, %v1423
        %v1440 = vpack.c.b16 %v1426, %v1425
        %v1441 = vpack.c.b16 %v1428, %v1427
        %v1442 = vpack.c.b16 %v1430, %v1429
        %v1443 = vpack.c.b16 %v1432, %v1431
        %v1444 = vpack.c.b16 %v1434, %v1433
        %v1445 = vpack.c.b16 %v1436, %v1435
        %v1446 = vpack.c.b16 %v1438, %v1437
        %1455 = vmatprep.subr.bf16.mxu0 0
        %1456 = vmatpush1.bf16.msra.mxu0 %v1439
        %1457 = vmatprep.subr.bf16.mxu0 0
        %1458 = vmatpush1.bf16.msra.mxu0 %v1440
        %1459 = vmatprep.subr.bf16.mxu0 0
        %1460 = vmatpush1.bf16.msra.mxu0 %v1441
        %1461 = vmatprep.subr.bf16.mxu0 0
        %1462 = vmatpush1.bf16.msra.mxu0 %v1442
        %1463 = vmatprep.subr.bf16.mxu0 0
        %1464 = vmatpush1.bf16.msra.mxu0 %v1443
        %1465 = vmatprep.subr.bf16.mxu0 0
        %1466 = vmatpush1.bf16.msra.mxu0 %v1444
        %1467 = vmatprep.subr.bf16.mxu0 0
        %1468 = vmatpush1.bf16.msra.mxu0 %v1445
        %1469 = vmatprep.subr.bf16.mxu0 0
        %1470 = vmatpush1.bf16.msra.mxu0 %v1446
        %1471 = vmatprep.subr.bf16.mxu0 0
        %1472 = vmatpush1.bf16.msra.mxu0 0
        %1473 = vmatprep.subr.bf16.mxu0 0
        %1474 = vmatpush1.bf16.msra.mxu0 0
        %1475 = vmatprep.subr.bf16.mxu0 0
        %1476 = vmatpush1.bf16.msra.mxu0 0
        %1477 = vmatprep.subr.bf16.mxu0 0
        %1478 = vmatpush1.bf16.msra.mxu0 0
        %1479 = vmatprep.subr.bf16.mxu0 0
        %1480 = vmatpush1.bf16.msra.mxu0 0
        %1481 = vmatprep.subr.bf16.mxu0 0
        %1482 = vmatpush1.bf16.msra.mxu0 0
        %1483 = vmatprep.subr.bf16.mxu0 0
        %1484 = vmatpush1.bf16.msra.mxu0 0
        %1485 = vmatprep.subr.bf16.mxu0 0
        %1486 = vmatpush1.bf16.msra.mxu0 0
        %1487 = vmatprep.mubr.bf16.mxu0 0
        %1488 = vmatmul.mubr.bf16.gmra.mrb[0].mxu0 %v1402
        %v1489 = vpop.f32.mrb[0].mxu0
        %v1490 = vadd.f32 0.0, %v1489
        %v1491 = vpop.f32.mrb[0].mxu0
        %v1492 = vpop.f32.mrb[0].mxu0
        %v1493 = vadd.f32 0.0, %v1492
        %v1494 = vpop.f32.mrb[0].mxu0
        %1495 = vmatprep.mubr.bf16.mxu0 0
        %1496 = vmatmul.mubr.bf16.gmra.mrb[0].mxu0 %v1404
        %v1497 = vpop.f32.mrb[0].mxu0
        %v1498 = vadd.f32 0.0, %v1497
        %v1499 = vpop.f32.mrb[0].mxu0
        %v1500 = vpop.f32.mrb[0].mxu0
        %v1501 = vadd.f32 0.0, %v1500
        %v1502 = vpop.f32.mrb[0].mxu0
        %1503 = vdwg.mxu0
        %v1504 = vadd.f32 %v1376, %v1490
        %v1505 = vadd.f32 %v1377, %v1493
        %v1506 = vadd.f32 %v1378, %v1498
        %v1507 = vadd.f32 %v1379, %v1501
        %v1508 = vld [vmem:[%s299 + $0x10] sm:$0x1f]
        %v1509 = vld [vmem:[#allocation5 + $0x240] sm:$0xf]
        %v1510 = vld [vmem:[#allocation5 + $0x244] sm:$0xf]
        %v1511 = vld [vmem:[#allocation5 + $0x248] sm:$0xf]
        %v1512 = vld [vmem:[#allocation5 + $0x24c] sm:$0xf]
        %v1513 = vld [vmem:[#allocation5 + $0x250] sm:$0xf]
        %v1514 = vld [vmem:[#allocation5 + $0x254] sm:$0xf]
        %v1515 = vld [vmem:[#allocation5 + $0x258] sm:$0xf]
        %v1516 = vld [vmem:[#allocation5 + $0x25c] sm:$0xf]
        %v1517 = vld [vmem:[#allocation5 + $0x260] sm:$0xf]
        %v1518 = vld [vmem:[#allocation5 + $0x264] sm:$0xf]
        %v1519 = vld [vmem:[#allocation5 + $0x268] sm:$0xf]
        %v1520 = vld [vmem:[#allocation5 + $0x26c] sm:$0xf]
        %v1521 = vld [vmem:[#allocation5 + $0x270] sm:$0xf]
        %v1522 = vld [vmem:[#allocation5 + $0x274] sm:$0xf]
        %v1523 = vld [vmem:[#allocation5 + $0x278] sm:$0xf]
        %v1524 = vld [vmem:[#allocation5 + $0x27c] sm:$0xf]
        %vm1525 = vsmask.f32 2304
        %v1527 = vshrl.u32 %v1380, 16
        %v1529 = vrot.slane %v1527, 5
        %v1530 = vshll.u32 %v1380, 16
        %v1532 = vrot.slane %v1530, 6
        %v1533 = vor.u32 %v1529, %v1532
        %v1534 = vrot.slane %v352, 5
        %v1535 = vrot.slane %v355, 6
        %v1536 = vor.u32 %v1534, %v1535
        %v1537 = vsel %vm1525, %v1533, %v1536
        %v1539 = vshrl.u32 %v1508, 16
        %v1541 = vrot.slane %v1539, 5
        %v1542 = vshll.u32 %v1508, 16
        %v1544 = vrot.slane %v1542, 6
        %v1545 = vor.u32 %v1541, %v1544
        %v1546 = vsel %vm1525, %v1536, %v1545
        %v1565 = vunpack.c.l.b16 %v1509
        %v1566 = vunpack.c.l.b16 %v1510
        %v1567 = vunpack.c.l.b16 %v1511
        %v1568 = vunpack.c.l.b16 %v1512
        %v1569 = vunpack.c.l.b16 %v1513
        %v1570 = vunpack.c.l.b16 %v1514
        %v1571 = vunpack.c.l.b16 %v1515
        %v1572 = vunpack.c.l.b16 %v1516
        %v1573 = vunpack.c.l.b16 %v1517
        %v1574 = vunpack.c.l.b16 %v1518
        %v1575 = vunpack.c.l.b16 %v1519
        %v1576 = vunpack.c.l.b16 %v1520
        %v1577 = vunpack.c.l.b16 %v1521
        %v1578 = vunpack.c.l.b16 %v1522
        %v1579 = vunpack.c.l.b16 %v1523
        %v1580 = vunpack.c.l.b16 %v1524
        %v1581 = vpack.c.b16 %v1566, %v1565
        %v1582 = vpack.c.b16 %v1568, %v1567
        %v1583 = vpack.c.b16 %v1570, %v1569
        %v1584 = vpack.c.b16 %v1572, %v1571
        %v1585 = vpack.c.b16 %v1574, %v1573
        %v1586 = vpack.c.b16 %v1576, %v1575
        %v1587 = vpack.c.b16 %v1578, %v1577
        %v1588 = vpack.c.b16 %v1580, %v1579
        %1597 = vmatprep.subr.bf16.mxu0 0
        %1598 = vmatpush1.bf16.msra.mxu0 %v1581
        %1599 = vmatprep.subr.bf16.mxu0 0
        %1600 = vmatpush1.bf16.msra.mxu0 %v1582
        %1601 = vmatprep.subr.bf16.mxu0 0
        %1602 = vmatpush1.bf16.msra.mxu0 %v1583
        %1603 = vmatprep.subr.bf16.mxu0 0
        %1604 = vmatpush1.bf16.msra.mxu0 %v1584
        %1605 = vmatprep.subr.bf16.mxu0 0
        %1606 = vmatpush1.bf16.msra.mxu0 %v1585
        %1607 = vmatprep.subr.bf16.mxu0 0
        %1608 = vmatpush1.bf16.msra.mxu0 %v1586
        %1609 = vmatprep.subr.bf16.mxu0 0
        %1610 = vmatpush1.bf16.msra.mxu0 %v1587
        %1611 = vmatprep.subr.bf16.mxu0 0
        %1612 = vmatpush1.bf16.msra.mxu0 %v1588
        %1613 = vmatprep.subr.bf16.mxu0 0
        %1614 = vmatpush1.bf16.msra.mxu0 0
        %1615 = vmatprep.subr.bf16.mxu0 0
        %1616 = vmatpush1.bf16.msra.mxu0 0
        %1617 = vmatprep.subr.bf16.mxu0 0
        %1618 = vmatpush1.bf16.msra.mxu0 0
        %1619 = vmatprep.subr.bf16.mxu0 0
        %1620 = vmatpush1.bf16.msra.mxu0 0
        %1621 = vmatprep.subr.bf16.mxu0 0
        %1622 = vmatpush1.bf16.msra.mxu0 0
        %1623 = vmatprep.subr.bf16.mxu0 0
        %1624 = vmatpush1.bf16.msra.mxu0 0
        %1625 = vmatprep.subr.bf16.mxu0 0
        %1626 = vmatpush1.bf16.msra.mxu0 0
        %1627 = vmatprep.subr.bf16.mxu0 0
        %1628 = vmatpush1.bf16.msra.mxu0 0
        %1629 = vmatprep.mubr.bf16.mxu0 0
        %1630 = vmatmul.mubr.bf16.gmra.mrb[0].mxu0 %v1537
        %v1631 = vpop.f32.mrb[0].mxu0
        %v1632 = vadd.f32 0.0, %v1631
        %v1633 = vpop.f32.mrb[0].mxu0
        %v1634 = vpop.f32.mrb[0].mxu0
        %v1635 = vadd.f32 0.0, %v1634
        %v1636 = vpop.f32.mrb[0].mxu0
        %1637 = vmatprep.mubr.bf16.mxu0 0
        %1638 = vmatmul.mubr.bf16.gmra.mrb[0].mxu0 %v1546
        %v1639 = vpop.f32.mrb[0].mxu0
        %v1640 = vadd.f32 0.0, %v1639
        %v1641 = vpop.f32.mrb[0].mxu0
        %v1642 = vpop.f32.mrb[0].mxu0
        %v1643 = vadd.f32 0.0, %v1642
        %v1644 = vpop.f32.mrb[0].mxu0
        %1645 = vdwg.mxu0
        %v1646 = vadd.f32 %v1504, %v1632
        %v1647 = vadd.f32 %v1505, %v1635
        %v1648 = vadd.f32 %v1506, %v1640
        %v1649 = vadd.f32 %v1507, %v1643
        %v1650 = vld [vmem:[%s299] sm:$0xc0]
        %v1651 = vld [vmem:[#allocation5 + $0x280] sm:$0xf]
        %v1652 = vld [vmem:[#allocation5 + $0x284] sm:$0xf]
        %v1653 = vld [vmem:[#allocation5 + $0x288] sm:$0xf]
        %v1654 = vld [vmem:[#allocation5 + $0x28c] sm:$0xf]
        %v1655 = vld [vmem:[#allocation5 + $0x290] sm:$0xf]
        %v1656 = vld [vmem:[#allocation5 + $0x294] sm:$0xf]
        %v1657 = vld [vmem:[#allocation5 + $0x298] sm:$0xf]
        %v1658 = vld [vmem:[#allocation5 + $0x29c] sm:$0xf]
        %v1659 = vld [vmem:[#allocation5 + $0x2a0] sm:$0xf]
        %v1660 = vld [vmem:[#allocation5 + $0x2a4] sm:$0xf]
        %v1661 = vld [vmem:[#allocation5 + $0x2a8] sm:$0xf]
        %v1662 = vld [vmem:[#allocation5 + $0x2ac] sm:$0xf]
        %v1663 = vld [vmem:[#allocation5 + $0x2b0] sm:$0xf]
        %v1664 = vld [vmem:[#allocation5 + $0x2b4] sm:$0xf]
        %v1665 = vld [vmem:[#allocation5 + $0x2b8] sm:$0xf]
        %v1666 = vld [vmem:[#allocation5 + $0x2bc] sm:$0xf]
        %vm1669 = vcmask 1041408
        %v1670 = vrot.slane %v1650, 6
        %v1671 = vrot.slane %v324, 6
        %v1672 = vsel %vm1669, %v1670, %v1671
        %v1673 = vrot.slane %v1508, 6
        %v1674 = vsel %vm1669, %v1671, %v1673
        %v1693 = vunpack.c.l.b16 %v1651
        %v1694 = vunpack.c.l.b16 %v1652
        %v1695 = vunpack.c.l.b16 %v1653
        %v1696 = vunpack.c.l.b16 %v1654
        %v1697 = vunpack.c.l.b16 %v1655
        %v1698 = vunpack.c.l.b16 %v1656
        %v1699 = vunpack.c.l.b16 %v1657
        %v1700 = vunpack.c.l.b16 %v1658
        %v1701 = vunpack.c.l.b16 %v1659
        %v1702 = vunpack.c.l.b16 %v1660
        %v1703 = vunpack.c.l.b16 %v1661
        %v1704 = vunpack.c.l.b16 %v1662
        %v1705 = vunpack.c.l.b16 %v1663
        %v1706 = vunpack.c.l.b16 %v1664
        %v1707 = vunpack.c.l.b16 %v1665
        %v1708 = vunpack.c.l.b16 %v1666
        %v1709 = vpack.c.b16 %v1694, %v1693
        %v1710 = vpack.c.b16 %v1696, %v1695
        %v1711 = vpack.c.b16 %v1698, %v1697
        %v1712 = vpack.c.b16 %v1700, %v1699
        %v1713 = vpack.c.b16 %v1702, %v1701
        %v1714 = vpack.c.b16 %v1704, %v1703
        %v1715 = vpack.c.b16 %v1706, %v1705
        %v1716 = vpack.c.b16 %v1708, %v1707
        %1725 = vmatprep.subr.bf16.mxu0 0
        %1726 = vmatpush1.bf16.msra.mxu0 %v1709
        %1727 = vmatprep.subr.bf16.mxu0 0
        %1728 = vmatpush1.bf16.msra.mxu0 %v1710
        %1729 = vmatprep.subr.bf16.mxu0 0
        %1730 = vmatpush1.bf16.msra.mxu0 %v1711
        %1731 = vmatprep.subr.bf16.mxu0 0
        %1732 = vmatpush1.bf16.msra.mxu0 %v1712
        %1733 = vmatprep.subr.bf16.mxu0 0
        %1734 = vmatpush1.bf16.msra.mxu0 %v1713
        %1735 = vmatprep.subr.bf16.mxu0 0
        %1736 = vmatpush1.bf16.msra.mxu0 %v1714
        %1737 = vmatprep.subr.bf16.mxu0 0
        %1738 = vmatpush1.bf16.msra.mxu0 %v1715
        %1739 = vmatprep.subr.bf16.mxu0 0
        %1740 = vmatpush1.bf16.msra.mxu0 %v1716
        %1741 = vmatprep.subr.bf16.mxu0 0
        %1742 = vmatpush1.bf16.msra.mxu0 0
        %1743 = vmatprep.subr.bf16.mxu0 0
        %1744 = vmatpush1.bf16.msra.mxu0 0
        %1745 = vmatprep.subr.bf16.mxu0 0
        %1746 = vmatpush1.bf16.msra.mxu0 0
        %1747 = vmatprep.subr.bf16.mxu0 0
        %1748 = vmatpush1.bf16.msra.mxu0 0
        %1749 = vmatprep.subr.bf16.mxu0 0
        %1750 = vmatpush1.bf16.msra.mxu0 0
        %1751 = vmatprep.subr.bf16.mxu0 0
        %1752 = vmatpush1.bf16.msra.mxu0 0
        %1753 = vmatprep.subr.bf16.mxu0 0
        %1754 = vmatpush1.bf16.msra.mxu0 0
        %1755 = vmatprep.subr.bf16.mxu0 0
        %1756 = vmatpush1.bf16.msra.mxu0 0
        %1757 = vmatprep.mubr.bf16.mxu0 0
        %1758 = vmatmul.mubr.bf16.gmra.mrb[0].mxu0 %v1672
        %v1759 = vpop.f32.mrb[0].mxu0
        %v1760 = vadd.f32 0.0, %v1759
        %v1761 = vpop.f32.mrb[0].mxu0
        %v1762 = vpop.f32.mrb[0].mxu0
        %v1763 = vadd.f32 0.0, %v1762
        %v1764 = vpop.f32.mrb[0].mxu0
        %1765 = vmatprep.mubr.bf16.mxu0 0
        %1766 = vmatmul.mubr.bf16.gmra.mrb[0].mxu0 %v1674
        %v1767 = vpop.f32.mrb[0].mxu0
        %v1768 = vadd.f32 0.0, %v1767
        %v1769 = vpop.f32.mrb[0].mxu0
        %v1770 = vpop.f32.mrb[0].mxu0
        %v1771 = vadd.f32 0.0, %v1770
        %v1772 = vpop.f32.mrb[0].mxu0
        %1773 = vdwg.mxu0
        %v1774 = vadd.f32 %v1646, %v1760
        %v1775 = vadd.f32 %v1647, %v1763
        %v1776 = vadd.f32 %v1648, %v1768
        %v1777 = vadd.f32 %v1649, %v1771
        %v1778 = vld [vmem:[%s299 + $0x10] sm:$0x3f]
        %v1779 = vld [vmem:[#allocation5 + $0x2c0] sm:$0xf]
        %v1780 = vld [vmem:[#allocation5 + $0x2c4] sm:$0xf]
        %v1781 = vld [vmem:[#allocation5 + $0x2c8] sm:$0xf]
        %v1782 = vld [vmem:[#allocation5 + $0x2cc] sm:$0xf]
        %v1783 = vld [vmem:[#allocation5 + $0x2d0] sm:$0xf]
        %v1784 = vld [vmem:[#allocation5 + $0x2d4] sm:$0xf]
        %v1785 = vld [vmem:[#allocation5 + $0x2d8] sm:$0xf]
        %v1786 = vld [vmem:[#allocation5 + $0x2dc] sm:$0xf]
        %v1787 = vld [vmem:[#allocation5 + $0x2e0] sm:$0xf]
        %v1788 = vld [vmem:[#allocation5 + $0x2e4] sm:$0xf]
        %v1789 = vld [vmem:[#allocation5 + $0x2e8] sm:$0xf]
        %v1790 = vld [vmem:[#allocation5 + $0x2ec] sm:$0xf]
        %v1791 = vld [vmem:[#allocation5 + $0x2f0] sm:$0xf]
        %v1792 = vld [vmem:[#allocation5 + $0x2f4] sm:$0xf]
        %v1793 = vld [vmem:[#allocation5 + $0x2f8] sm:$0xf]
        %v1794 = vld [vmem:[#allocation5 + $0x2fc] sm:$0xf]
        %vm1795 = vsmask.f32 1280
        %v1797 = vshrl.u32 %v1650, 16
        %v1799 = vrot.slane %v1797, 6
        %v1800 = vshll.u32 %v1650, 16
        %v1802 = vrot.slane %v1800, 7
        %v1803 = vor.u32 %v1799, %v1802
        %v1804 = vrot.slane %v352, 6
        %v1805 = vrot.slane %v355, 7
        %v1806 = vor.u32 %v1804, %v1805
        %v1807 = vsel %vm1795, %v1803, %v1806
        %v1809 = vshrl.u32 %v1778, 16
        %v1811 = vrot.slane %v1809, 6
        %v1812 = vshll.u32 %v1778, 16
        %v1814 = vrot.slane %v1812, 7
        %v1815 = vor.u32 %v1811, %v1814
        %v1816 = vsel %vm1795, %v1806, %v1815
        %v1835 = vunpack.c.l.b16 %v1779
        %v1836 = vunpack.c.l.b16 %v1780
        %v1837 = vunpack.c.l.b16 %v1781
        %v1838 = vunpack.c.l.b16 %v1782
        %v1839 = vunpack.c.l.b16 %v1783
        %v1840 = vunpack.c.l.b16 %v1784
        %v1841 = vunpack.c.l.b16 %v1785
        %v1842 = vunpack.c.l.b16 %v1786
        %v1843 = vunpack.c.l.b16 %v1787
        %v1844 = vunpack.c.l.b16 %v1788
        %v1845 = vunpack.c.l.b16 %v1789
        %v1846 = vunpack.c.l.b16 %v1790
        %v1847 = vunpack.c.l.b16 %v1791
        %v1848 = vunpack.c.l.b16 %v1792
        %v1849 = vunpack.c.l.b16 %v1793
        %v1850 = vunpack.c.l.b16 %v1794
        %v1851 = vpack.c.b16 %v1836, %v1835
        %v1852 = vpack.c.b16 %v1838, %v1837
        %v1853 = vpack.c.b16 %v1840, %v1839
        %v1854 = vpack.c.b16 %v1842, %v1841
        %v1855 = vpack.c.b16 %v1844, %v1843
        %v1856 = vpack.c.b16 %v1846, %v1845
        %v1857 = vpack.c.b16 %v1848, %v1847
        %v1858 = vpack.c.b16 %v1850, %v1849
        %1867 = vmatprep.subr.bf16.mxu0 0
        %1868 = vmatpush1.bf16.msra.mxu0 %v1851
        %1869 = vmatprep.subr.bf16.mxu0 0
        %1870 = vmatpush1.bf16.msra.mxu0 %v1852
        %1871 = vmatprep.subr.bf16.mxu0 0
        %1872 = vmatpush1.bf16.msra.mxu0 %v1853
        %1873 = vmatprep.subr.bf16.mxu0 0
        %1874 = vmatpush1.bf16.msra.mxu0 %v1854
        %1875 = vmatprep.subr.bf16.mxu0 0
        %1876 = vmatpush1.bf16.msra.mxu0 %v1855
        %1877 = vmatprep.subr.bf16.mxu0 0
        %1878 = vmatpush1.bf16.msra.mxu0 %v1856
        %1879 = vmatprep.subr.bf16.mxu0 0
        %1880 = vmatpush1.bf16.msra.mxu0 %v1857
        %1881 = vmatprep.subr.bf16.mxu0 0
        %1882 = vmatpush1.bf16.msra.mxu0 %v1858
        %1883 = vmatprep.subr.bf16.mxu0 0
        %1884 = vmatpush1.bf16.msra.mxu0 0
        %1885 = vmatprep.subr.bf16.mxu0 0
        %1886 = vmatpush1.bf16.msra.mxu0 0
        %1887 = vmatprep.subr.bf16.mxu0 0
        %1888 = vmatpush1.bf16.msra.mxu0 0
        %1889 = vmatprep.subr.bf16.mxu0 0
        %1890 = vmatpush1.bf16.msra.mxu0 0
        %1891 = vmatprep.subr.bf16.mxu0 0
        %1892 = vmatpush1.bf16.msra.mxu0 0
        %1893 = vmatprep.subr.bf16.mxu0 0
        %1894 = vmatpush1.bf16.msra.mxu0 0
        %1895 = vmatprep.subr.bf16.mxu0 0
        %1896 = vmatpush1.bf16.msra.mxu0 0
        %1897 = vmatprep.subr.bf16.mxu0 0
        %1898 = vmatpush1.bf16.msra.mxu0 0
        %1899 = vmatprep.mubr.bf16.mxu0 0
        %1900 = vmatmul.mubr.bf16.gmra.mrb[0].mxu0 %v1807
        %v1901 = vpop.f32.mrb[0].mxu0
        %v1902 = vadd.f32 0.0, %v1901
        %v1903 = vpop.f32.mrb[0].mxu0
        %v1904 = vpop.f32.mrb[0].mxu0
        %v1905 = vadd.f32 0.0, %v1904
        %v1906 = vpop.f32.mrb[0].mxu0
        %1907 = vmatprep.mubr.bf16.mxu0 0
        %1908 = vmatmul.mubr.bf16.gmra.mrb[0].mxu0 %v1816
        %v1909 = vpop.f32.mrb[0].mxu0
        %v1910 = vadd.f32 0.0, %v1909
        %v1911 = vpop.f32.mrb[0].mxu0
        %v1912 = vpop.f32.mrb[0].mxu0
        %v1913 = vadd.f32 0.0, %v1912
        %v1914 = vpop.f32.mrb[0].mxu0
        %1915 = vdwg.mxu0
        %v1916 = vadd.f32 %v1774, %v1902
        %v1917 = vadd.f32 %v1775, %v1905
        %v1918 = vadd.f32 %v1776, %v1910
        %v1919 = vadd.f32 %v1777, %v1913
        %v1920 = vld [vmem:[%s299] sm:$0x80]
        %v1921 = vld [vmem:[#allocation5 + $0x300] sm:$0xf]
        %v1922 = vld [vmem:[#allocation5 + $0x304] sm:$0xf]
        %v1923 = vld [vmem:[#allocation5 + $0x308] sm:$0xf]
        %v1924 = vld [vmem:[#allocation5 + $0x30c] sm:$0xf]
        %v1925 = vld [vmem:[#allocation5 + $0x310] sm:$0xf]
        %v1926 = vld [vmem:[#allocation5 + $0x314] sm:$0xf]
        %v1927 = vld [vmem:[#allocation5 + $0x318] sm:$0xf]
        %v1928 = vld [vmem:[#allocation5 + $0x31c] sm:$0xf]
        %v1929 = vld [vmem:[#allocation5 + $0x320] sm:$0xf]
        %v1930 = vld [vmem:[#allocation5 + $0x324] sm:$0xf]
        %v1931 = vld [vmem:[#allocation5 + $0x328] sm:$0xf]
        %v1932 = vld [vmem:[#allocation5 + $0x32c] sm:$0xf]
        %v1933 = vld [vmem:[#allocation5 + $0x330] sm:$0xf]
        %v1934 = vld [vmem:[#allocation5 + $0x334] sm:$0xf]
        %v1935 = vld [vmem:[#allocation5 + $0x338] sm:$0xf]
        %v1936 = vld [vmem:[#allocation5 + $0x33c] sm:$0xf]
        %vm1939 = vcmask 1040384
        %v1940 = vrot.slane %v1920, 7
        %v1941 = vrot.slane %v324, 7
        %v1942 = vsel %vm1939, %v1940, %v1941
        %v1943 = vrot.slane %v1778, 7
        %v1944 = vsel %vm1939, %v1941, %v1943
        %v1963 = vunpack.c.l.b16 %v1921
        %v1964 = vunpack.c.l.b16 %v1922
        %v1965 = vunpack.c.l.b16 %v1923
        %v1966 = vunpack.c.l.b16 %v1924
        %v1967 = vunpack.c.l.b16 %v1925
        %v1968 = vunpack.c.l.b16 %v1926
        %v1969 = vunpack.c.l.b16 %v1927
        %v1970 = vunpack.c.l.b16 %v1928
        %v1971 = vunpack.c.l.b16 %v1929
        %v1972 = vunpack.c.l.b16 %v1930
        %v1973 = vunpack.c.l.b16 %v1931
        %v1974 = vunpack.c.l.b16 %v1932
        %v1975 = vunpack.c.l.b16 %v1933
        %v1976 = vunpack.c.l.b16 %v1934
        %v1977 = vunpack.c.l.b16 %v1935
        %v1978 = vunpack.c.l.b16 %v1936
        %v1979 = vpack.c.b16 %v1964, %v1963
        %v1980 = vpack.c.b16 %v1966, %v1965
        %v1981 = vpack.c.b16 %v1968, %v1967
        %v1982 = vpack.c.b16 %v1970, %v1969
        %v1983 = vpack.c.b16 %v1972, %v1971
        %v1984 = vpack.c.b16 %v1974, %v1973
        %v1985 = vpack.c.b16 %v1976, %v1975
        %v1986 = vpack.c.b16 %v1978, %v1977
        %1995 = vmatprep.subr.bf16.mxu0 0
        %1996 = vmatpush1.bf16.msra.mxu0 %v1979
        %1997 = vmatprep.subr.bf16.mxu0 0
        %1998 = vmatpush1.bf16.msra.mxu0 %v1980
        %1999 = vmatprep.subr.bf16.mxu0 0
        %2000 = vmatpush1.bf16.msra.mxu0 %v1981
        %2001 = vmatprep.subr.bf16.mxu0 0
        %2002 = vmatpush1.bf16.msra.mxu0 %v1982
        %2003 = vmatprep.subr.bf16.mxu0 0
        %2004 = vmatpush1.bf16.msra.mxu0 %v1983
        %2005 = vmatprep.subr.bf16.mxu0 0
        %2006 = vmatpush1.bf16.msra.mxu0 %v1984
        %2007 = vmatprep.subr.bf16.mxu0 0
        %2008 = vmatpush1.bf16.msra.mxu0 %v1985
        %2009 = vmatprep.subr.bf16.mxu0 0
        %2010 = vmatpush1.bf16.msra.mxu0 %v1986
        %2011 = vmatprep.subr.bf16.mxu0 0
        %2012 = vmatpush1.bf16.msra.mxu0 0
        %2013 = vmatprep.subr.bf16.mxu0 0
        %2014 = vmatpush1.bf16.msra.mxu0 0
        %2015 = vmatprep.subr.bf16.mxu0 0
        %2016 = vmatpush1.bf16.msra.mxu0 0
        %2017 = vmatprep.subr.bf16.mxu0 0
        %2018 = vmatpush1.bf16.msra.mxu0 0
        %2019 = vmatprep.subr.bf16.mxu0 0
        %2020 = vmatpush1.bf16.msra.mxu0 0
        %2021 = vmatprep.subr.bf16.mxu0 0
        %2022 = vmatpush1.bf16.msra.mxu0 0
        %2023 = vmatprep.subr.bf16.mxu0 0
        %2024 = vmatpush1.bf16.msra.mxu0 0
        %2025 = vmatprep.subr.bf16.mxu0 0
        %2026 = vmatpush1.bf16.msra.mxu0 0
        %2027 = vmatprep.mubr.bf16.mxu0 0
        %2028 = vmatmul.mubr.bf16.gmra.mrb[0].mxu0 %v1942
        %v2029 = vpop.f32.mrb[0].mxu0
        %v2030 = vadd.f32 0.0, %v2029
        %v2031 = vpop.f32.mrb[0].mxu0
        %v2032 = vpop.f32.mrb[0].mxu0
        %v2033 = vadd.f32 0.0, %v2032
        %v2034 = vpop.f32.mrb[0].mxu0
        %2035 = vmatprep.mubr.bf16.mxu0 0
        %2036 = vmatmul.mubr.bf16.gmra.mrb[0].mxu0 %v1944
        %v2037 = vpop.f32.mrb[0].mxu0
        %v2038 = vadd.f32 0.0, %v2037
        %v2039 = vpop.f32.mrb[0].mxu0
        %v2040 = vpop.f32.mrb[0].mxu0
        %v2041 = vadd.f32 0.0, %v2040
        %v2042 = vpop.f32.mrb[0].mxu0
        %2043 = vdwg.mxu0
        %v2044 = vadd.f32 %v1916, %v2030
        %v2045 = vadd.f32 %v1917, %v2033
        %v2046 = vadd.f32 %v1918, %v2038
        %v2047 = vadd.f32 %v1919, %v2041
        %v2048 = vld [vmem:[%s299 + $0x10] sm:$0x7f]
        %v2049 = vld [vmem:[#allocation5 + $0x340] sm:$0xf]
        %v2050 = vld [vmem:[#allocation5 + $0x344] sm:$0xf]
        %v2051 = vld [vmem:[#allocation5 + $0x348] sm:$0xf]
        %v2052 = vld [vmem:[#allocation5 + $0x34c] sm:$0xf]
        %v2053 = vld [vmem:[#allocation5 + $0x350] sm:$0xf]
        %v2054 = vld [vmem:[#allocation5 + $0x354] sm:$0xf]
        %v2055 = vld [vmem:[#allocation5 + $0x358] sm:$0xf]
        %v2056 = vld [vmem:[#allocation5 + $0x35c] sm:$0xf]
        %v2057 = vld [vmem:[#allocation5 + $0x360] sm:$0xf]
        %v2058 = vld [vmem:[#allocation5 + $0x364] sm:$0xf]
        %v2059 = vld [vmem:[#allocation5 + $0x368] sm:$0xf]
        %v2060 = vld [vmem:[#allocation5 + $0x36c] sm:$0xf]
        %v2061 = vld [vmem:[#allocation5 + $0x370] sm:$0xf]
        %v2062 = vld [vmem:[#allocation5 + $0x374] sm:$0xf]
        %v2063 = vld [vmem:[#allocation5 + $0x378] sm:$0xf]
        %v2064 = vld [vmem:[#allocation5 + $0x37c] sm:$0xf]
        %vm2065 = vsmask.f32 256
        %v2067 = vshrl.u32 %v1920, 16
        %v2069 = vrot.slane %v2067, 7
        %v2070 = vrot.slane %v352, 7
        %v2071 = vor.u32 %v2070, %v355
        %v2072 = vsel %vm2065, %v2069, %v2071
        %v2074 = vshrl.u32 %v2048, 16
        %v2076 = vrot.slane %v2074, 7
        %v2077 = vshll.u32 %v2048, 16
        %v2079 = vor.u32 %v2076, %v2077
        %v2080 = vsel %vm2065, %v2070, %v2079
        %v2099 = vunpack.c.l.b16 %v2049
        %v2100 = vunpack.c.l.b16 %v2050
        %v2101 = vunpack.c.l.b16 %v2051
        %v2102 = vunpack.c.l.b16 %v2052
        %v2103 = vunpack.c.l.b16 %v2053
        %v2104 = vunpack.c.l.b16 %v2054
        %v2105 = vunpack.c.l.b16 %v2055
        %v2106 = vunpack.c.l.b16 %v2056
        %v2107 = vunpack.c.l.b16 %v2057
        %v2108 = vunpack.c.l.b16 %v2058
        %v2109 = vunpack.c.l.b16 %v2059
        %v2110 = vunpack.c.l.b16 %v2060
        %v2111 = vunpack.c.l.b16 %v2061
        %v2112 = vunpack.c.l.b16 %v2062
        %v2113 = vunpack.c.l.b16 %v2063
        %v2114 = vunpack.c.l.b16 %v2064
        %v2115 = vpack.c.b16 %v2100, %v2099
        %v2116 = vpack.c.b16 %v2102, %v2101
        %v2117 = vpack.c.b16 %v2104, %v2103
        %v2118 = vpack.c.b16 %v2106, %v2105
        %v2119 = vpack.c.b16 %v2108, %v2107
        %v2120 = vpack.c.b16 %v2110, %v2109
        %v2121 = vpack.c.b16 %v2112, %v2111
        %v2122 = vpack.c.b16 %v2114, %v2113
        %2131 = vmatprep.subr.bf16.mxu0 0
        %2132 = vmatpush1.bf16.msra.mxu0 %v2115
        %2133 = vmatprep.subr.bf16.mxu0 0
        %2134 = vmatpush1.bf16.msra.mxu0 %v2116
        %2135 = vmatprep.subr.bf16.mxu0 0
        %2136 = vmatpush1.bf16.msra.mxu0 %v2117
        %2137 = vmatprep.subr.bf16.mxu0 0
        %2138 = vmatpush1.bf16.msra.mxu0 %v2118
        %2139 = vmatprep.subr.bf16.mxu0 0
        %2140 = vmatpush1.bf16.msra.mxu0 %v2119
        %2141 = vmatprep.subr.bf16.mxu0 0
        %2142 = vmatpush1.bf16.msra.mxu0 %v2120
        %2143 = vmatprep.subr.bf16.mxu0 0
        %2144 = vmatpush1.bf16.msra.mxu0 %v2121
        %2145 = vmatprep.subr.bf16.mxu0 0
        %2146 = vmatpush1.bf16.msra.mxu0 %v2122
        %2147 = vmatprep.subr.bf16.mxu0 0
        %2148 = vmatpush1.bf16.msra.mxu0 0
        %2149 = vmatprep.subr.bf16.mxu0 0
        %2150 = vmatpush1.bf16.msra.mxu0 0
        %2151 = vmatprep.subr.bf16.mxu0 0
        %2152 = vmatpush1.bf16.msra.mxu0 0
        %2153 = vmatprep.subr.bf16.mxu0 0
        %2154 = vmatpush1.bf16.msra.mxu0 0
        %2155 = vmatprep.subr.bf16.mxu0 0
        %2156 = vmatpush1.bf16.msra.mxu0 0
        %2157 = vmatprep.subr.bf16.mxu0 0
        %2158 = vmatpush1.bf16.msra.mxu0 0
        %2159 = vmatprep.subr.bf16.mxu0 0
        %2160 = vmatpush1.bf16.msra.mxu0 0
        %2161 = vmatprep.subr.bf16.mxu0 0
        %2162 = vmatpush1.bf16.msra.mxu0 0
        %2163 = vmatprep.mubr.bf16.mxu0 0
        %2164 = vmatmul.mubr.bf16.gmra.mrb[0].mxu0 %v2072
        %v2165 = vpop.f32.mrb[0].mxu0
        %v2166 = vadd.f32 0.0, %v2165
        %v2167 = vpop.f32.mrb[0].mxu0
        %v2168 = vpop.f32.mrb[0].mxu0
        %v2169 = vadd.f32 0.0, %v2168
        %v2170 = vpop.f32.mrb[0].mxu0
        %2171 = vmatprep.mubr.bf16.mxu0 0
        %2172 = vmatmul.mubr.bf16.gmra.mrb[0].mxu0 %v2080
        %v2173 = vpop.f32.mrb[0].mxu0
        %v2174 = vadd.f32 0.0, %v2173
        %v2175 = vpop.f32.mrb[0].mxu0
        %v2176 = vpop.f32.mrb[0].mxu0
        %v2177 = vadd.f32 0.0, %v2176
        %v2178 = vpop.f32.mrb[0].mxu0
        %2179 = vdwg.mxu0
        %v2180 = vadd.f32 %v2044, %v2166
        %v2181 = vadd.f32 %v2045, %v2169
        %v2182 = vadd.f32 %v2046, %v2174
        %v2183 = vadd.f32 %v2047, %v2177
        %v2184 = vld [vmem:[#allocation5 + $0x380] sm:$0xf]
        %v2185 = vld [vmem:[#allocation5 + $0x384] sm:$0xf]
        %v2186 = vld [vmem:[#allocation5 + $0x388] sm:$0xf]
        %v2187 = vld [vmem:[#allocation5 + $0x38c] sm:$0xf]
        %v2188 = vld [vmem:[#allocation5 + $0x390] sm:$0xf]
        %v2189 = vld [vmem:[#allocation5 + $0x394] sm:$0xf]
        %v2190 = vld [vmem:[#allocation5 + $0x398] sm:$0xf]
        %v2191 = vld [vmem:[#allocation5 + $0x39c] sm:$0xf]
        %v2192 = vld [vmem:[#allocation5 + $0x3a0] sm:$0xf]
        %v2193 = vld [vmem:[#allocation5 + $0x3a4] sm:$0xf]
        %v2194 = vld [vmem:[#allocation5 + $0x3a8] sm:$0xf]
        %v2195 = vld [vmem:[#allocation5 + $0x3ac] sm:$0xf]
        %v2196 = vld [vmem:[#allocation5 + $0x3b0] sm:$0xf]
        %v2197 = vld [vmem:[#allocation5 + $0x3b4] sm:$0xf]
        %v2198 = vld [vmem:[#allocation5 + $0x3b8] sm:$0xf]
        %v2199 = vld [vmem:[#allocation5 + $0x3bc] sm:$0xf]
        %v2216 = vunpack.c.l.b16 %v2184
        %v2217 = vunpack.c.l.b16 %v2185
        %v2218 = vunpack.c.l.b16 %v2186
        %v2219 = vunpack.c.l.b16 %v2187
        %v2220 = vunpack.c.l.b16 %v2188
        %v2221 = vunpack.c.l.b16 %v2189
        %v2222 = vunpack.c.l.b16 %v2190
        %v2223 = vunpack.c.l.b16 %v2191
        %v2224 = vunpack.c.l.b16 %v2192
        %v2225 = vunpack.c.l.b16 %v2193
        %v2226 = vunpack.c.l.b16 %v2194
        %v2227 = vunpack.c.l.b16 %v2195
        %v2228 = vunpack.c.l.b16 %v2196
        %v2229 = vunpack.c.l.b16 %v2197
        %v2230 = vunpack.c.l.b16 %v2198
        %v2231 = vunpack.c.l.b16 %v2199
        %v2232 = vpack.c.b16 %v2217, %v2216
        %v2233 = vpack.c.b16 %v2219, %v2218
        %v2234 = vpack.c.b16 %v2221, %v2220
        %v2235 = vpack.c.b16 %v2223, %v2222
        %v2236 = vpack.c.b16 %v2225, %v2224
        %v2237 = vpack.c.b16 %v2227, %v2226
        %v2238 = vpack.c.b16 %v2229, %v2228
        %v2239 = vpack.c.b16 %v2231, %v2230
        %2248 = vmatprep.subr.bf16.mxu0 0
        %2249 = vmatpush1.bf16.msra.mxu0 %v2232
        %2250 = vmatprep.subr.bf16.mxu0 0
        %2251 = vmatpush1.bf16.msra.mxu0 %v2233
        %2252 = vmatprep.subr.bf16.mxu0 0
        %2253 = vmatpush1.bf16.msra.mxu0 %v2234
        %2254 = vmatprep.subr.bf16.mxu0 0
        %2255 = vmatpush1.bf16.msra.mxu0 %v2235
        %2256 = vmatprep.subr.bf16.mxu0 0
        %2257 = vmatpush1.bf16.msra.mxu0 %v2236
        %2258 = vmatprep.subr.bf16.mxu0 0
        %2259 = vmatpush1.bf16.msra.mxu0 %v2237
        %2260 = vmatprep.subr.bf16.mxu0 0
        %2261 = vmatpush1.bf16.msra.mxu0 %v2238
        %2262 = vmatprep.subr.bf16.mxu0 0
        %2263 = vmatpush1.bf16.msra.mxu0 %v2239
        %2264 = vmatprep.subr.bf16.mxu0 0
        %2265 = vmatpush1.bf16.msra.mxu0 0
        %2266 = vmatprep.subr.bf16.mxu0 0
        %2267 = vmatpush1.bf16.msra.mxu0 0
        %2268 = vmatprep.subr.bf16.mxu0 0
        %2269 = vmatpush1.bf16.msra.mxu0 0
        %2270 = vmatprep.subr.bf16.mxu0 0
        %2271 = vmatpush1.bf16.msra.mxu0 0
        %2272 = vmatprep.subr.bf16.mxu0 0
        %2273 = vmatpush1.bf16.msra.mxu0 0
        %2274 = vmatprep.subr.bf16.mxu0 0
        %2275 = vmatpush1.bf16.msra.mxu0 0
        %2276 = vmatprep.subr.bf16.mxu0 0
        %2277 = vmatpush1.bf16.msra.mxu0 0
        %2278 = vmatprep.subr.bf16.mxu0 0
        %2279 = vmatpush1.bf16.msra.mxu0 0
        %2280 = vmatprep.mubr.bf16.mxu0 0
        %2281 = vmatmul.mubr.bf16.gmra.mrb[0].mxu0 %v324
        %v2282 = vpop.f32.mrb[0].mxu0
        %v2283 = vadd.f32 0.0, %v2282
        %v2284 = vpop.f32.mrb[0].mxu0
        %v2285 = vpop.f32.mrb[0].mxu0
        %v2286 = vadd.f32 0.0, %v2285
        %v2287 = vpop.f32.mrb[0].mxu0
        %2288 = vmatprep.mubr.bf16.mxu0 0
        %2289 = vmatmul.mubr.bf16.gmra.mrb[0].mxu0 %v2048
        %v2290 = vpop.f32.mrb[0].mxu0
        %v2291 = vadd.f32 0.0, %v2290
        %v2292 = vpop.f32.mrb[0].mxu0
        %v2293 = vpop.f32.mrb[0].mxu0
        %v2294 = vadd.f32 0.0, %v2293
        %v2295 = vpop.f32.mrb[0].mxu0
        %2296 = vdwg.mxu0
        %v2297 = vadd.f32 %v2180, %v2283
        %v2298 = vadd.f32 %v2181, %v2286
        %v2299 = vadd.f32 %v2182, %v2291
        %v2300 = vadd.f32 %v2183, %v2294
        %v2301 = vld [vmem:[%s3] sm:$0x1]
        %v2303 = vlaneseq
        %v2304 = vshrl.u32 %v2303, 7
        %v2305 = vsub.s32 0, %v2304
        %v2306 = vrot.slane %v2301, %v2305
        %v2308 = vadd.f32 %v2297, %v2306
        %v2309 = vadd.f32 %v2298, %v2306
        %v2310 = vadd.f32 %v2299, %v2306
        %v2311 = vadd.f32 %v2300, %v2306
        %v2312 = vmax.f32 %v2308, 0.0
        %v2313 = vmax.f32 %v2309, 0.0
        %v2314 = vmax.f32 %v2310, 0.0
        %v2315 = vmax.f32 %v2311, 0.0
        %s2316 = ssub.s32 %s296, 7
        %v2317 = vlaneseq
        %v2318 = vshrl.u32 %v2317, 7
        %v2319 = vadd.s32 %v2318, 8
        %v2320 = vadd.s32 %v2318, 16
        %v2321 = vadd.s32 %v2318, 24
        %v2322 = vstv %s2316
        %v2323 = vadd.s32 %v2322, %v2318
        %v2324 = vadd.s32 %v2322, %v2319
        %v2325 = vadd.s32 %v2322, %v2320
        %v2326 = vadd.s32 %v2322, %v2321
        %vm2327 = vcmp.ge.s32.totalorder %v2323, 0
        %vm2328 = vcmp.ge.s32.totalorder %v2324, 0
        %vm2329 = vcmp.ge.s32.totalorder %v2325, 0
        %vm2330 = vcmp.ge.s32.totalorder %v2326, 0
        %vm2331 = vcmp.lt.s32.totalorder %v2323, 16
        %vm2332 = vcmp.lt.s32.totalorder %v2324, 16
        %vm2333 = vcmp.lt.s32.totalorder %v2325, 16
        %vm2334 = vcmp.lt.s32.totalorder %v2326, 16
        %vm2335 = vmand %vm2327, %vm2331
        %vm2336 = vmand %vm2328, %vm2332
        %vm2337 = vmand %vm2329, %vm2333
        %vm2338 = vmand %vm2330, %vm2334
        %v2339 = vsel %vm2335, %v2312, 0.0
        %v2340 = vsel %vm2336, %v2313, 0.0
        %v2341 = vsel %vm2337, %v2314, 0.0
        %v2342 = vsel %vm2338, %v2315, 0.0
        %v2343 = vpack.c.bf16 %v2340, %v2339
        %v2344 = vpack.c.bf16 %v2342, %v2341
        %2345 = vst [vmem:[#allocation3] sm:$0xff] %v2343
        %2346 = vst [vmem:[#allocation3 + $0x8] sm:$0x7f] %v2344
        %v2347 = vld [vmem:[#allocation3] sm:$0xff]
        %v2348 = vld [vmem:[#allocation8] sm:$0xf]
        %v2349 = vld [vmem:[#allocation8 + $0x4] sm:$0xf]
        %v2350 = vld [vmem:[#allocation8 + $0x8] sm:$0xf]
        %v2351 = vld [vmem:[#allocation8 + $0xc] sm:$0xf]
        %v2352 = vld [vmem:[#allocation8 + $0x10] sm:$0xf]
        %v2353 = vld [vmem:[#allocation8 + $0x14] sm:$0xf]
        %v2354 = vld [vmem:[#allocation8 + $0x18] sm:$0xf]
        %v2355 = vld [vmem:[#allocation8 + $0x1c] sm:$0xf]
        %v2356 = vld [vmem:[#allocation8 + $0x20] sm:$0xf]
        %v2357 = vld [vmem:[#allocation8 + $0x24] sm:$0xf]
        %v2358 = vld [vmem:[#allocation8 + $0x28] sm:$0xf]
        %v2359 = vld [vmem:[#allocation8 + $0x2c] sm:$0xf]
        %v2360 = vld [vmem:[#allocation8 + $0x30] sm:$0xf]
        %v2361 = vld [vmem:[#allocation8 + $0x34] sm:$0xf]
        %v2362 = vld [vmem:[#allocation8 + $0x38] sm:$0xf]
        %v2363 = vld [vmem:[#allocation8 + $0x3c] sm:$0xf]
        %v2364 = vld [vmem:[#allocation3] sm:$0xff]
        %v2365 = vld [vmem:[#allocation3 + $0x8] sm:$0x1]
        %v2366 = vld [vmem:[#allocation8 + $0x40] sm:$0xf]
        %v2367 = vld [vmem:[#allocation8 + $0x44] sm:$0xf]
        %v2368 = vld [vmem:[#allocation8 + $0x48] sm:$0xf]
        %v2369 = vld [vmem:[#allocation8 + $0x4c] sm:$0xf]
        %v2370 = vld [vmem:[#allocation8 + $0x50] sm:$0xf]
        %v2371 = vld [vmem:[#allocation8 + $0x54] sm:$0xf]
        %v2372 = vld [vmem:[#allocation8 + $0x58] sm:$0xf]
        %v2373 = vld [vmem:[#allocation8 + $0x5c] sm:$0xf]
        %v2374 = vld [vmem:[#allocation8 + $0x60] sm:$0xf]
        %v2375 = vld [vmem:[#allocation8 + $0x64] sm:$0xf]
        %v2376 = vld [vmem:[#allocation8 + $0x68] sm:$0xf]
        %v2377 = vld [vmem:[#allocation8 + $0x6c] sm:$0xf]
        %v2378 = vld [vmem:[#allocation8 + $0x70] sm:$0xf]
        %v2379 = vld [vmem:[#allocation8 + $0x74] sm:$0xf]
        %v2380 = vld [vmem:[#allocation8 + $0x78] sm:$0xf]
        %v2381 = vld [vmem:[#allocation8 + $0x7c] sm:$0xf]
        %vm2382 = vsmask.f32 7424
        %v2384 = vshrl.u32 %v2364, 16
        %v2386 = vshll.u32 %v2364, 16
        %v2388 = vrot.slane %v2386, 1
        %v2389 = vor.u32 %v2384, %v2388
        %v2391 = vshll.u32 %v2365, 16
        %v2393 = vrot.slane %v2391, 1
        %v2394 = vsel %vm2382, %v2389, %v2393
        %v2412 = vunpack.c.l.b16 %v2366
        %v2413 = vunpack.c.l.b16 %v2367
        %v2414 = vunpack.c.l.b16 %v2368
        %v2415 = vunpack.c.l.b16 %v2369
        %v2416 = vunpack.c.l.b16 %v2370
        %v2417 = vunpack.c.l.b16 %v2371
        %v2418 = vunpack.c.l.b16 %v2372
        %v2419 = vunpack.c.l.b16 %v2373
        %v2420 = vunpack.c.l.b16 %v2374
        %v2421 = vunpack.c.l.b16 %v2375
        %v2422 = vunpack.c.l.b16 %v2376
        %v2423 = vunpack.c.l.b16 %v2377
        %v2424 = vunpack.c.l.b16 %v2378
        %v2425 = vunpack.c.l.b16 %v2379
        %v2426 = vunpack.c.l.b16 %v2380
        %v2427 = vunpack.c.l.b16 %v2381
        %v2428 = vpack.c.b16 %v2413, %v2412
        %v2429 = vpack.c.b16 %v2415, %v2414
        %v2430 = vpack.c.b16 %v2417, %v2416
        %v2431 = vpack.c.b16 %v2419, %v2418
        %v2432 = vpack.c.b16 %v2421, %v2420
        %v2433 = vpack.c.b16 %v2423, %v2422
        %v2434 = vpack.c.b16 %v2425, %v2424
        %v2435 = vpack.c.b16 %v2427, %v2426
        %2444 = vmatprep.subr.bf16.mxu0 0
        %2445 = vmatpush1.bf16.msra.mxu0 %v2428
        %2446 = vmatprep.subr.bf16.mxu0 0
        %2447 = vmatpush1.bf16.msra.mxu0 %v2429
        %2448 = vmatprep.subr.bf16.mxu0 0
        %2449 = vmatpush1.bf16.msra.mxu0 %v2430
        %2450 = vmatprep.subr.bf16.mxu0 0
        %2451 = vmatpush1.bf16.msra.mxu0 %v2431
        %2452 = vmatprep.subr.bf16.mxu0 0
        %2453 = vmatpush1.bf16.msra.mxu0 %v2432
        %2454 = vmatprep.subr.bf16.mxu0 0
        %2455 = vmatpush1.bf16.msra.mxu0 %v2433
        %2456 = vmatprep.subr.bf16.mxu0 0
        %2457 = vmatpush1.bf16.msra.mxu0 %v2434
        %2458 = vmatprep.subr.bf16.mxu0 0
        %2459 = vmatpush1.bf16.msra.mxu0 %v2435
        %2460 = vmatprep.subr.bf16.mxu0 0
        %2461 = vmatpush1.bf16.msra.mxu0 0
        %2462 = vmatprep.subr.bf16.mxu0 0
        %2463 = vmatpush1.bf16.msra.mxu0 0
        %2464 = vmatprep.subr.bf16.mxu0 0
        %2465 = vmatpush1.bf16.msra.mxu0 0
        %2466 = vmatprep.subr.bf16.mxu0 0
        %2467 = vmatpush1.bf16.msra.mxu0 0
        %2468 = vmatprep.subr.bf16.mxu0 0
        %2469 = vmatpush1.bf16.msra.mxu0 0
        %2470 = vmatprep.subr.bf16.mxu0 0
        %2471 = vmatpush1.bf16.msra.mxu0 0
        %2472 = vmatprep.subr.bf16.mxu0 0
        %2473 = vmatpush1.bf16.msra.mxu0 0
        %2474 = vmatprep.subr.bf16.mxu0 0
        %2475 = vmatpush1.bf16.msra.mxu0 0
        %2476 = vmatprep.mubr.bf16.mxu0 0
        %2477 = vmatmul.mubr.bf16.gmra.mrb[0].mxu0 %v2394
        %v2478 = vpop.f32.mrb[0].mxu0
        %v2479 = vadd.f32 0.0, %v2478
        %v2480 = vpop.f32.mrb[0].mxu0
        %v2481 = vpop.f32.mrb[0].mxu0
        %v2482 = vadd.f32 0.0, %v2481
        %v2483 = vpop.f32.mrb[0].mxu0
        %2484 = vdwg.mxu0
        %v2501 = vunpack.c.l.b16 %v2348
        %v2502 = vunpack.c.l.b16 %v2349
        %v2503 = vunpack.c.l.b16 %v2350
        %v2504 = vunpack.c.l.b16 %v2351
        %v2505 = vunpack.c.l.b16 %v2352
        %v2506 = vunpack.c.l.b16 %v2353
        %v2507 = vunpack.c.l.b16 %v2354
        %v2508 = vunpack.c.l.b16 %v2355
        %v2509 = vunpack.c.l.b16 %v2356
        %v2510 = vunpack.c.l.b16 %v2357
        %v2511 = vunpack.c.l.b16 %v2358
        %v2512 = vunpack.c.l.b16 %v2359
        %v2513 = vunpack.c.l.b16 %v2360
        %v2514 = vunpack.c.l.b16 %v2361
        %v2515 = vunpack.c.l.b16 %v2362
        %v2516 = vunpack.c.l.b16 %v2363
        %v2517 = vpack.c.b16 %v2502, %v2501
        %v2518 = vpack.c.b16 %v2504, %v2503
        %v2519 = vpack.c.b16 %v2506, %v2505
        %v2520 = vpack.c.b16 %v2508, %v2507
        %v2521 = vpack.c.b16 %v2510, %v2509
        %v2522 = vpack.c.b16 %v2512, %v2511
        %v2523 = vpack.c.b16 %v2514, %v2513
        %v2524 = vpack.c.b16 %v2516, %v2515
        %2533 = vmatprep.subr.bf16.mxu0 0
        %2534 = vmatpush1.bf16.msra.mxu0 %v2517
        %2535 = vmatprep.subr.bf16.mxu0 0
        %2536 = vmatpush1.bf16.msra.mxu0 %v2518
        %2537 = vmatprep.subr.bf16.mxu0 0
        %2538 = vmatpush1.bf16.msra.mxu0 %v2519
        %2539 = vmatprep.subr.bf16.mxu0 0
        %2540 = vmatpush1.bf16.msra.mxu0 %v2520
        %2541 = vmatprep.subr.bf16.mxu0 0
        %2542 = vmatpush1.bf16.msra.mxu0 %v2521
        %2543 = vmatprep.subr.bf16.mxu0 0
        %2544 = vmatpush1.bf16.msra.mxu0 %v2522
        %2545 = vmatprep.subr.bf16.mxu0 0
        %2546 = vmatpush1.bf16.msra.mxu0 %v2523
        %2547 = vmatprep.subr.bf16.mxu0 0
        %2548 = vmatpush1.bf16.msra.mxu0 %v2524
        %2549 = vmatprep.subr.bf16.mxu0 0
        %2550 = vmatpush1.bf16.msra.mxu0 0
        %2551 = vmatprep.subr.bf16.mxu0 0
        %2552 = vmatpush1.bf16.msra.mxu0 0
        %2553 = vmatprep.subr.bf16.mxu0 0
        %2554 = vmatpush1.bf16.msra.mxu0 0
        %2555 = vmatprep.subr.bf16.mxu0 0
        %2556 = vmatpush1.bf16.msra.mxu0 0
        %2557 = vmatprep.subr.bf16.mxu0 0
        %2558 = vmatpush1.bf16.msra.mxu0 0
        %2559 = vmatprep.subr.bf16.mxu0 0
        %2560 = vmatpush1.bf16.msra.mxu0 0
        %2561 = vmatprep.subr.bf16.mxu0 0
        %2562 = vmatpush1.bf16.msra.mxu0 0
        %2563 = vmatprep.subr.bf16.mxu0 0
        %2564 = vmatpush1.bf16.msra.mxu0 0
        %2565 = vmatprep.mubr.bf16.mxu0 0
        %2566 = vmatmul.mubr.bf16.gmra.mrb[0].mxu0 %v2347
        %v2567 = vpop.f32.mrb[0].mxu0
        %v2568 = vadd.f32 %v2479, %v2567
        %v2569 = vpop.f32.mrb[0].mxu0
        %v2570 = vpop.f32.mrb[0].mxu0
        %v2571 = vadd.f32 %v2482, %v2570
        %v2572 = vpop.f32.mrb[0].mxu0
        %2573 = vdwg.mxu0
        %v2574 = vld [vmem:[#allocation3] sm:$0xfe]
        %v2575 = vld [vmem:[#allocation8 + $0x80] sm:$0xf]
        %v2576 = vld [vmem:[#allocation8 + $0x84] sm:$0xf]
        %v2577 = vld [vmem:[#allocation8 + $0x88] sm:$0xf]
        %v2578 = vld [vmem:[#allocation8 + $0x8c] sm:$0xf]
        %v2579 = vld [vmem:[#allocation8 + $0x90] sm:$0xf]
        %v2580 = vld [vmem:[#allocation8 + $0x94] sm:$0xf]
        %v2581 = vld [vmem:[#allocation8 + $0x98] sm:$0xf]
        %v2582 = vld [vmem:[#allocation8 + $0x9c] sm:$0xf]
        %v2583 = vld [vmem:[#allocation8 + $0xa0] sm:$0xf]
        %v2584 = vld [vmem:[#allocation8 + $0xa4] sm:$0xf]
        %v2585 = vld [vmem:[#allocation8 + $0xa8] sm:$0xf]
        %v2586 = vld [vmem:[#allocation8 + $0xac] sm:$0xf]
        %v2587 = vld [vmem:[#allocation8 + $0xb0] sm:$0xf]
        %v2588 = vld [vmem:[#allocation8 + $0xb4] sm:$0xf]
        %v2589 = vld [vmem:[#allocation8 + $0xb8] sm:$0xf]
        %v2590 = vld [vmem:[#allocation8 + $0xbc] sm:$0xf]
        %v2593 = vrot.slane %v2574, 1
        %v2594 = vrot.slane %v2365, 1
        %v2595 = vsel %vm466, %v2593, %v2594
        %v2613 = vunpack.c.l.b16 %v2575
        %v2614 = vunpack.c.l.b16 %v2576
        %v2615 = vunpack.c.l.b16 %v2577
        %v2616 = vunpack.c.l.b16 %v2578
        %v2617 = vunpack.c.l.b16 %v2579
        %v2618 = vunpack.c.l.b16 %v2580
        %v2619 = vunpack.c.l.b16 %v2581
        %v2620 = vunpack.c.l.b16 %v2582
        %v2621 = vunpack.c.l.b16 %v2583
        %v2622 = vunpack.c.l.b16 %v2584
        %v2623 = vunpack.c.l.b16 %v2585
        %v2624 = vunpack.c.l.b16 %v2586
        %v2625 = vunpack.c.l.b16 %v2587
        %v2626 = vunpack.c.l.b16 %v2588
        %v2627 = vunpack.c.l.b16 %v2589
        %v2628 = vunpack.c.l.b16 %v2590
        %v2629 = vpack.c.b16 %v2614, %v2613
        %v2630 = vpack.c.b16 %v2616, %v2615
        %v2631 = vpack.c.b16 %v2618, %v2617
        %v2632 = vpack.c.b16 %v2620, %v2619
        %v2633 = vpack.c.b16 %v2622, %v2621
        %v2634 = vpack.c.b16 %v2624, %v2623
        %v2635 = vpack.c.b16 %v2626, %v2625
        %v2636 = vpack.c.b16 %v2628, %v2627
        %2645 = vmatprep.subr.bf16.mxu0 0
        %2646 = vmatpush1.bf16.msra.mxu0 %v2629
        %2647 = vmatprep.subr.bf16.mxu0 0
        %2648 = vmatpush1.bf16.msra.mxu0 %v2630
        %2649 = vmatprep.subr.bf16.mxu0 0
        %2650 = vmatpush1.bf16.msra.mxu0 %v2631
        %2651 = vmatprep.subr.bf16.mxu0 0
        %2652 = vmatpush1.bf16.msra.mxu0 %v2632
        %2653 = vmatprep.subr.bf16.mxu0 0
        %2654 = vmatpush1.bf16.msra.mxu0 %v2633
        %2655 = vmatprep.subr.bf16.mxu0 0
        %2656 = vmatpush1.bf16.msra.mxu0 %v2634
        %2657 = vmatprep.subr.bf16.mxu0 0
        %2658 = vmatpush1.bf16.msra.mxu0 %v2635
        %2659 = vmatprep.subr.bf16.mxu0 0
        %2660 = vmatpush1.bf16.msra.mxu0 %v2636
        %2661 = vmatprep.subr.bf16.mxu0 0
        %2662 = vmatpush1.bf16.msra.mxu0 0
        %2663 = vmatprep.subr.bf16.mxu0 0
        %2664 = vmatpush1.bf16.msra.mxu0 0
        %2665 = vmatprep.subr.bf16.mxu0 0
        %2666 = vmatpush1.bf16.msra.mxu0 0
        %2667 = vmatprep.subr.bf16.mxu0 0
        %2668 = vmatpush1.bf16.msra.mxu0 0
        %2669 = vmatprep.subr.bf16.mxu0 0
        %2670 = vmatpush1.bf16.msra.mxu0 0
        %2671 = vmatprep.subr.bf16.mxu0 0
        %2672 = vmatpush1.bf16.msra.mxu0 0
        %2673 = vmatprep.subr.bf16.mxu0 0
        %2674 = vmatpush1.bf16.msra.mxu0 0
        %2675 = vmatprep.subr.bf16.mxu0 0
        %2676 = vmatpush1.bf16.msra.mxu0 0
        %2677 = vmatprep.mubr.bf16.mxu0 0
        %2678 = vmatmul.mubr.bf16.gmra.mrb[0].mxu0 %v2595
        %v2679 = vpop.f32.mrb[0].mxu0
        %v2680 = vadd.f32 0.0, %v2679
        %v2681 = vpop.f32.mrb[0].mxu0
        %v2682 = vpop.f32.mrb[0].mxu0
        %v2683 = vadd.f32 0.0, %v2682
        %v2684 = vpop.f32.mrb[0].mxu0
        %2685 = vdwg.mxu0
        %v2686 = vadd.f32 %v2568, %v2680
        %v2687 = vadd.f32 %v2571, %v2683
        %v2688 = vld [vmem:[#allocation3 + $0x8] sm:$0x3]
        %v2689 = vld [vmem:[#allocation8 + $0xc0] sm:$0xf]
        %v2690 = vld [vmem:[#allocation8 + $0xc4] sm:$0xf]
        %v2691 = vld [vmem:[#allocation8 + $0xc8] sm:$0xf]
        %v2692 = vld [vmem:[#allocation8 + $0xcc] sm:$0xf]
        %v2693 = vld [vmem:[#allocation8 + $0xd0] sm:$0xf]
        %v2694 = vld [vmem:[#allocation8 + $0xd4] sm:$0xf]
        %v2695 = vld [vmem:[#allocation8 + $0xd8] sm:$0xf]
        %v2696 = vld [vmem:[#allocation8 + $0xdc] sm:$0xf]
        %v2697 = vld [vmem:[#allocation8 + $0xe0] sm:$0xf]
        %v2698 = vld [vmem:[#allocation8 + $0xe4] sm:$0xf]
        %v2699 = vld [vmem:[#allocation8 + $0xe8] sm:$0xf]
        %v2700 = vld [vmem:[#allocation8 + $0xec] sm:$0xf]
        %v2701 = vld [vmem:[#allocation8 + $0xf0] sm:$0xf]
        %v2702 = vld [vmem:[#allocation8 + $0xf4] sm:$0xf]
        %v2703 = vld [vmem:[#allocation8 + $0xf8] sm:$0xf]
        %v2704 = vld [vmem:[#allocation8 + $0xfc] sm:$0xf]
        %v2706 = vshrl.u32 %v2574, 16
        %v2708 = vrot.slane %v2706, 1
        %v2709 = vshll.u32 %v2574, 16
        %v2711 = vrot.slane %v2709, 2
        %v2712 = vor.u32 %v2708, %v2711
        %v2714 = vshrl.u32 %v2688, 16
        %v2716 = vrot.slane %v2714, 1
        %v2717 = vshll.u32 %v2688, 16
        %v2719 = vrot.slane %v2717, 2
        %v2720 = vor.u32 %v2716, %v2719
        %v2721 = vsel %vm342, %v2712, %v2720
        %v2739 = vunpack.c.l.b16 %v2689
        %v2740 = vunpack.c.l.b16 %v2690
        %v2741 = vunpack.c.l.b16 %v2691
        %v2742 = vunpack.c.l.b16 %v2692
        %v2743 = vunpack.c.l.b16 %v2693
        %v2744 = vunpack.c.l.b16 %v2694
        %v2745 = vunpack.c.l.b16 %v2695
        %v2746 = vunpack.c.l.b16 %v2696
        %v2747 = vunpack.c.l.b16 %v2697
        %v2748 = vunpack.c.l.b16 %v2698
        %v2749 = vunpack.c.l.b16 %v2699
        %v2750 = vunpack.c.l.b16 %v2700
        %v2751 = vunpack.c.l.b16 %v2701
        %v2752 = vunpack.c.l.b16 %v2702
        %v2753 = vunpack.c.l.b16 %v2703
        %v2754 = vunpack.c.l.b16 %v2704
        %v2755 = vpack.c.b16 %v2740, %v2739
        %v2756 = vpack.c.b16 %v2742, %v2741
        %v2757 = vpack.c.b16 %v2744, %v2743
        %v2758 = vpack.c.b16 %v2746, %v2745
        %v2759 = vpack.c.b16 %v2748, %v2747
        %v2760 = vpack.c.b16 %v2750, %v2749
        %v2761 = vpack.c.b16 %v2752, %v2751
        %v2762 = vpack.c.b16 %v2754, %v2753
        %2771 = vmatprep.subr.bf16.mxu0 0
        %2772 = vmatpush1.bf16.msra.mxu0 %v2755
        %2773 = vmatprep.subr.bf16.mxu0 0
        %2774 = vmatpush1.bf16.msra.mxu0 %v2756
        %2775 = vmatprep.subr.bf16.mxu0 0
        %2776 = vmatpush1.bf16.msra.mxu0 %v2757
        %2777 = vmatprep.subr.bf16.mxu0 0
        %2778 = vmatpush1.bf16.msra.mxu0 %v2758
        %2779 = vmatprep.subr.bf16.mxu0 0
        %2780 = vmatpush1.bf16.msra.mxu0 %v2759
        %2781 = vmatprep.subr.bf16.mxu0 0
        %2782 = vmatpush1.bf16.msra.mxu0 %v2760
        %2783 = vmatprep.subr.bf16.mxu0 0
        %2784 = vmatpush1.bf16.msra.mxu0 %v2761
        %2785 = vmatprep.subr.bf16.mxu0 0
        %2786 = vmatpush1.bf16.msra.mxu0 %v2762
        %2787 = vmatprep.subr.bf16.mxu0 0
        %2788 = vmatpush1.bf16.msra.mxu0 0
        %2789 = vmatprep.subr.bf16.mxu0 0
        %2790 = vmatpush1.bf16.msra.mxu0 0
        %2791 = vmatprep.subr.bf16.mxu0 0
        %2792 = vmatpush1.bf16.msra.mxu0 0
        %2793 = vmatprep.subr.bf16.mxu0 0
        %2794 = vmatpush1.bf16.msra.mxu0 0
        %2795 = vmatprep.subr.bf16.mxu0 0
        %2796 = vmatpush1.bf16.msra.mxu0 0
        %2797 = vmatprep.subr.bf16.mxu0 0
        %2798 = vmatpush1.bf16.msra.mxu0 0
        %2799 = vmatprep.subr.bf16.mxu0 0
        %2800 = vmatpush1.bf16.msra.mxu0 0
        %2801 = vmatprep.subr.bf16.mxu0 0
        %2802 = vmatpush1.bf16.msra.mxu0 0
        %2803 = vmatprep.mubr.bf16.mxu0 0
        %2804 = vmatmul.mubr.bf16.gmra.mrb[0].mxu0 %v2721
        %v2805 = vpop.f32.mrb[0].mxu0
        %v2806 = vadd.f32 0.0, %v2805
        %v2807 = vpop.f32.mrb[0].mxu0
        %v2808 = vpop.f32.mrb[0].mxu0
        %v2809 = vadd.f32 0.0, %v2808
        %v2810 = vpop.f32.mrb[0].mxu0
        %2811 = vdwg.mxu0
        %v2812 = vadd.f32 %v2686, %v2806
        %v2813 = vadd.f32 %v2687, %v2809
        %v2814 = vld [vmem:[#allocation3] sm:$0xfc]
        %v2815 = vld [vmem:[#allocation8 + $0x100] sm:$0xf]
        %v2816 = vld [vmem:[#allocation8 + $0x104] sm:$0xf]
        %v2817 = vld [vmem:[#allocation8 + $0x108] sm:$0xf]
        %v2818 = vld [vmem:[#allocation8 + $0x10c] sm:$0xf]
        %v2819 = vld [vmem:[#allocation8 + $0x110] sm:$0xf]
        %v2820 = vld [vmem:[#allocation8 + $0x114] sm:$0xf]
        %v2821 = vld [vmem:[#allocation8 + $0x118] sm:$0xf]
        %v2822 = vld [vmem:[#allocation8 + $0x11c] sm:$0xf]
        %v2823 = vld [vmem:[#allocation8 + $0x120] sm:$0xf]
        %v2824 = vld [vmem:[#allocation8 + $0x124] sm:$0xf]
        %v2825 = vld [vmem:[#allocation8 + $0x128] sm:$0xf]
        %v2826 = vld [vmem:[#allocation8 + $0x12c] sm:$0xf]
        %v2827 = vld [vmem:[#allocation8 + $0x130] sm:$0xf]
        %v2828 = vld [vmem:[#allocation8 + $0x134] sm:$0xf]
        %v2829 = vld [vmem:[#allocation8 + $0x138] sm:$0xf]
        %v2830 = vld [vmem:[#allocation8 + $0x13c] sm:$0xf]
        %v2833 = vrot.slane %v2814, 2
        %v2834 = vrot.slane %v2688, 2
        %v2835 = vsel %vm589, %v2833, %v2834
        %v2853 = vunpack.c.l.b16 %v2815
        %v2854 = vunpack.c.l.b16 %v2816
        %v2855 = vunpack.c.l.b16 %v2817
        %v2856 = vunpack.c.l.b16 %v2818
        %v2857 = vunpack.c.l.b16 %v2819
        %v2858 = vunpack.c.l.b16 %v2820
        %v2859 = vunpack.c.l.b16 %v2821
        %v2860 = vunpack.c.l.b16 %v2822
        %v2861 = vunpack.c.l.b16 %v2823
        %v2862 = vunpack.c.l.b16 %v2824
        %v2863 = vunpack.c.l.b16 %v2825
        %v2864 = vunpack.c.l.b16 %v2826
        %v2865 = vunpack.c.l.b16 %v2827
        %v2866 = vunpack.c.l.b16 %v2828
        %v2867 = vunpack.c.l.b16 %v2829
        %v2868 = vunpack.c.l.b16 %v2830
        %v2869 = vpack.c.b16 %v2854, %v2853
        %v2870 = vpack.c.b16 %v2856, %v2855
        %v2871 = vpack.c.b16 %v2858, %v2857
        %v2872 = vpack.c.b16 %v2860, %v2859
        %v2873 = vpack.c.b16 %v2862, %v2861
        %v2874 = vpack.c.b16 %v2864, %v2863
        %v2875 = vpack.c.b16 %v2866, %v2865
        %v2876 = vpack.c.b16 %v2868, %v2867
        %2885 = vmatprep.subr.bf16.mxu0 0
        %2886 = vmatpush1.bf16.msra.mxu0 %v2869
        %2887 = vmatprep.subr.bf16.mxu0 0
        %2888 = vmatpush1.bf16.msra.mxu0 %v2870
        %2889 = vmatprep.subr.bf16.mxu0 0
        %2890 = vmatpush1.bf16.msra.mxu0 %v2871
        %2891 = vmatprep.subr.bf16.mxu0 0
        %2892 = vmatpush1.bf16.msra.mxu0 %v2872
        %2893 = vmatprep.subr.bf16.mxu0 0
        %2894 = vmatpush1.bf16.msra.mxu0 %v2873
        %2895 = vmatprep.subr.bf16.mxu0 0
        %2896 = vmatpush1.bf16.msra.mxu0 %v2874
        %2897 = vmatprep.subr.bf16.mxu0 0
        %2898 = vmatpush1.bf16.msra.mxu0 %v2875
        %2899 = vmatprep.subr.bf16.mxu0 0
        %2900 = vmatpush1.bf16.msra.mxu0 %v2876
        %2901 = vmatprep.subr.bf16.mxu0 0
        %2902 = vmatpush1.bf16.msra.mxu0 0
        %2903 = vmatprep.subr.bf16.mxu0 0
        %2904 = vmatpush1.bf16.msra.mxu0 0
        %2905 = vmatprep.subr.bf16.mxu0 0
        %2906 = vmatpush1.bf16.msra.mxu0 0
        %2907 = vmatprep.subr.bf16.mxu0 0
        %2908 = vmatpush1.bf16.msra.mxu0 0
        %2909 = vmatprep.subr.bf16.mxu0 0
        %2910 = vmatpush1.bf16.msra.mxu0 0
        %2911 = vmatprep.subr.bf16.mxu0 0
        %2912 = vmatpush1.bf16.msra.mxu0 0
        %2913 = vmatprep.subr.bf16.mxu0 0
        %2914 = vmatpush1.bf16.msra.mxu0 0
        %2915 = vmatprep.subr.bf16.mxu0 0
        %2916 = vmatpush1.bf16.msra.mxu0 0
        %2917 = vmatprep.mubr.bf16.mxu0 0
        %2918 = vmatmul.mubr.bf16.gmra.mrb[0].mxu0 %v2835
        %v2919 = vpop.f32.mrb[0].mxu0
        %v2920 = vadd.f32 0.0, %v2919
        %v2921 = vpop.f32.mrb[0].mxu0
        %v2922 = vpop.f32.mrb[0].mxu0
        %v2923 = vadd.f32 0.0, %v2922
        %v2924 = vpop.f32.mrb[0].mxu0
        %2925 = vdwg.mxu0
        %v2926 = vadd.f32 %v2812, %v2920
        %v2927 = vadd.f32 %v2813, %v2923
        %v2928 = vld [vmem:[#allocation3 + $0x8] sm:$0x7]
        %v2929 = vld [vmem:[#allocation8 + $0x140] sm:$0xf]
        %v2930 = vld [vmem:[#allocation8 + $0x144] sm:$0xf]
        %v2931 = vld [vmem:[#allocation8 + $0x148] sm:$0xf]
        %v2932 = vld [vmem:[#allocation8 + $0x14c] sm:$0xf]
        %v2933 = vld [vmem:[#allocation8 + $0x150] sm:$0xf]
        %v2934 = vld [vmem:[#allocation8 + $0x154] sm:$0xf]
        %v2935 = vld [vmem:[#allocation8 + $0x158] sm:$0xf]
        %v2936 = vld [vmem:[#allocation8 + $0x15c] sm:$0xf]
        %v2937 = vld [vmem:[#allocation8 + $0x160] sm:$0xf]
        %v2938 = vld [vmem:[#allocation8 + $0x164] sm:$0xf]
        %v2939 = vld [vmem:[#allocation8 + $0x168] sm:$0xf]
        %v2940 = vld [vmem:[#allocation8 + $0x16c] sm:$0xf]
        %v2941 = vld [vmem:[#allocation8 + $0x170] sm:$0xf]
        %v2942 = vld [vmem:[#allocation8 + $0x174] sm:$0xf]
        %v2943 = vld [vmem:[#allocation8 + $0x178] sm:$0xf]
        %v2944 = vld [vmem:[#allocation8 + $0x17c] sm:$0xf]
        %v2946 = vshrl.u32 %v2814, 16
        %v2948 = vrot.slane %v2946, 2
        %v2949 = vshll.u32 %v2814, 16
        %v2951 = vrot.slane %v2949, 3
        %v2952 = vor.u32 %v2948, %v2951
        %v2954 = vshrl.u32 %v2928, 16
        %v2956 = vrot.slane %v2954, 2
        %v2957 = vshll.u32 %v2928, 16
        %v2959 = vrot.slane %v2957, 3
        %v2960 = vor.u32 %v2956, %v2959
        %v2961 = vsel %vm715, %v2952, %v2960
        %v2979 = vunpack.c.l.b16 %v2929
        %v2980 = vunpack.c.l.b16 %v2930
        %v2981 = vunpack.c.l.b16 %v2931
        %v2982 = vunpack.c.l.b16 %v2932
        %v2983 = vunpack.c.l.b16 %v2933
        %v2984 = vunpack.c.l.b16 %v2934
        %v2985 = vunpack.c.l.b16 %v2935
        %v2986 = vunpack.c.l.b16 %v2936
        %v2987 = vunpack.c.l.b16 %v2937
        %v2988 = vunpack.c.l.b16 %v2938
        %v2989 = vunpack.c.l.b16 %v2939
        %v2990 = vunpack.c.l.b16 %v2940
        %v2991 = vunpack.c.l.b16 %v2941
        %v2992 = vunpack.c.l.b16 %v2942
        %v2993 = vunpack.c.l.b16 %v2943
        %v2994 = vunpack.c.l.b16 %v2944
        %v2995 = vpack.c.b16 %v2980, %v2979
        %v2996 = vpack.c.b16 %v2982, %v2981
        %v2997 = vpack.c.b16 %v2984, %v2983
        %v2998 = vpack.c.b16 %v2986, %v2985
        %v2999 = vpack.c.b16 %v2988, %v2987
        %v3000 = vpack.c.b16 %v2990, %v2989
        %v3001 = vpack.c.b16 %v2992, %v2991
        %v3002 = vpack.c.b16 %v2994, %v2993
        %3011 = vmatprep.subr.bf16.mxu0 0
        %3012 = vmatpush1.bf16.msra.mxu0 %v2995
        %3013 = vmatprep.subr.bf16.mxu0 0
        %3014 = vmatpush1.bf16.msra.mxu0 %v2996
        %3015 = vmatprep.subr.bf16.mxu0 0
        %3016 = vmatpush1.bf16.msra.mxu0 %v2997
        %3017 = vmatprep.subr.bf16.mxu0 0
        %3018 = vmatpush1.bf16.msra.mxu0 %v2998
        %3019 = vmatprep.subr.bf16.mxu0 0
        %3020 = vmatpush1.bf16.msra.mxu0 %v2999
        %3021 = vmatprep.subr.bf16.mxu0 0
        %3022 = vmatpush1.bf16.msra.mxu0 %v3000
        %3023 = vmatprep.subr.bf16.mxu0 0
        %3024 = vmatpush1.bf16.msra.mxu0 %v3001
        %3025 = vmatprep.subr.bf16.mxu0 0
        %3026 = vmatpush1.bf16.msra.mxu0 %v3002
        %3027 = vmatprep.subr.bf16.mxu0 0
        %3028 = vmatpush1.bf16.msra.mxu0 0
        %3029 = vmatprep.subr.bf16.mxu0 0
        %3030 = vmatpush1.bf16.msra.mxu0 0
        %3031 = vmatprep.subr.bf16.mxu0 0
        %3032 = vmatpush1.bf16.msra.mxu0 0
        %3033 = vmatprep.subr.bf16.mxu0 0
        %3034 = vmatpush1.bf16.msra.mxu0 0
        %3035 = vmatprep.subr.bf16.mxu0 0
        %3036 = vmatpush1.bf16.msra.mxu0 0
        %3037 = vmatprep.subr.bf16.mxu0 0
        %3038 = vmatpush1.bf16.msra.mxu0 0
        %3039 = vmatprep.subr.bf16.mxu0 0
        %3040 = vmatpush1.bf16.msra.mxu0 0
        %3041 = vmatprep.subr.bf16.mxu0 0
        %3042 = vmatpush1.bf16.msra.mxu0 0
        %3043 = vmatprep.mubr.bf16.mxu0 0
        %3044 = vmatmul.mubr.bf16.gmra.mrb[0].mxu0 %v2961
        %v3045 = vpop.f32.mrb[0].mxu0
        %v3046 = vadd.f32 0.0, %v3045
        %v3047 = vpop.f32.mrb[0].mxu0
        %v3048 = vpop.f32.mrb[0].mxu0
        %v3049 = vadd.f32 0.0, %v3048
        %v3050 = vpop.f32.mrb[0].mxu0
        %3051 = vdwg.mxu0
        %v3052 = vadd.f32 %v2926, %v3046
        %v3053 = vadd.f32 %v2927, %v3049
        %v3054 = vld [vmem:[#allocation3] sm:$0xf8]
        %v3055 = vld [vmem:[#allocation8 + $0x180] sm:$0xf]
        %v3056 = vld [vmem:[#allocation8 + $0x184] sm:$0xf]
        %v3057 = vld [vmem:[#allocation8 + $0x188] sm:$0xf]
        %v3058 = vld [vmem:[#allocation8 + $0x18c] sm:$0xf]
        %v3059 = vld [vmem:[#allocation8 + $0x190] sm:$0xf]
        %v3060 = vld [vmem:[#allocation8 + $0x194] sm:$0xf]
        %v3061 = vld [vmem:[#allocation8 + $0x198] sm:$0xf]
        %v3062 = vld [vmem:[#allocation8 + $0x19c] sm:$0xf]
        %v3063 = vld [vmem:[#allocation8 + $0x1a0] sm:$0xf]
        %v3064 = vld [vmem:[#allocation8 + $0x1a4] sm:$0xf]
        %v3065 = vld [vmem:[#allocation8 + $0x1a8] sm:$0xf]
        %v3066 = vld [vmem:[#allocation8 + $0x1ac] sm:$0xf]
        %v3067 = vld [vmem:[#allocation8 + $0x1b0] sm:$0xf]
        %v3068 = vld [vmem:[#allocation8 + $0x1b4] sm:$0xf]
        %v3069 = vld [vmem:[#allocation8 + $0x1b8] sm:$0xf]
        %v3070 = vld [vmem:[#allocation8 + $0x1bc] sm:$0xf]
        %v3073 = vrot.slane %v3054, 3
        %v3074 = vrot.slane %v2928, 3
        %v3075 = vsel %vm859, %v3073, %v3074
        %v3093 = vunpack.c.l.b16 %v3055
        %v3094 = vunpack.c.l.b16 %v3056
        %v3095 = vunpack.c.l.b16 %v3057
        %v3096 = vunpack.c.l.b16 %v3058
        %v3097 = vunpack.c.l.b16 %v3059
        %v3098 = vunpack.c.l.b16 %v3060
        %v3099 = vunpack.c.l.b16 %v3061
        %v3100 = vunpack.c.l.b16 %v3062
        %v3101 = vunpack.c.l.b16 %v3063
        %v3102 = vunpack.c.l.b16 %v3064
        %v3103 = vunpack.c.l.b16 %v3065
        %v3104 = vunpack.c.l.b16 %v3066
        %v3105 = vunpack.c.l.b16 %v3067
        %v3106 = vunpack.c.l.b16 %v3068
        %v3107 = vunpack.c.l.b16 %v3069
        %v3108 = vunpack.c.l.b16 %v3070
        %v3109 = vpack.c.b16 %v3094, %v3093
        %v3110 = vpack.c.b16 %v3096, %v3095
        %v3111 = vpack.c.b16 %v3098, %v3097
        %v3112 = vpack.c.b16 %v3100, %v3099
        %v3113 = vpack.c.b16 %v3102, %v3101
        %v3114 = vpack.c.b16 %v3104, %v3103
        %v3115 = vpack.c.b16 %v3106, %v3105
        %v3116 = vpack.c.b16 %v3108, %v3107
        %3125 = vmatprep.subr.bf16.mxu0 0
        %3126 = vmatpush1.bf16.msra.mxu0 %v3109
        %3127 = vmatprep.subr.bf16.mxu0 0
        %3128 = vmatpush1.bf16.msra.mxu0 %v3110
        %3129 = vmatprep.subr.bf16.mxu0 0
        %3130 = vmatpush1.bf16.msra.mxu0 %v3111
        %3131 = vmatprep.subr.bf16.mxu0 0
        %3132 = vmatpush1.bf16.msra.mxu0 %v3112
        %3133 = vmatprep.subr.bf16.mxu0 0
        %3134 = vmatpush1.bf16.msra.mxu0 %v3113
        %3135 = vmatprep.subr.bf16.mxu0 0
        %3136 = vmatpush1.bf16.msra.mxu0 %v3114
        %3137 = vmatprep.subr.bf16.mxu0 0
        %3138 = vmatpush1.bf16.msra.mxu0 %v3115
        %3139 = vmatprep.subr.bf16.mxu0 0
        %3140 = vmatpush1.bf16.msra.mxu0 %v3116
        %3141 = vmatprep.subr.bf16.mxu0 0
        %3142 = vmatpush1.bf16.msra.mxu0 0
        %3143 = vmatprep.subr.bf16.mxu0 0
        %3144 = vmatpush1.bf16.msra.mxu0 0
        %3145 = vmatprep.subr.bf16.mxu0 0
        %3146 = vmatpush1.bf16.msra.mxu0 0
        %3147 = vmatprep.subr.bf16.mxu0 0
        %3148 = vmatpush1.bf16.msra.mxu0 0
        %3149 = vmatprep.subr.bf16.mxu0 0
        %3150 = vmatpush1.bf16.msra.mxu0 0
        %3151 = vmatprep.subr.bf16.mxu0 0
        %3152 = vmatpush1.bf16.msra.mxu0 0
        %3153 = vmatprep.subr.bf16.mxu0 0
        %3154 = vmatpush1.bf16.msra.mxu0 0
        %3155 = vmatprep.subr.bf16.mxu0 0
        %3156 = vmatpush1.bf16.msra.mxu0 0
        %3157 = vmatprep.mubr.bf16.mxu0 0
        %3158 = vmatmul.mubr.bf16.gmra.mrb[0].mxu0 %v3075
        %v3159 = vpop.f32.mrb[0].mxu0
        %v3160 = vadd.f32 0.0, %v3159
        %v3161 = vpop.f32.mrb[0].mxu0
        %v3162 = vpop.f32.mrb[0].mxu0
        %v3163 = vadd.f32 0.0, %v3162
        %v3164 = vpop.f32.mrb[0].mxu0
        %3165 = vdwg.mxu0
        %v3166 = vadd.f32 %v3052, %v3160
        %v3167 = vadd.f32 %v3053, %v3163
        %v3168 = vld [vmem:[#allocation3 + $0x8] sm:$0xf]
        %v3169 = vld [vmem:[#allocation8 + $0x1c0] sm:$0xf]
        %v3170 = vld [vmem:[#allocation8 + $0x1c4] sm:$0xf]
        %v3171 = vld [vmem:[#allocation8 + $0x1c8] sm:$0xf]
        %v3172 = vld [vmem:[#allocation8 + $0x1cc] sm:$0xf]
        %v3173 = vld [vmem:[#allocation8 + $0x1d0] sm:$0xf]
        %v3174 = vld [vmem:[#allocation8 + $0x1d4] sm:$0xf]
        %v3175 = vld [vmem:[#allocation8 + $0x1d8] sm:$0xf]
        %v3176 = vld [vmem:[#allocation8 + $0x1dc] sm:$0xf]
        %v3177 = vld [vmem:[#allocation8 + $0x1e0] sm:$0xf]
        %v3178 = vld [vmem:[#allocation8 + $0x1e4] sm:$0xf]
        %v3179 = vld [vmem:[#allocation8 + $0x1e8] sm:$0xf]
        %v3180 = vld [vmem:[#allocation8 + $0x1ec] sm:$0xf]
        %v3181 = vld [vmem:[#allocation8 + $0x1f0] sm:$0xf]
        %v3182 = vld [vmem:[#allocation8 + $0x1f4] sm:$0xf]
        %v3183 = vld [vmem:[#allocation8 + $0x1f8] sm:$0xf]
        %v3184 = vld [vmem:[#allocation8 + $0x1fc] sm:$0xf]
        %v3186 = vshrl.u32 %v3054, 16
        %v3188 = vrot.slane %v3186, 3
        %v3189 = vshll.u32 %v3054, 16
        %v3191 = vrot.slane %v3189, 4
        %v3192 = vor.u32 %v3188, %v3191
        %v3194 = vshrl.u32 %v3168, 16
        %v3196 = vrot.slane %v3194, 3
        %v3197 = vshll.u32 %v3168, 16
        %v3199 = vrot.slane %v3197, 4
        %v3200 = vor.u32 %v3196, %v3199
        %v3201 = vsel %vm985, %v3192, %v3200
        %v3219 = vunpack.c.l.b16 %v3169
        %v3220 = vunpack.c.l.b16 %v3170
        %v3221 = vunpack.c.l.b16 %v3171
        %v3222 = vunpack.c.l.b16 %v3172
        %v3223 = vunpack.c.l.b16 %v3173
        %v3224 = vunpack.c.l.b16 %v3174
        %v3225 = vunpack.c.l.b16 %v3175
        %v3226 = vunpack.c.l.b16 %v3176
        %v3227 = vunpack.c.l.b16 %v3177
        %v3228 = vunpack.c.l.b16 %v3178
        %v3229 = vunpack.c.l.b16 %v3179
        %v3230 = vunpack.c.l.b16 %v3180
        %v3231 = vunpack.c.l.b16 %v3181
        %v3232 = vunpack.c.l.b16 %v3182
        %v3233 = vunpack.c.l.b16 %v3183
        %v3234 = vunpack.c.l.b16 %v3184
        %v3235 = vpack.c.b16 %v3220, %v3219
        %v3236 = vpack.c.b16 %v3222, %v3221
        %v3237 = vpack.c.b16 %v3224, %v3223
        %v3238 = vpack.c.b16 %v3226, %v3225
        %v3239 = vpack.c.b16 %v3228, %v3227
        %v3240 = vpack.c.b16 %v3230, %v3229
        %v3241 = vpack.c.b16 %v3232, %v3231
        %v3242 = vpack.c.b16 %v3234, %v3233
        %3251 = vmatprep.subr.bf16.mxu0 0
        %3252 = vmatpush1.bf16.msra.mxu0 %v3235
        %3253 = vmatprep.subr.bf16.mxu0 0
        %3254 = vmatpush1.bf16.msra.mxu0 %v3236
        %3255 = vmatprep.subr.bf16.mxu0 0
        %3256 = vmatpush1.bf16.msra.mxu0 %v3237
        %3257 = vmatprep.subr.bf16.mxu0 0
        %3258 = vmatpush1.bf16.msra.mxu0 %v3238
        %3259 = vmatprep.subr.bf16.mxu0 0
        %3260 = vmatpush1.bf16.msra.mxu0 %v3239
        %3261 = vmatprep.subr.bf16.mxu0 0
        %3262 = vmatpush1.bf16.msra.mxu0 %v3240
        %3263 = vmatprep.subr.bf16.mxu0 0
        %3264 = vmatpush1.bf16.msra.mxu0 %v3241
        %3265 = vmatprep.subr.bf16.mxu0 0
        %3266 = vmatpush1.bf16.msra.mxu0 %v3242
        %3267 = vmatprep.subr.bf16.mxu0 0
        %3268 = vmatpush1.bf16.msra.mxu0 0
        %3269 = vmatprep.subr.bf16.mxu0 0
        %3270 = vmatpush1.bf16.msra.mxu0 0
        %3271 = vmatprep.subr.bf16.mxu0 0
        %3272 = vmatpush1.bf16.msra.mxu0 0
        %3273 = vmatprep.subr.bf16.mxu0 0
        %3274 = vmatpush1.bf16.msra.mxu0 0
        %3275 = vmatprep.subr.bf16.mxu0 0
        %3276 = vmatpush1.bf16.msra.mxu0 0
        %3277 = vmatprep.subr.bf16.mxu0 0
        %3278 = vmatpush1.bf16.msra.mxu0 0
        %3279 = vmatprep.subr.bf16.mxu0 0
        %3280 = vmatpush1.bf16.msra.mxu0 0
        %3281 = vmatprep.subr.bf16.mxu0 0
        %3282 = vmatpush1.bf16.msra.mxu0 0
        %3283 = vmatprep.mubr.bf16.mxu0 0
        %3284 = vmatmul.mubr.bf16.gmra.mrb[0].mxu0 %v3201
        %v3285 = vpop.f32.mrb[0].mxu0
        %v3286 = vadd.f32 0.0, %v3285
        %v3287 = vpop.f32.mrb[0].mxu0
        %v3288 = vpop.f32.mrb[0].mxu0
        %v3289 = vadd.f32 0.0, %v3288
        %v3290 = vpop.f32.mrb[0].mxu0
        %3291 = vdwg.mxu0
        %v3292 = vadd.f32 %v3166, %v3286
        %v3293 = vadd.f32 %v3167, %v3289
        %v3294 = vld [vmem:[#allocation3] sm:$0xf0]
        %v3295 = vld [vmem:[#allocation8 + $0x200] sm:$0xf]
        %v3296 = vld [vmem:[#allocation8 + $0x204] sm:$0xf]
        %v3297 = vld [vmem:[#allocation8 + $0x208] sm:$0xf]
        %v3298 = vld [vmem:[#allocation8 + $0x20c] sm:$0xf]
        %v3299 = vld [vmem:[#allocation8 + $0x210] sm:$0xf]
        %v3300 = vld [vmem:[#allocation8 + $0x214] sm:$0xf]
        %v3301 = vld [vmem:[#allocation8 + $0x218] sm:$0xf]
        %v3302 = vld [vmem:[#allocation8 + $0x21c] sm:$0xf]
        %v3303 = vld [vmem:[#allocation8 + $0x220] sm:$0xf]
        %v3304 = vld [vmem:[#allocation8 + $0x224] sm:$0xf]
        %v3305 = vld [vmem:[#allocation8 + $0x228] sm:$0xf]
        %v3306 = vld [vmem:[#allocation8 + $0x22c] sm:$0xf]
        %v3307 = vld [vmem:[#allocation8 + $0x230] sm:$0xf]
        %v3308 = vld [vmem:[#allocation8 + $0x234] sm:$0xf]
        %v3309 = vld [vmem:[#allocation8 + $0x238] sm:$0xf]
        %v3310 = vld [vmem:[#allocation8 + $0x23c] sm:$0xf]
        %v3313 = vrot.slane %v3294, 4
        %v3314 = vrot.slane %v3168, 4
        %v3315 = vsel %vm1129, %v3313, %v3314
        %v3333 = vunpack.c.l.b16 %v3295
        %v3334 = vunpack.c.l.b16 %v3296
        %v3335 = vunpack.c.l.b16 %v3297
        %v3336 = vunpack.c.l.b16 %v3298
        %v3337 = vunpack.c.l.b16 %v3299
        %v3338 = vunpack.c.l.b16 %v3300
        %v3339 = vunpack.c.l.b16 %v3301
        %v3340 = vunpack.c.l.b16 %v3302
        %v3341 = vunpack.c.l.b16 %v3303
        %v3342 = vunpack.c.l.b16 %v3304
        %v3343 = vunpack.c.l.b16 %v3305
        %v3344 = vunpack.c.l.b16 %v3306
        %v3345 = vunpack.c.l.b16 %v3307
        %v3346 = vunpack.c.l.b16 %v3308
        %v3347 = vunpack.c.l.b16 %v3309
        %v3348 = vunpack.c.l.b16 %v3310
        %v3349 = vpack.c.b16 %v3334, %v3333
        %v3350 = vpack.c.b16 %v3336, %v3335
        %v3351 = vpack.c.b16 %v3338, %v3337
        %v3352 = vpack.c.b16 %v3340, %v3339
        %v3353 = vpack.c.b16 %v3342, %v3341
        %v3354 = vpack.c.b16 %v3344, %v3343
        %v3355 = vpack.c.b16 %v3346, %v3345
        %v3356 = vpack.c.b16 %v3348, %v3347
        %3365 = vmatprep.subr.bf16.mxu0 0
        %3366 = vmatpush1.bf16.msra.mxu0 %v3349
        %3367 = vmatprep.subr.bf16.mxu0 0
        %3368 = vmatpush1.bf16.msra.mxu0 %v3350
        %3369 = vmatprep.subr.bf16.mxu0 0
        %3370 = vmatpush1.bf16.msra.mxu0 %v3351
        %3371 = vmatprep.subr.bf16.mxu0 0
        %3372 = vmatpush1.bf16.msra.mxu0 %v3352
        %3373 = vmatprep.subr.bf16.mxu0 0
        %3374 = vmatpush1.bf16.msra.mxu0 %v3353
        %3375 = vmatprep.subr.bf16.mxu0 0
        %3376 = vmatpush1.bf16.msra.mxu0 %v3354
        %3377 = vmatprep.subr.bf16.mxu0 0
        %3378 = vmatpush1.bf16.msra.mxu0 %v3355
        %3379 = vmatprep.subr.bf16.mxu0 0
        %3380 = vmatpush1.bf16.msra.mxu0 %v3356
        %3381 = vmatprep.subr.bf16.mxu0 0
        %3382 = vmatpush1.bf16.msra.mxu0 0
        %3383 = vmatprep.subr.bf16.mxu0 0
        %3384 = vmatpush1.bf16.msra.mxu0 0
        %3385 = vmatprep.subr.bf16.mxu0 0
        %3386 = vmatpush1.bf16.msra.mxu0 0
        %3387 = vmatprep.subr.bf16.mxu0 0
        %3388 = vmatpush1.bf16.msra.mxu0 0
        %3389 = vmatprep.subr.bf16.mxu0 0
        %3390 = vmatpush1.bf16.msra.mxu0 0
        %3391 = vmatprep.subr.bf16.mxu0 0
        %3392 = vmatpush1.bf16.msra.mxu0 0
        %3393 = vmatprep.subr.bf16.mxu0 0
        %3394 = vmatpush1.bf16.msra.mxu0 0
        %3395 = vmatprep.subr.bf16.mxu0 0
        %3396 = vmatpush1.bf16.msra.mxu0 0
        %3397 = vmatprep.mubr.bf16.mxu0 0
        %3398 = vmatmul.mubr.bf16.gmra.mrb[0].mxu0 %v3315
        %v3399 = vpop.f32.mrb[0].mxu0
        %v3400 = vadd.f32 0.0, %v3399
        %v3401 = vpop.f32.mrb[0].mxu0
        %v3402 = vpop.f32.mrb[0].mxu0
        %v3403 = vadd.f32 0.0, %v3402
        %v3404 = vpop.f32.mrb[0].mxu0
        %3405 = vdwg.mxu0
        %v3406 = vadd.f32 %v3292, %v3400
        %v3407 = vadd.f32 %v3293, %v3403
        %v3408 = vld [vmem:[#allocation3 + $0x8] sm:$0x1f]
        %v3409 = vld [vmem:[#allocation8 + $0x240] sm:$0xf]
        %v3410 = vld [vmem:[#allocation8 + $0x244] sm:$0xf]
        %v3411 = vld [vmem:[#allocation8 + $0x248] sm:$0xf]
        %v3412 = vld [vmem:[#allocation8 + $0x24c] sm:$0xf]
        %v3413 = vld [vmem:[#allocation8 + $0x250] sm:$0xf]
        %v3414 = vld [vmem:[#allocation8 + $0x254] sm:$0xf]
        %v3415 = vld [vmem:[#allocation8 + $0x258] sm:$0xf]
        %v3416 = vld [vmem:[#allocation8 + $0x25c] sm:$0xf]
        %v3417 = vld [vmem:[#allocation8 + $0x260] sm:$0xf]
        %v3418 = vld [vmem:[#allocation8 + $0x264] sm:$0xf]
        %v3419 = vld [vmem:[#allocation8 + $0x268] sm:$0xf]
        %v3420 = vld [vmem:[#allocation8 + $0x26c] sm:$0xf]
        %v3421 = vld [vmem:[#allocation8 + $0x270] sm:$0xf]
        %v3422 = vld [vmem:[#allocation8 + $0x274] sm:$0xf]
        %v3423 = vld [vmem:[#allocation8 + $0x278] sm:$0xf]
        %v3424 = vld [vmem:[#allocation8 + $0x27c] sm:$0xf]
        %v3426 = vshrl.u32 %v3294, 16
        %v3428 = vrot.slane %v3426, 4
        %v3429 = vshll.u32 %v3294, 16
        %v3431 = vrot.slane %v3429, 5
        %v3432 = vor.u32 %v3428, %v3431
        %v3434 = vshrl.u32 %v3408, 16
        %v3436 = vrot.slane %v3434, 4
        %v3437 = vshll.u32 %v3408, 16
        %v3439 = vrot.slane %v3437, 5
        %v3440 = vor.u32 %v3436, %v3439
        %v3441 = vsel %vm1255, %v3432, %v3440
        %v3459 = vunpack.c.l.b16 %v3409
        %v3460 = vunpack.c.l.b16 %v3410
        %v3461 = vunpack.c.l.b16 %v3411
        %v3462 = vunpack.c.l.b16 %v3412
        %v3463 = vunpack.c.l.b16 %v3413
        %v3464 = vunpack.c.l.b16 %v3414
        %v3465 = vunpack.c.l.b16 %v3415
        %v3466 = vunpack.c.l.b16 %v3416
        %v3467 = vunpack.c.l.b16 %v3417
        %v3468 = vunpack.c.l.b16 %v3418
        %v3469 = vunpack.c.l.b16 %v3419
        %v3470 = vunpack.c.l.b16 %v3420
        %v3471 = vunpack.c.l.b16 %v3421
        %v3472 = vunpack.c.l.b16 %v3422
        %v3473 = vunpack.c.l.b16 %v3423
        %v3474 = vunpack.c.l.b16 %v3424
        %v3475 = vpack.c.b16 %v3460, %v3459
        %v3476 = vpack.c.b16 %v3462, %v3461
        %v3477 = vpack.c.b16 %v3464, %v3463
        %v3478 = vpack.c.b16 %v3466, %v3465
        %v3479 = vpack.c.b16 %v3468, %v3467
        %v3480 = vpack.c.b16 %v3470, %v3469
        %v3481 = vpack.c.b16 %v3472, %v3471
        %v3482 = vpack.c.b16 %v3474, %v3473
        %3491 = vmatprep.subr.bf16.mxu0 0
        %3492 = vmatpush1.bf16.msra.mxu0 %v3475
        %3493 = vmatprep.subr.bf16.mxu0 0
        %3494 = vmatpush1.bf16.msra.mxu0 %v3476
        %3495 = vmatprep.subr.bf16.mxu0 0
        %3496 = vmatpush1.bf16.msra.mxu0 %v3477
        %3497 = vmatprep.subr.bf16.mxu0 0
        %3498 = vmatpush1.bf16.msra.mxu0 %v3478
        %3499 = vmatprep.subr.bf16.mxu0 0
        %3500 = vmatpush1.bf16.msra.mxu0 %v3479
        %3501 = vmatprep.subr.bf16.mxu0 0
        %3502 = vmatpush1.bf16.msra.mxu0 %v3480
        %3503 = vmatprep.subr.bf16.mxu0 0
        %3504 = vmatpush1.bf16.msra.mxu0 %v3481
        %3505 = vmatprep.subr.bf16.mxu0 0
        %3506 = vmatpush1.bf16.msra.mxu0 %v3482
        %3507 = vmatprep.subr.bf16.mxu0 0
        %3508 = vmatpush1.bf16.msra.mxu0 0
        %3509 = vmatprep.subr.bf16.mxu0 0
        %3510 = vmatpush1.bf16.msra.mxu0 0
        %3511 = vmatprep.subr.bf16.mxu0 0
        %3512 = vmatpush1.bf16.msra.mxu0 0
        %3513 = vmatprep.subr.bf16.mxu0 0
        %3514 = vmatpush1.bf16.msra.mxu0 0
        %3515 = vmatprep.subr.bf16.mxu0 0
        %3516 = vmatpush1.bf16.msra.mxu0 0
        %3517 = vmatprep.subr.bf16.mxu0 0
        %3518 = vmatpush1.bf16.msra.mxu0 0
        %3519 = vmatprep.subr.bf16.mxu0 0
        %3520 = vmatpush1.bf16.msra.mxu0 0
        %3521 = vmatprep.subr.bf16.mxu0 0
        %3522 = vmatpush1.bf16.msra.mxu0 0
        %3523 = vmatprep.mubr.bf16.mxu0 0
        %3524 = vmatmul.mubr.bf16.gmra.mrb[0].mxu0 %v3441
        %v3525 = vpop.f32.mrb[0].mxu0
        %v3526 = vadd.f32 0.0, %v3525
        %v3527 = vpop.f32.mrb[0].mxu0
        %v3528 = vpop.f32.mrb[0].mxu0
        %v3529 = vadd.f32 0.0, %v3528
        %v3530 = vpop.f32.mrb[0].mxu0
        %3531 = vdwg.mxu0
        %v3532 = vadd.f32 %v3406, %v3526
        %v3533 = vadd.f32 %v3407, %v3529
        %v3534 = vld [vmem:[#allocation3] sm:$0xe0]
        %v3535 = vld [vmem:[#allocation8 + $0x280] sm:$0xf]
        %v3536 = vld [vmem:[#allocation8 + $0x284] sm:$0xf]
        %v3537 = vld [vmem:[#allocation8 + $0x288] sm:$0xf]
        %v3538 = vld [vmem:[#allocation8 + $0x28c] sm:$0xf]
        %v3539 = vld [vmem:[#allocation8 + $0x290] sm:$0xf]
        %v3540 = vld [vmem:[#allocation8 + $0x294] sm:$0xf]
        %v3541 = vld [vmem:[#allocation8 + $0x298] sm:$0xf]
        %v3542 = vld [vmem:[#allocation8 + $0x29c] sm:$0xf]
        %v3543 = vld [vmem:[#allocation8 + $0x2a0] sm:$0xf]
        %v3544 = vld [vmem:[#allocation8 + $0x2a4] sm:$0xf]
        %v3545 = vld [vmem:[#allocation8 + $0x2a8] sm:$0xf]
        %v3546 = vld [vmem:[#allocation8 + $0x2ac] sm:$0xf]
        %v3547 = vld [vmem:[#allocation8 + $0x2b0] sm:$0xf]
        %v3548 = vld [vmem:[#allocation8 + $0x2b4] sm:$0xf]
        %v3549 = vld [vmem:[#allocation8 + $0x2b8] sm:$0xf]
        %v3550 = vld [vmem:[#allocation8 + $0x2bc] sm:$0xf]
        %v3553 = vrot.slane %v3534, 5
        %v3554 = vrot.slane %v3408, 5
        %v3555 = vsel %vm1399, %v3553, %v3554
        %v3573 = vunpack.c.l.b16 %v3535
        %v3574 = vunpack.c.l.b16 %v3536
        %v3575 = vunpack.c.l.b16 %v3537
        %v3576 = vunpack.c.l.b16 %v3538
        %v3577 = vunpack.c.l.b16 %v3539
        %v3578 = vunpack.c.l.b16 %v3540
        %v3579 = vunpack.c.l.b16 %v3541
        %v3580 = vunpack.c.l.b16 %v3542
        %v3581 = vunpack.c.l.b16 %v3543
        %v3582 = vunpack.c.l.b16 %v3544
        %v3583 = vunpack.c.l.b16 %v3545
        %v3584 = vunpack.c.l.b16 %v3546
        %v3585 = vunpack.c.l.b16 %v3547
        %v3586 = vunpack.c.l.b16 %v3548
        %v3587 = vunpack.c.l.b16 %v3549
        %v3588 = vunpack.c.l.b16 %v3550
        %v3589 = vpack.c.b16 %v3574, %v3573
        %v3590 = vpack.c.b16 %v3576, %v3575
        %v3591 = vpack.c.b16 %v3578, %v3577
        %v3592 = vpack.c.b16 %v3580, %v3579
        %v3593 = vpack.c.b16 %v3582, %v3581
        %v3594 = vpack.c.b16 %v3584, %v3583
        %v3595 = vpack.c.b16 %v3586, %v3585
        %v3596 = vpack.c.b16 %v3588, %v3587
        %3605 = vmatprep.subr.bf16.mxu0 0
        %3606 = vmatpush1.bf16.msra.mxu0 %v3589
        %3607 = vmatprep.subr.bf16.mxu0 0
        %3608 = vmatpush1.bf16.msra.mxu0 %v3590
        %3609 = vmatprep.subr.bf16.mxu0 0
        %3610 = vmatpush1.bf16.msra.mxu0 %v3591
        %3611 = vmatprep.subr.bf16.mxu0 0
        %3612 = vmatpush1.bf16.msra.mxu0 %v3592
        %3613 = vmatprep.subr.bf16.mxu0 0
        %3614 = vmatpush1.bf16.msra.mxu0 %v3593
        %3615 = vmatprep.subr.bf16.mxu0 0
        %3616 = vmatpush1.bf16.msra.mxu0 %v3594
        %3617 = vmatprep.subr.bf16.mxu0 0
        %3618 = vmatpush1.bf16.msra.mxu0 %v3595
        %3619 = vmatprep.subr.bf16.mxu0 0
        %3620 = vmatpush1.bf16.msra.mxu0 %v3596
        %3621 = vmatprep.subr.bf16.mxu0 0
        %3622 = vmatpush1.bf16.msra.mxu0 0
        %3623 = vmatprep.subr.bf16.mxu0 0
        %3624 = vmatpush1.bf16.msra.mxu0 0
        %3625 = vmatprep.subr.bf16.mxu0 0
        %3626 = vmatpush1.bf16.msra.mxu0 0
        %3627 = vmatprep.subr.bf16.mxu0 0
        %3628 = vmatpush1.bf16.msra.mxu0 0
        %3629 = vmatprep.subr.bf16.mxu0 0
        %3630 = vmatpush1.bf16.msra.mxu0 0
        %3631 = vmatprep.subr.bf16.mxu0 0
        %3632 = vmatpush1.bf16.msra.mxu0 0
        %3633 = vmatprep.subr.bf16.mxu0 0
        %3634 = vmatpush1.bf16.msra.mxu0 0
        %3635 = vmatprep.subr.bf16.mxu0 0
        %3636 = vmatpush1.bf16.msra.mxu0 0
        %3637 = vmatprep.mubr.bf16.mxu0 0
        %3638 = vmatmul.mubr.bf16.gmra.mrb[0].mxu0 %v3555
        %v3639 = vpop.f32.mrb[0].mxu0
        %v3640 = vadd.f32 0.0, %v3639
        %v3641 = vpop.f32.mrb[0].mxu0
        %v3642 = vpop.f32.mrb[0].mxu0
        %v3643 = vadd.f32 0.0, %v3642
        %v3644 = vpop.f32.mrb[0].mxu0
        %3645 = vdwg.mxu0
        %v3646 = vadd.f32 %v3532, %v3640
        %v3647 = vadd.f32 %v3533, %v3643
        %v3648 = vld [vmem:[#allocation3 + $0x8] sm:$0x3f]
        %v3649 = vld [vmem:[#allocation8 + $0x2c0] sm:$0xf]
        %v3650 = vld [vmem:[#allocation8 + $0x2c4] sm:$0xf]
        %v3651 = vld [vmem:[#allocation8 + $0x2c8] sm:$0xf]
        %v3652 = vld [vmem:[#allocation8 + $0x2cc] sm:$0xf]
        %v3653 = vld [vmem:[#allocation8 + $0x2d0] sm:$0xf]
        %v3654 = vld [vmem:[#allocation8 + $0x2d4] sm:$0xf]
        %v3655 = vld [vmem:[#allocation8 + $0x2d8] sm:$0xf]
        %v3656 = vld [vmem:[#allocation8 + $0x2dc] sm:$0xf]
        %v3657 = vld [vmem:[#allocation8 + $0x2e0] sm:$0xf]
        %v3658 = vld [vmem:[#allocation8 + $0x2e4] sm:$0xf]
        %v3659 = vld [vmem:[#allocation8 + $0x2e8] sm:$0xf]
        %v3660 = vld [vmem:[#allocation8 + $0x2ec] sm:$0xf]
        %v3661 = vld [vmem:[#allocation8 + $0x2f0] sm:$0xf]
        %v3662 = vld [vmem:[#allocation8 + $0x2f4] sm:$0xf]
        %v3663 = vld [vmem:[#allocation8 + $0x2f8] sm:$0xf]
        %v3664 = vld [vmem:[#allocation8 + $0x2fc] sm:$0xf]
        %v3666 = vshrl.u32 %v3534, 16
        %v3668 = vrot.slane %v3666, 5
        %v3669 = vshll.u32 %v3534, 16
        %v3671 = vrot.slane %v3669, 6
        %v3672 = vor.u32 %v3668, %v3671
        %v3674 = vshrl.u32 %v3648, 16
        %v3676 = vrot.slane %v3674, 5
        %v3677 = vshll.u32 %v3648, 16
        %v3679 = vrot.slane %v3677, 6
        %v3680 = vor.u32 %v3676, %v3679
        %v3681 = vsel %vm1525, %v3672, %v3680
        %v3699 = vunpack.c.l.b16 %v3649
        %v3700 = vunpack.c.l.b16 %v3650
        %v3701 = vunpack.c.l.b16 %v3651
        %v3702 = vunpack.c.l.b16 %v3652
        %v3703 = vunpack.c.l.b16 %v3653
        %v3704 = vunpack.c.l.b16 %v3654
        %v3705 = vunpack.c.l.b16 %v3655
        %v3706 = vunpack.c.l.b16 %v3656
        %v3707 = vunpack.c.l.b16 %v3657
        %v3708 = vunpack.c.l.b16 %v3658
        %v3709 = vunpack.c.l.b16 %v3659
        %v3710 = vunpack.c.l.b16 %v3660
        %v3711 = vunpack.c.l.b16 %v3661
        %v3712 = vunpack.c.l.b16 %v3662
        %v3713 = vunpack.c.l.b16 %v3663
        %v3714 = vunpack.c.l.b16 %v3664
        %v3715 = vpack.c.b16 %v3700, %v3699
        %v3716 = vpack.c.b16 %v3702, %v3701
        %v3717 = vpack.c.b16 %v3704, %v3703
        %v3718 = vpack.c.b16 %v3706, %v3705
        %v3719 = vpack.c.b16 %v3708, %v3707
        %v3720 = vpack.c.b16 %v3710, %v3709
        %v3721 = vpack.c.b16 %v3712, %v3711
        %v3722 = vpack.c.b16 %v3714, %v3713
        %3731 = vmatprep.subr.bf16.mxu0 0
        %3732 = vmatpush1.bf16.msra.mxu0 %v3715
        %3733 = vmatprep.subr.bf16.mxu0 0
        %3734 = vmatpush1.bf16.msra.mxu0 %v3716
        %3735 = vmatprep.subr.bf16.mxu0 0
        %3736 = vmatpush1.bf16.msra.mxu0 %v3717
        %3737 = vmatprep.subr.bf16.mxu0 0
        %3738 = vmatpush1.bf16.msra.mxu0 %v3718
        %3739 = vmatprep.subr.bf16.mxu0 0
        %3740 = vmatpush1.bf16.msra.mxu0 %v3719
        %3741 = vmatprep.subr.bf16.mxu0 0
        %3742 = vmatpush1.bf16.msra.mxu0 %v3720
        %3743 = vmatprep.subr.bf16.mxu0 0
        %3744 = vmatpush1.bf16.msra.mxu0 %v3721
        %3745 = vmatprep.subr.bf16.mxu0 0
        %3746 = vmatpush1.bf16.msra.mxu0 %v3722
        %3747 = vmatprep.subr.bf16.mxu0 0
        %3748 = vmatpush1.bf16.msra.mxu0 0
        %3749 = vmatprep.subr.bf16.mxu0 0
        %3750 = vmatpush1.bf16.msra.mxu0 0
        %3751 = vmatprep.subr.bf16.mxu0 0
        %3752 = vmatpush1.bf16.msra.mxu0 0
        %3753 = vmatprep.subr.bf16.mxu0 0
        %3754 = vmatpush1.bf16.msra.mxu0 0
        %3755 = vmatprep.subr.bf16.mxu0 0
        %3756 = vmatpush1.bf16.msra.mxu0 0
        %3757 = vmatprep.subr.bf16.mxu0 0
        %3758 = vmatpush1.bf16.msra.mxu0 0
        %3759 = vmatprep.subr.bf16.mxu0 0
        %3760 = vmatpush1.bf16.msra.mxu0 0
        %3761 = vmatprep.subr.bf16.mxu0 0
        %3762 = vmatpush1.bf16.msra.mxu0 0
        %3763 = vmatprep.mubr.bf16.mxu0 0
        %3764 = vmatmul.mubr.bf16.gmra.mrb[0].mxu0 %v3681
        %v3765 = vpop.f32.mrb[0].mxu0
        %v3766 = vadd.f32 0.0, %v3765
        %v3767 = vpop.f32.mrb[0].mxu0
        %v3768 = vpop.f32.mrb[0].mxu0
        %v3769 = vadd.f32 0.0, %v3768
        %v3770 = vpop.f32.mrb[0].mxu0
        %3771 = vdwg.mxu0
        %v3772 = vadd.f32 %v3646, %v3766
        %v3773 = vadd.f32 %v3647, %v3769
        %v3774 = vld [vmem:[#allocation3] sm:$0xc0]
        %v3775 = vld [vmem:[#allocation8 + $0x300] sm:$0xf]
        %v3776 = vld [vmem:[#allocation8 + $0x304] sm:$0xf]
        %v3777 = vld [vmem:[#allocation8 + $0x308] sm:$0xf]
        %v3778 = vld [vmem:[#allocation8 + $0x30c] sm:$0xf]
        %v3779 = vld [vmem:[#allocation8 + $0x310] sm:$0xf]
        %v3780 = vld [vmem:[#allocation8 + $0x314] sm:$0xf]
        %v3781 = vld [vmem:[#allocation8 + $0x318] sm:$0xf]
        %v3782 = vld [vmem:[#allocation8 + $0x31c] sm:$0xf]
        %v3783 = vld [vmem:[#allocation8 + $0x320] sm:$0xf]
        %v3784 = vld [vmem:[#allocation8 + $0x324] sm:$0xf]
        %v3785 = vld [vmem:[#allocation8 + $0x328] sm:$0xf]
        %v3786 = vld [vmem:[#allocation8 + $0x32c] sm:$0xf]
        %v3787 = vld [vmem:[#allocation8 + $0x330] sm:$0xf]
        %v3788 = vld [vmem:[#allocation8 + $0x334] sm:$0xf]
        %v3789 = vld [vmem:[#allocation8 + $0x338] sm:$0xf]
        %v3790 = vld [vmem:[#allocation8 + $0x33c] sm:$0xf]
        %v3793 = vrot.slane %v3774, 6
        %v3794 = vrot.slane %v3648, 6
        %v3795 = vsel %vm1669, %v3793, %v3794
        %v3813 = vunpack.c.l.b16 %v3775
        %v3814 = vunpack.c.l.b16 %v3776
        %v3815 = vunpack.c.l.b16 %v3777
        %v3816 = vunpack.c.l.b16 %v3778
        %v3817 = vunpack.c.l.b16 %v3779
        %v3818 = vunpack.c.l.b16 %v3780
        %v3819 = vunpack.c.l.b16 %v3781
        %v3820 = vunpack.c.l.b16 %v3782
        %v3821 = vunpack.c.l.b16 %v3783
        %v3822 = vunpack.c.l.b16 %v3784
        %v3823 = vunpack.c.l.b16 %v3785
        %v3824 = vunpack.c.l.b16 %v3786
        %v3825 = vunpack.c.l.b16 %v3787
        %v3826 = vunpack.c.l.b16 %v3788
        %v3827 = vunpack.c.l.b16 %v3789
        %v3828 = vunpack.c.l.b16 %v3790
        %v3829 = vpack.c.b16 %v3814, %v3813
        %v3830 = vpack.c.b16 %v3816, %v3815
        %v3831 = vpack.c.b16 %v3818, %v3817
        %v3832 = vpack.c.b16 %v3820, %v3819
        %v3833 = vpack.c.b16 %v3822, %v3821
        %v3834 = vpack.c.b16 %v3824, %v3823
        %v3835 = vpack.c.b16 %v3826, %v3825
        %v3836 = vpack.c.b16 %v3828, %v3827
        %3845 = vmatprep.subr.bf16.mxu0 0
        %3846 = vmatpush1.bf16.msra.mxu0 %v3829
        %3847 = vmatprep.subr.bf16.mxu0 0
        %3848 = vmatpush1.bf16.msra.mxu0 %v3830
        %3849 = vmatprep.subr.bf16.mxu0 0
        %3850 = vmatpush1.bf16.msra.mxu0 %v3831
        %3851 = vmatprep.subr.bf16.mxu0 0
        %3852 = vmatpush1.bf16.msra.mxu0 %v3832
        %3853 = vmatprep.subr.bf16.mxu0 0
        %3854 = vmatpush1.bf16.msra.mxu0 %v3833
        %3855 = vmatprep.subr.bf16.mxu0 0
        %3856 = vmatpush1.bf16.msra.mxu0 %v3834
        %3857 = vmatprep.subr.bf16.mxu0 0
        %3858 = vmatpush1.bf16.msra.mxu0 %v3835
        %3859 = vmatprep.subr.bf16.mxu0 0
        %3860 = vmatpush1.bf16.msra.mxu0 %v3836
        %3861 = vmatprep.subr.bf16.mxu0 0
        %3862 = vmatpush1.bf16.msra.mxu0 0
        %3863 = vmatprep.subr.bf16.mxu0 0
        %3864 = vmatpush1.bf16.msra.mxu0 0
        %3865 = vmatprep.subr.bf16.mxu0 0
        %3866 = vmatpush1.bf16.msra.mxu0 0
        %3867 = vmatprep.subr.bf16.mxu0 0
        %3868 = vmatpush1.bf16.msra.mxu0 0
        %3869 = vmatprep.subr.bf16.mxu0 0
        %3870 = vmatpush1.bf16.msra.mxu0 0
        %3871 = vmatprep.subr.bf16.mxu0 0
        %3872 = vmatpush1.bf16.msra.mxu0 0
        %3873 = vmatprep.subr.bf16.mxu0 0
        %3874 = vmatpush1.bf16.msra.mxu0 0
        %3875 = vmatprep.subr.bf16.mxu0 0
        %3876 = vmatpush1.bf16.msra.mxu0 0
        %3877 = vmatprep.mubr.bf16.mxu0 0
        %3878 = vmatmul.mubr.bf16.gmra.mrb[0].mxu0 %v3795
        %v3879 = vpop.f32.mrb[0].mxu0
        %v3880 = vadd.f32 0.0, %v3879
        %v3881 = vpop.f32.mrb[0].mxu0
        %v3882 = vpop.f32.mrb[0].mxu0
        %v3883 = vadd.f32 0.0, %v3882
        %v3884 = vpop.f32.mrb[0].mxu0
        %3885 = vdwg.mxu0
        %v3886 = vadd.f32 %v3772, %v3880
        %v3887 = vadd.f32 %v3773, %v3883
        %v3888 = vld [vmem:[#allocation3 + $0x8] sm:$0x7f]
        %v3889 = vld [vmem:[#allocation8 + $0x340] sm:$0xf]
        %v3890 = vld [vmem:[#allocation8 + $0x344] sm:$0xf]
        %v3891 = vld [vmem:[#allocation8 + $0x348] sm:$0xf]
        %v3892 = vld [vmem:[#allocation8 + $0x34c] sm:$0xf]
        %v3893 = vld [vmem:[#allocation8 + $0x350] sm:$0xf]
        %v3894 = vld [vmem:[#allocation8 + $0x354] sm:$0xf]
        %v3895 = vld [vmem:[#allocation8 + $0x358] sm:$0xf]
        %v3896 = vld [vmem:[#allocation8 + $0x35c] sm:$0xf]
        %v3897 = vld [vmem:[#allocation8 + $0x360] sm:$0xf]
        %v3898 = vld [vmem:[#allocation8 + $0x364] sm:$0xf]
        %v3899 = vld [vmem:[#allocation8 + $0x368] sm:$0xf]
        %v3900 = vld [vmem:[#allocation8 + $0x36c] sm:$0xf]
        %v3901 = vld [vmem:[#allocation8 + $0x370] sm:$0xf]
        %v3902 = vld [vmem:[#allocation8 + $0x374] sm:$0xf]
        %v3903 = vld [vmem:[#allocation8 + $0x378] sm:$0xf]
        %v3904 = vld [vmem:[#allocation8 + $0x37c] sm:$0xf]
        %v3906 = vshrl.u32 %v3774, 16
        %v3908 = vrot.slane %v3906, 6
        %v3909 = vshll.u32 %v3774, 16
        %v3911 = vrot.slane %v3909, 7
        %v3912 = vor.u32 %v3908, %v3911
        %v3914 = vshrl.u32 %v3888, 16
        %v3916 = vrot.slane %v3914, 6
        %v3917 = vshll.u32 %v3888, 16
        %v3919 = vrot.slane %v3917, 7
        %v3920 = vor.u32 %v3916, %v3919
        %v3921 = vsel %vm1795, %v3912, %v3920
        %v3939 = vunpack.c.l.b16 %v3889
        %v3940 = vunpack.c.l.b16 %v3890
        %v3941 = vunpack.c.l.b16 %v3891
        %v3942 = vunpack.c.l.b16 %v3892
        %v3943 = vunpack.c.l.b16 %v3893
        %v3944 = vunpack.c.l.b16 %v3894
        %v3945 = vunpack.c.l.b16 %v3895
        %v3946 = vunpack.c.l.b16 %v3896
        %v3947 = vunpack.c.l.b16 %v3897
        %v3948 = vunpack.c.l.b16 %v3898
        %v3949 = vunpack.c.l.b16 %v3899
        %v3950 = vunpack.c.l.b16 %v3900
        %v3951 = vunpack.c.l.b16 %v3901
        %v3952 = vunpack.c.l.b16 %v3902
        %v3953 = vunpack.c.l.b16 %v3903
        %v3954 = vunpack.c.l.b16 %v3904
        %v3955 = vpack.c.b16 %v3940, %v3939
        %v3956 = vpack.c.b16 %v3942, %v3941
        %v3957 = vpack.c.b16 %v3944, %v3943
        %v3958 = vpack.c.b16 %v3946, %v3945
        %v3959 = vpack.c.b16 %v3948, %v3947
        %v3960 = vpack.c.b16 %v3950, %v3949
        %v3961 = vpack.c.b16 %v3952, %v3951
        %v3962 = vpack.c.b16 %v3954, %v3953
        %3971 = vmatprep.subr.bf16.mxu0 0
        %3972 = vmatpush1.bf16.msra.mxu0 %v3955
        %3973 = vmatprep.subr.bf16.mxu0 0
        %3974 = vmatpush1.bf16.msra.mxu0 %v3956
        %3975 = vmatprep.subr.bf16.mxu0 0
        %3976 = vmatpush1.bf16.msra.mxu0 %v3957
        %3977 = vmatprep.subr.bf16.mxu0 0
        %3978 = vmatpush1.bf16.msra.mxu0 %v3958
        %3979 = vmatprep.subr.bf16.mxu0 0
        %3980 = vmatpush1.bf16.msra.mxu0 %v3959
        %3981 = vmatprep.subr.bf16.mxu0 0
        %3982 = vmatpush1.bf16.msra.mxu0 %v3960
        %3983 = vmatprep.subr.bf16.mxu0 0
        %3984 = vmatpush1.bf16.msra.mxu0 %v3961
        %3985 = vmatprep.subr.bf16.mxu0 0
        %3986 = vmatpush1.bf16.msra.mxu0 %v3962
        %3987 = vmatprep.subr.bf16.mxu0 0
        %3988 = vmatpush1.bf16.msra.mxu0 0
        %3989 = vmatprep.subr.bf16.mxu0 0
        %3990 = vmatpush1.bf16.msra.mxu0 0
        %3991 = vmatprep.subr.bf16.mxu0 0
        %3992 = vmatpush1.bf16.msra.mxu0 0
        %3993 = vmatprep.subr.bf16.mxu0 0
        %3994 = vmatpush1.bf16.msra.mxu0 0
        %3995 = vmatprep.subr.bf16.mxu0 0
        %3996 = vmatpush1.bf16.msra.mxu0 0
        %3997 = vmatprep.subr.bf16.mxu0 0
        %3998 = vmatpush1.bf16.msra.mxu0 0
        %3999 = vmatprep.subr.bf16.mxu0 0
        %4000 = vmatpush1.bf16.msra.mxu0 0
        %4001 = vmatprep.subr.bf16.mxu0 0
        %4002 = vmatpush1.bf16.msra.mxu0 0
        %4003 = vmatprep.mubr.bf16.mxu0 0
        %4004 = vmatmul.mubr.bf16.gmra.mrb[0].mxu0 %v3921
        %v4005 = vpop.f32.mrb[0].mxu0
        %v4006 = vadd.f32 0.0, %v4005
        %v4007 = vpop.f32.mrb[0].mxu0
        %v4008 = vpop.f32.mrb[0].mxu0
        %v4009 = vadd.f32 0.0, %v4008
        %v4010 = vpop.f32.mrb[0].mxu0
        %4011 = vdwg.mxu0
        %v4012 = vadd.f32 %v3886, %v4006
        %v4013 = vadd.f32 %v3887, %v4009
        %v4014 = vld [vmem:[#allocation3] sm:$0x80]
        %v4015 = vld [vmem:[#allocation8 + $0x380] sm:$0xf]
        %v4016 = vld [vmem:[#allocation8 + $0x384] sm:$0xf]
        %v4017 = vld [vmem:[#allocation8 + $0x388] sm:$0xf]
        %v4018 = vld [vmem:[#allocation8 + $0x38c] sm:$0xf]
        %v4019 = vld [vmem:[#allocation8 + $0x390] sm:$0xf]
        %v4020 = vld [vmem:[#allocation8 + $0x394] sm:$0xf]
        %v4021 = vld [vmem:[#allocation8 + $0x398] sm:$0xf]
        %v4022 = vld [vmem:[#allocation8 + $0x39c] sm:$0xf]
        %v4023 = vld [vmem:[#allocation8 + $0x3a0] sm:$0xf]
        %v4024 = vld [vmem:[#allocation8 + $0x3a4] sm:$0xf]
        %v4025 = vld [vmem:[#allocation8 + $0x3a8] sm:$0xf]
        %v4026 = vld [vmem:[#allocation8 + $0x3ac] sm:$0xf]
        %v4027 = vld [vmem:[#allocation8 + $0x3b0] sm:$0xf]
        %v4028 = vld [vmem:[#allocation8 + $0x3b4] sm:$0xf]
        %v4029 = vld [vmem:[#allocation8 + $0x3b8] sm:$0xf]
        %v4030 = vld [vmem:[#allocation8 + $0x3bc] sm:$0xf]
        %v4033 = vrot.slane %v4014, 7
        %v4034 = vrot.slane %v3888, 7
        %v4035 = vsel %vm1939, %v4033, %v4034
        %v4053 = vunpack.c.l.b16 %v4015
        %v4054 = vunpack.c.l.b16 %v4016
        %v4055 = vunpack.c.l.b16 %v4017
        %v4056 = vunpack.c.l.b16 %v4018
        %v4057 = vunpack.c.l.b16 %v4019
        %v4058 = vunpack.c.l.b16 %v4020
        %v4059 = vunpack.c.l.b16 %v4021
        %v4060 = vunpack.c.l.b16 %v4022
        %v4061 = vunpack.c.l.b16 %v4023
        %v4062 = vunpack.c.l.b16 %v4024
        %v4063 = vunpack.c.l.b16 %v4025
        %v4064 = vunpack.c.l.b16 %v4026
        %v4065 = vunpack.c.l.b16 %v4027
        %v4066 = vunpack.c.l.b16 %v4028
        %v4067 = vunpack.c.l.b16 %v4029
        %v4068 = vunpack.c.l.b16 %v4030
        %v4069 = vpack.c.b16 %v4054, %v4053
        %v4070 = vpack.c.b16 %v4056, %v4055
        %v4071 = vpack.c.b16 %v4058, %v4057
        %v4072 = vpack.c.b16 %v4060, %v4059
        %v4073 = vpack.c.b16 %v4062, %v4061
        %v4074 = vpack.c.b16 %v4064, %v4063
        %v4075 = vpack.c.b16 %v4066, %v4065
        %v4076 = vpack.c.b16 %v4068, %v4067
        %4085 = vmatprep.subr.bf16.mxu0 0
        %4086 = vmatpush1.bf16.msra.mxu0 %v4069
        %4087 = vmatprep.subr.bf16.mxu0 0
        %4088 = vmatpush1.bf16.msra.mxu0 %v4070
        %4089 = vmatprep.subr.bf16.mxu0 0
        %4090 = vmatpush1.bf16.msra.mxu0 %v4071
        %4091 = vmatprep.subr.bf16.mxu0 0
        %4092 = vmatpush1.bf16.msra.mxu0 %v4072
        %4093 = vmatprep.subr.bf16.mxu0 0
        %4094 = vmatpush1.bf16.msra.mxu0 %v4073
        %4095 = vmatprep.subr.bf16.mxu0 0
        %4096 = vmatpush1.bf16.msra.mxu0 %v4074
        %4097 = vmatprep.subr.bf16.mxu0 0
        %4098 = vmatpush1.bf16.msra.mxu0 %v4075
        %4099 = vmatprep.subr.bf16.mxu0 0
        %4100 = vmatpush1.bf16.msra.mxu0 %v4076
        %4101 = vmatprep.subr.bf16.mxu0 0
        %4102 = vmatpush1.bf16.msra.mxu0 0
        %4103 = vmatprep.subr.bf16.mxu0 0
        %4104 = vmatpush1.bf16.msra.mxu0 0
        %4105 = vmatprep.subr.bf16.mxu0 0
        %4106 = vmatpush1.bf16.msra.mxu0 0
        %4107 = vmatprep.subr.bf16.mxu0 0
        %4108 = vmatpush1.bf16.msra.mxu0 0
        %4109 = vmatprep.subr.bf16.mxu0 0
        %4110 = vmatpush1.bf16.msra.mxu0 0
        %4111 = vmatprep.subr.bf16.mxu0 0
        %4112 = vmatpush1.bf16.msra.mxu0 0
        %4113 = vmatprep.subr.bf16.mxu0 0
        %4114 = vmatpush1.bf16.msra.mxu0 0
        %4115 = vmatprep.subr.bf16.mxu0 0
        %4116 = vmatpush1.bf16.msra.mxu0 0
        %4117 = vmatprep.mubr.bf16.mxu0 0
        %4118 = vmatmul.mubr.bf16.gmra.mrb[0].mxu0 %v4035
        %v4119 = vpop.f32.mrb[0].mxu0
        %v4120 = vadd.f32 0.0, %v4119
        %v4121 = vpop.f32.mrb[0].mxu0
        %v4122 = vpop.f32.mrb[0].mxu0
        %v4123 = vadd.f32 0.0, %v4122
        %v4124 = vpop.f32.mrb[0].mxu0
        %4125 = vdwg.mxu0
        %v4126 = vadd.f32 %v4012, %v4120
        %v4127 = vadd.f32 %v4013, %v4123
        %v4128 = vld [vmem:[%s299 + $0x8] sm:$0xff]
        %v4129 = vunpack.c.l.bf16 %v4128
        %v4130 = vunpack.c.h.bf16 %v4128
        %v4131 = vld [vmem:[%s4] sm:$0x1]
        %v4133 = vlaneseq
        %v4134 = vshrl.u32 %v4133, 7
        %v4135 = vsub.s32 0, %v4134
        %v4136 = vrot.slane %v4131, %v4135
        %v4138 = vadd.f32 %v4126, %v4136
        %v4139 = vadd.f32 %v4127, %v4136
        %v4140 = vadd.f32 %v4138, %v4129
        %v4141 = vadd.f32 %v4139, %v4130
        %v4142 = vmax.f32 %v4140, 0.0
        %v4143 = vmax.f32 %v4141, 0.0
        %v4144 = vpack.c.bf16 %v4143, %v4142
        %v4146 = vunpack.c.l.b16 %v4144
        %v4147 = vunpack.c.h.b16 %v4144
        %v4148 = vpack.c.b16 %v4146, %v4146
        %v4149 = vpack.c.b16 %v4147, %v4147
        %4152 = vst [vmem:[%s220] sm:$0xf] %v4148
        %4153 = vst [vmem:[%s220 + $0x4] sm:$0xf] %v4149
        %s4154 = sand.u32 %s127, 1
        %s4155 = scalar_lea.sflag [#allocation7], %s4154
        %s4156 = sand.u32 %s127, 1
        %s4157 = smul.addr %s4156, 8
        %s4158 = scalar_lea.vmem [#allocation10], %s4157
        // Predicated region
        $region61: #{tpu_custom_call.1} parent=35 // pred_check
          %p4159 = pneg %p137
        $region62: #{tpu_custom_call.1} parent=35 // pred_check_branch
          %4161 = sbr.rel (%p4159) target = $region64
        $region63: #{tpu_custom_call.1} parent=35 // pred_region
          %s4162 = smul.u32 2, %s26
          %s4164 = ssub.s32 128, 128
          %4165 = vsyncadd %s4155, %s4164
          %s4166 = smul.addr %s25, 2
          %s4167 = sadd.s32 %s4162, %s4166
          %s4168 = smul.addr %s4167, 64
          %s4169 = scalar_lea.hbm %s5, %s4168
          %s4170 = sshll.u32 %s4158, 4
          %s4171 = int_to_ptr.vmem [resolvable:$true] %s4170
          %4176 = dma.vmem_to_hbm [thread:$0]  %s4171, 128, %s4169, %s4155, 64, 64, 4
        $region64: #{tpu_custom_call.1} parent=35 // pred_fallthru
          _
      $region36: #{tpu_custom_call.1} parent=5 // pred_fallthru
        _
      %p4177 = scmp.le.s32.totalorder 2, %s16
      // Predicated region
      $region65: #{tpu_custom_call.1} parent=5 // pred_check
        %p4178 = pneg %p4177
      $region66: #{tpu_custom_call.1} parent=5 // pred_check_branch
        %4180 = sbr.rel (%p4178) target = $region68
      $region67: #{tpu_custom_call.1} parent=5 // pred_region
        %s4181 = ssub.s32 %s16, 2
        // Predicated region
        $region69: #{tpu_custom_call.1} parent=67 // pred_check
          %p4182 = pneg %p143
        $region70: #{tpu_custom_call.1} parent=67 // pred_check_branch
          %4184 = sbr.rel (%p4182) target = $region72
        $region71: #{tpu_custom_call.1} parent=67 // pred_region
          %s4185 = sand.u32 %s128, 1
          %s4186 = scalar_lea.sflag [#allocation7], %s4185
          %s4187 = sand.u32 %s128, 1
          %s4188 = smul.addr %s4187, 8
          %s4189 = scalar_lea.vmem [#allocation10], %s4188
          %4190 = dma.done %s4186, 128
        $region72: #{tpu_custom_call.1} parent=67 // pred_fallthru
          _
      $region68: #{tpu_custom_call.1} parent=5 // pred_fallthru
        _
    $region6: #{tpu_custom_call.1} parent=1 // loop_footer
      %s20 = sadd.s32 1, %s16
    $region7: #{tpu_custom_call.1} parent=1 // loop_footer_branch
      %15 = sbr.rel target = $region3
    $region8: #{tpu_custom_call.1} parent=1 // loop_exit
      _
    %4191 = vsyncpa [#allocation6], 1
    %s4192 = scalar_lea.sflag [#allocation6], 1
    %4193 = vsyncpa %s4192, 1
    %4194 = vsyncpa [#allocation9], 1
    %4195 = vsyncpa [#allocation7], 1
    %s4196 = scalar_lea.sflag [#allocation7], 1
    %4197 = vsyncpa %s4196, 1
  %4198 = vsyncmov [#allocation4]
  %s4199 = vpop.sfrf %4198
  %p4200 = scmp.eq.s32.totalorder %s4199, 0
  %p4201 = pneg %p4200
  %4203 = shalt.err (%p4201)
  %s4204 = scalar_lea.sflag [#allocation4], 1
  %4205 = vsyncmov %s4204
  %s4206 = vpop.sfrf %4205
  %p4207 = scmp.eq.s32.totalorder %s4206, 0
  %p4208 = pneg %p4207
  %4210 = shalt.err (%p4208)

</llo_original>
